<compile_context>
chip_gen: v6e
topology: v6e:2x2x1
jax: 0.10.0
libtpu: 0.0.40
codegen_flags: <defaults>
</compile_context>

<pallas_src>
import functools

import jax
import jax.numpy as jnp
from jax.experimental import pallas as pl
from jax.experimental.pallas import tpu as pltpu


# ----------------------------- Pallas kernels ------------------------------

def _conv_bn_relu_kernel(offsets, xa_ref, xb_ref, w_ref, shift_ref, mask_ref,
                         o_ref):
    """Fused im2col conv + folded-BN shift + ReLU, transposed (lane-dense) layout.

    xa_ref/xb_ref: (C, TM) bf16   blocks i and i+1 of the flattened zero-padded
                                  input volume -> (C, 2*TM) halo window in VMEM.
    w_ref:         (k^3, Cout, C) bf16, BN scale folded in, tap-major.
    shift_ref:     (Cout, 1) f32  folded conv-bias + BN shift.
    mask_ref:      (1, TM) f32    1.0 at real (centered) voxel positions, else 0.
    o_ref:         (Cout, TM) bf16.
    """
    tm = o_ref.shape[-1]
    window = jnp.concatenate([xa_ref[...], xb_ref[...]], axis=-1)   # (C, 2*TM)
    acc = jnp.zeros(o_ref.shape, jnp.float32)
    for t, off in enumerate(offsets):              # static, fully unrolled taps
        acc += jnp.dot(w_ref[t], window[:, off:off + tm],
                       preferred_element_type=jnp.float32)
    y = jnp.maximum(acc + shift_ref[...], 0.0) * mask_ref[...]
    o_ref[...] = y.astype(o_ref.dtype)


def _conv_bn_relu_residual_kernel(offsets, res_off, ya_ref, yb_ref, xa_ref,
                                  xb_ref, w_ref, shift_ref, wres_ref, o_ref):
    """Second conv + folded-BN + ReLU fused with the 1x1x1 residual conv + add."""
    tm = o_ref.shape[-1]
    wy = jnp.concatenate([ya_ref[...], yb_ref[...]], axis=-1)       # (Cout, 2*TM)
    acc = jnp.zeros(o_ref.shape, jnp.float32)
    for t, off in enumerate(offsets):
        acc += jnp.dot(w_ref[t], wy[:, off:off + tm],
                       preferred_element_type=jnp.float32)
    y = jnp.maximum(acc + shift_ref[...], 0.0)
    wx = jnp.concatenate([xa_ref[...], xb_ref[...]], axis=-1)       # (Cin, 2*TM)
    res = jnp.dot(wres_ref[...], wx[:, res_off:res_off + tm],
                  preferred_element_type=jnp.float32)
    o_ref[...] = y + res                                            # f32 output


# ------------------------------ JAX glue ------------------------------------

def _round_up(v, m):
    return ((v + m - 1) // m) * m


def _fold_conv_bn(w, bias, gamma, beta, mean, var, eps=1e-5):
    """Fold eval-mode BatchNorm into the conv weight (tap-major) + shift vector."""
    cout, cin = w.shape[0], w.shape[1]
    s = gamma / jnp.sqrt(var + eps)                                  # (Cout,)
    # (Cout, Cin, kd, kh, kw) -> (kd*kh*kw, Cout, Cin), BN scale folded in.
    w_taps = jnp.transpose(w, (2, 3, 4, 0, 1)).reshape(-1, cout, cin)
    w_taps = (w_taps * s[None, :, None]).astype(jnp.bfloat16)
    shift = (beta + (bias - mean) * s).astype(jnp.float32)[:, None]  # (Cout, 1)
    return w_taps, shift


def conv3d_block_forward(x_ncdhw, params, k=3, pad=1, tm=512):
    """Equivalent of Conv3d.forward (eval-mode BatchNorm, stride=1)."""
    N, Cin, D, H, W = x_ncdhw.shape
    Cout = params["w1"].shape[0]
    Dp, Hp, Wp = D + 2 * pad, H + 2 * pad, W + 2 * pad
    S = N * Dp * Hp * Wp                    # flattened zero-padded volume
    plane, row = Hp * Wp, Wp

    # Tap offsets in the flattened (dp, hp, wp) padded index space.
    offsets = tuple(kd * plane + kh * row + kw
                    for kd in range(k) for kh in range(k) for kw in range(k))
    delta = pad * (plane + row + 1)         # shift to "centered" storage
    halo = offsets[-1]
    # Auto-size the tile (lane width) so the two-block halo window always covers
    # every tap / the residual offset, and stays a multiple of 128 lanes.
    tm = max(_round_up(tm, 128), _round_up(max(halo, 2 * delta), 128))

    G2 = pl.cdiv(S, tm)                     # conv2 grid (covers every voxel)
    L2 = G2 * tm
    G1 = G2 + 1                             # conv1 writes one extra block so
    L1 = L2 + tm                            # conv2 can always read block i+1
    Lx = L1 + tm                            # conv1 can always read block i+1

    # Channels-first, spatially zero-padded, flattened input:
    #   x_flat[ci, n*Dp*Hp*Wp + dp*Hp*Wp + hp*Wp + wp]
    xpad = jnp.pad(x_ncdhw.astype(jnp.float32),
                   ((0, 0), (0, 0), (pad, pad), (pad, pad), (pad, pad)))
    x_flat = jnp.transpose(xpad, (1, 0, 2, 3, 4)).reshape(Cin, S)
    # Front-shift by `delta` so conv1's outputs land at *centered* padded
    # positions, i.e. y1 comes out already laid out as conv2's padded input.
    xp1 = jnp.pad(x_flat, ((0, 0), (delta, Lx - delta - S))).astype(jnp.bfloat16)

    # Validity mask (centered layout): 1 at real voxels, 0 at the padding ring,
    # batch seams and tile tail -> conv1's output is exactly zero-padded y1.
    msk = jnp.zeros((N, Dp, Hp, Wp), jnp.float32)
    msk = msk.at[:, pad:pad + D, pad:pad + H, pad:pad + W].set(1.0)
    mask1 = jnp.pad(msk.reshape(1, S), ((0, 0), (0, L1 - S)))

    w1_taps, shift1 = _fold_conv_bn(params["w1"], params["b1"],
                                    params["bn1_gamma"], params["bn1_beta"],
                                    params["bn1_mean"], params["bn1_var"])
    w2_taps, shift2 = _fold_conv_bn(params["w2"], params["b2"],
                                    params["bn2_gamma"], params["bn2_beta"],
                                    params["bn2_mean"], params["bn2_var"])
    wres = params["w_res"].reshape(Cout, Cin).astype(jnp.bfloat16)

    k3 = k * k * k
    parallel = pltpu.CompilerParams(dimension_semantics=("parallel",))

    # ---- conv1 + bn1 + relu (im2col fused in-kernel, lane-dense output) ----
    y1 = pl.pallas_call(
        functools.partial(_conv_bn_relu_kernel, offsets),
        out_shape=jax.ShapeDtypeStruct((Cout, L1), jnp.bfloat16),
        grid=(G1,),
        in_specs=[
            pl.BlockSpec((Cin, tm), lambda i: (0, i)),        # block i
            pl.BlockSpec((Cin, tm), lambda i: (0, i + 1)),    # halo block i+1
            pl.BlockSpec((k3, Cout, Cin), lambda i: (0, 0, 0)),
            pl.BlockSpec((Cout, 1), lambda i: (0, 0)),
            pl.BlockSpec((1, tm), lambda i: (0, i)),
        ],
        out_specs=pl.BlockSpec((Cout, tm), lambda i: (0, i)),
        compiler_params=parallel,
    )(xp1, xp1, w1_taps, shift1, mask1)

    # ---- conv2 + bn2 + relu + fused 1x1x1 residual conv + add ----
    out_flat = pl.pallas_call(
        functools.partial(_conv_bn_relu_residual_kernel, offsets, 2 * delta),
        out_shape=jax.ShapeDtypeStruct((Cout, L2), jnp.float32),
        grid=(G2,),
        in_specs=[
            pl.BlockSpec((Cout, tm), lambda i: (0, i)),       # y1 block i
            pl.BlockSpec((Cout, tm), lambda i: (0, i + 1)),   # y1 halo block
            pl.BlockSpec((Cin, tm), lambda i: (0, i)),        # x for residual
            pl.BlockSpec((Cin, tm), lambda i: (0, i + 1)),
            pl.BlockSpec((k3, Cout, Cout), lambda i: (0, 0, 0)),
            pl.BlockSpec((Cout, 1), lambda i: (0, 0)),
            pl.BlockSpec((Cout, Cin), lambda i: (0, 0)),
        ],
        out_specs=pl.BlockSpec((Cout, tm), lambda i: (0, i)),
        compiler_params=parallel,
    )(y1, y1, xp1, xp1, w2_taps, shift2, wres)

    # Un-flatten: outputs are stored at flat(n, d, h, w) with *padded* strides
    # (back-shifted by `delta`), so cropping [:D,:H,:W] recovers real voxels.
    out = out_flat[:, :S].reshape(Cout, N, Dp, Hp, Wp)[:, :, :D, :H, :W]
    return jnp.transpose(out, (1, 0, 2, 3, 4))                # -> NCDHW


# ------------------------------ reference (for sanity) ----------------------

def _reference(x_ncdhw, params, k=3, pad=1, eps=1e-5):
    def conv(x, w, b):
        y = jax.lax.conv_general_dilated(
            x, w, window_strides=(1, 1, 1), padding=[(pad, pad)] * 3,
            dimension_numbers=("NCDHW", "OIDHW", "NCDHW"))
        if b is not None:
            y = y + b[None, :, None, None, None]
        return y

    def bn_relu(y, g, b, m, v):
        g = g[None, :, None, None, None]
        b = b[None, :, None, None, None]
        m = m[None, :, None, None, None]
        v = v[None, :, None, None, None]
        return jnp.maximum((y - m) / jnp.sqrt(v + eps) * g + b, 0.0)

    y1 = bn_relu(conv(x_ncdhw, params["w1"], params["b1"]),
                 params["bn1_gamma"], params["bn1_beta"],
                 params["bn1_mean"], params["bn1_var"])
    y2 = bn_relu(conv(y1, params["w2"], params["b2"]),
                 params["bn2_gamma"], params["bn2_beta"],
                 params["bn2_mean"], params["bn2_var"])
    res = jax.lax.conv_general_dilated(
        x_ncdhw, params["w_res"], window_strides=(1, 1, 1),
        padding=[(0, 0)] * 3, dimension_numbers=("NCDHW", "OIDHW", "NCDHW"))
    return y2 + res


# ------------------------------ main -----------------------------------------

if __name__ == "__main__":
    key = jax.random.PRNGKey(0)
    N, Cin, Cout = 2, 4, 8
    D = H = W = 8
    k, pad = 3, 1      # kernel_size=3, stride=1, padding=1

    ks = jax.random.split(key, 14)
    params = {
        "w1": jax.random.normal(ks[0], (Cout, Cin, k, k, k), jnp.float32) * 0.1,
        "b1": jax.random.normal(ks[1], (Cout,), jnp.float32) * 0.1,
        "w2": jax.random.normal(ks[2], (Cout, Cout, k, k, k), jnp.float32) * 0.1,
        "b2": jax.random.normal(ks[3], (Cout,), jnp.float32) * 0.1,
        "w_res": jax.random.normal(ks[4], (Cout, Cin, 1, 1, 1), jnp.float32) * 0.1,
        # eval-mode BatchNorm3d (running stats); non-trivial values to exercise
        # the BN-into-weight folding.
        "bn1_gamma": 1.0 + 0.1 * jax.random.normal(ks[6], (Cout,), jnp.float32),
        "bn1_beta": 0.1 * jax.random.normal(ks[7], (Cout,), jnp.float32),
        "bn1_mean": 0.1 * jax.random.normal(ks[8], (Cout,), jnp.float32),
        "bn1_var": 1.0 + 0.1 * jnp.abs(jax.random.normal(ks[9], (Cout,), jnp.float32)),
        "bn2_gamma": 1.0 + 0.1 * jax.random.normal(ks[10], (Cout,), jnp.float32),
        "bn2_beta": 0.1 * jax.random.normal(ks[11], (Cout,), jnp.float32),
        "bn2_mean": 0.1 * jax.random.normal(ks[12], (Cout,), jnp.float32),
        "bn2_var": 1.0 + 0.1 * jnp.abs(jax.random.normal(ks[13], (Cout,), jnp.float32)),
    }

    x = jax.random.normal(ks[5], (N, Cin, D, H, W), jnp.float32)

    out = jax.block_until_ready(conv3d_block_forward(x, params, k=k, pad=pad))
    ref = jax.block_until_ready(_reference(x, params, k=k, pad=pad))

    assert out.shape == (N, Cout, D, H, W)
    # bf16 activations/weights on the MXU (f32 accumulation) -> looser tolerance
    # than a pure-f32 implementation.
    assert jnp.max(jnp.abs(out - ref)) < 5e-2, "mismatch vs reference"

    print("KERNEL_OK")
</pallas_src>

<mosaic_0001>
module attributes {stable_mosaic.version = 11 : i64} {
  func.func @_conv_bn_relu_kernel(%arg0: i32, %arg1: memref<4x512xbf16, #tpu.memory_space<vmem>>, %arg2: memref<4x512xbf16, #tpu.memory_space<vmem>>, %arg3: memref<27x8x4xbf16, #tpu.memory_space<vmem>>, %arg4: memref<8x1xf32, #tpu.memory_space<vmem>>, %arg5: memref<1x512xf32, #tpu.memory_space<vmem>>, %arg6: memref<8x512xbf16, #tpu.memory_space<vmem>>) attributes {dimension_semantics = [#tpu.dimension_semantics<parallel>], iteration_bounds = array<i64: 5>, scalar_prefetch = 0 : i64, scratch_operands = 0 : i64, tpu.core_type = #tpu.core_type<tc>, window_params = [{transform_indices = @transform_0, window_bounds = array<i64: 4, 512>}, {transform_indices = @transform_1, window_bounds = array<i64: 4, 512>}, {pipeline_mode = #tpu.pipeline_mode<synchronous>, transform_indices = @transform_2, window_bounds = array<i64: 27, 8, 4>}, {pipeline_mode = #tpu.pipeline_mode<synchronous>, transform_indices = @transform_3, window_bounds = array<i64: 8, 1>}, {transform_indices = @transform_4, window_bounds = array<i64: 1, 512>}, {transform_indices = @transform_5, window_bounds = array<i64: 8, 512>}]} {
    %c0 = arith.constant 0 : index
    %c0_0 = arith.constant 0 : index
    %0 = vector.load %arg1[%c0, %c0_0] : memref<4x512xbf16, #tpu.memory_space<vmem>>, vector<4x512xbf16>
    %c0_1 = arith.constant 0 : index
    %c0_2 = arith.constant 0 : index
    %1 = vector.load %arg2[%c0_1, %c0_2] : memref<4x512xbf16, #tpu.memory_space<vmem>>, vector<4x512xbf16>
    %2 = tpu.concatenate %0, %1 in 1 : vector<4x512xbf16>, vector<4x512xbf16> -> vector<4x1024xbf16>
    %cst = arith.constant 0.000000e+00 : f32
    %3 = vector.broadcast %cst : f32 to vector<8x512xf32>
    %c0_3 = arith.constant 0 : index
    %c0_4 = arith.constant 0 : index
    %c0_5 = arith.constant 0 : index
    %4 = vector.load %arg3[%c0_3, %c0_4, %c0_5] : memref<27x8x4xbf16, #tpu.memory_space<vmem>>, vector<1x8x4xbf16>
    %5 = vector.shape_cast %4 : vector<1x8x4xbf16> to vector<8x4xbf16>
    %6 = vector.extract_strided_slice %2 {offsets = [0, 0], sizes = [4, 512], strides = [1, 1]} : vector<4x1024xbf16> to vector<4x512xbf16>
    %cst_6 = arith.constant dense<0.000000e+00> : vector<8x512xf32>
    %7 = tpu.matmul %5, %6, %cst_6 {dimension_numbers = #tpu.dot_dimension_numbers<[1], [0], [0], [1], [0, 0, 1, 1], [], []>} : vector<8x4xbf16>, vector<4x512xbf16>, vector<8x512xf32> -> vector<8x512xf32>
    %8 = arith.addf %3, %7 : vector<8x512xf32>
    %c1 = arith.constant 1 : index
    %c0_7 = arith.constant 0 : index
    %c0_8 = arith.constant 0 : index
    %9 = vector.load %arg3[%c1, %c0_7, %c0_8] : memref<27x8x4xbf16, #tpu.memory_space<vmem>>, vector<1x8x4xbf16>
    %10 = vector.shape_cast %9 : vector<1x8x4xbf16> to vector<8x4xbf16>
    %11 = vector.extract_strided_slice %2 {offsets = [0, 1], sizes = [4, 512], strides = [1, 1]} : vector<4x1024xbf16> to vector<4x512xbf16>
    %cst_9 = arith.constant dense<0.000000e+00> : vector<8x512xf32>
    %12 = tpu.matmul %10, %11, %cst_9 {dimension_numbers = #tpu.dot_dimension_numbers<[1], [0], [0], [1], [0, 0, 1, 1], [], []>} : vector<8x4xbf16>, vector<4x512xbf16>, vector<8x512xf32> -> vector<8x512xf32>
    %13 = arith.addf %8, %12 : vector<8x512xf32>
    %c2 = arith.constant 2 : index
    %c0_10 = arith.constant 0 : index
    %c0_11 = arith.constant 0 : index
    %14 = vector.load %arg3[%c2, %c0_10, %c0_11] : memref<27x8x4xbf16, #tpu.memory_space<vmem>>, vector<1x8x4xbf16>
    %15 = vector.shape_cast %14 : vector<1x8x4xbf16> to vector<8x4xbf16>
    %16 = vector.extract_strided_slice %2 {offsets = [0, 2], sizes = [4, 512], strides = [1, 1]} : vector<4x1024xbf16> to vector<4x512xbf16>
    %cst_12 = arith.constant dense<0.000000e+00> : vector<8x512xf32>
    %17 = tpu.matmul %15, %16, %cst_12 {dimension_numbers = #tpu.dot_dimension_numbers<[1], [0], [0], [1], [0, 0, 1, 1], [], []>} : vector<8x4xbf16>, vector<4x512xbf16>, vector<8x512xf32> -> vector<8x512xf32>
    %18 = arith.addf %13, %17 : vector<8x512xf32>
    %c3 = arith.constant 3 : index
    %c0_13 = arith.constant 0 : index
    %c0_14 = arith.constant 0 : index
    %19 = vector.load %arg3[%c3, %c0_13, %c0_14] : memref<27x8x4xbf16, #tpu.memory_space<vmem>>, vector<1x8x4xbf16>
    %20 = vector.shape_cast %19 : vector<1x8x4xbf16> to vector<8x4xbf16>
    %21 = vector.extract_strided_slice %2 {offsets = [0, 10], sizes = [4, 512], strides = [1, 1]} : vector<4x1024xbf16> to vector<4x512xbf16>
    %cst_15 = arith.constant dense<0.000000e+00> : vector<8x512xf32>
    %22 = tpu.matmul %20, %21, %cst_15 {dimension_numbers = #tpu.dot_dimension_numbers<[1], [0], [0], [1], [0, 0, 1, 1], [], []>} : vector<8x4xbf16>, vector<4x512xbf16>, vector<8x512xf32> -> vector<8x512xf32>
    %23 = arith.addf %18, %22 : vector<8x512xf32>
    %c4 = arith.constant 4 : index
    %c0_16 = arith.constant 0 : index
    %c0_17 = arith.constant 0 : index
    %24 = vector.load %arg3[%c4, %c0_16, %c0_17] : memref<27x8x4xbf16, #tpu.memory_space<vmem>>, vector<1x8x4xbf16>
    %25 = vector.shape_cast %24 : vector<1x8x4xbf16> to vector<8x4xbf16>
    %26 = vector.extract_strided_slice %2 {offsets = [0, 11], sizes = [4, 512], strides = [1, 1]} : vector<4x1024xbf16> to vector<4x512xbf16>
    %cst_18 = arith.constant dense<0.000000e+00> : vector<8x512xf32>
    %27 = tpu.matmul %25, %26, %cst_18 {dimension_numbers = #tpu.dot_dimension_numbers<[1], [0], [0], [1], [0, 0, 1, 1], [], []>} : vector<8x4xbf16>, vector<4x512xbf16>, vector<8x512xf32> -> vector<8x512xf32>
    %28 = arith.addf %23, %27 : vector<8x512xf32>
    %c5 = arith.constant 5 : index
    %c0_19 = arith.constant 0 : index
    %c0_20 = arith.constant 0 : index
    %29 = vector.load %arg3[%c5, %c0_19, %c0_20] : memref<27x8x4xbf16, #tpu.memory_space<vmem>>, vector<1x8x4xbf16>
    %30 = vector.shape_cast %29 : vector<1x8x4xbf16> to vector<8x4xbf16>
    %31 = vector.extract_strided_slice %2 {offsets = [0, 12], sizes = [4, 512], strides = [1, 1]} : vector<4x1024xbf16> to vector<4x512xbf16>
    %cst_21 = arith.constant dense<0.000000e+00> : vector<8x512xf32>
    %32 = tpu.matmul %30, %31, %cst_21 {dimension_numbers = #tpu.dot_dimension_numbers<[1], [0], [0], [1], [0, 0, 1, 1], [], []>} : vector<8x4xbf16>, vector<4x512xbf16>, vector<8x512xf32> -> vector<8x512xf32>
    %33 = arith.addf %28, %32 : vector<8x512xf32>
    %c6 = arith.constant 6 : index
    %c0_22 = arith.constant 0 : index
    %c0_23 = arith.constant 0 : index
    %34 = vector.load %arg3[%c6, %c0_22, %c0_23] : memref<27x8x4xbf16, #tpu.memory_space<vmem>>, vector<1x8x4xbf16>
    %35 = vector.shape_cast %34 : vector<1x8x4xbf16> to vector<8x4xbf16>
    %36 = vector.extract_strided_slice %2 {offsets = [0, 20], sizes = [4, 512], strides = [1, 1]} : vector<4x1024xbf16> to vector<4x512xbf16>
    %cst_24 = arith.constant dense<0.000000e+00> : vector<8x512xf32>
    %37 = tpu.matmul %35, %36, %cst_24 {dimension_numbers = #tpu.dot_dimension_numbers<[1], [0], [0], [1], [0, 0, 1, 1], [], []>} : vector<8x4xbf16>, vector<4x512xbf16>, vector<8x512xf32> -> vector<8x512xf32>
    %38 = arith.addf %33, %37 : vector<8x512xf32>
    %c7 = arith.constant 7 : index
    %c0_25 = arith.constant 0 : index
    %c0_26 = arith.constant 0 : index
    %39 = vector.load %arg3[%c7, %c0_25, %c0_26] : memref<27x8x4xbf16, #tpu.memory_space<vmem>>, vector<1x8x4xbf16>
    %40 = vector.shape_cast %39 : vector<1x8x4xbf16> to vector<8x4xbf16>
    %41 = vector.extract_strided_slice %2 {offsets = [0, 21], sizes = [4, 512], strides = [1, 1]} : vector<4x1024xbf16> to vector<4x512xbf16>
    %cst_27 = arith.constant dense<0.000000e+00> : vector<8x512xf32>
    %42 = tpu.matmul %40, %41, %cst_27 {dimension_numbers = #tpu.dot_dimension_numbers<[1], [0], [0], [1], [0, 0, 1, 1], [], []>} : vector<8x4xbf16>, vector<4x512xbf16>, vector<8x512xf32> -> vector<8x512xf32>
    %43 = arith.addf %38, %42 : vector<8x512xf32>
    %c8 = arith.constant 8 : index
    %c0_28 = arith.constant 0 : index
    %c0_29 = arith.constant 0 : index
    %44 = vector.load %arg3[%c8, %c0_28, %c0_29] : memref<27x8x4xbf16, #tpu.memory_space<vmem>>, vector<1x8x4xbf16>
    %45 = vector.shape_cast %44 : vector<1x8x4xbf16> to vector<8x4xbf16>
    %46 = vector.extract_strided_slice %2 {offsets = [0, 22], sizes = [4, 512], strides = [1, 1]} : vector<4x1024xbf16> to vector<4x512xbf16>
    %cst_30 = arith.constant dense<0.000000e+00> : vector<8x512xf32>
    %47 = tpu.matmul %45, %46, %cst_30 {dimension_numbers = #tpu.dot_dimension_numbers<[1], [0], [0], [1], [0, 0, 1, 1], [], []>} : vector<8x4xbf16>, vector<4x512xbf16>, vector<8x512xf32> -> vector<8x512xf32>
    %48 = arith.addf %43, %47 : vector<8x512xf32>
    %c9 = arith.constant 9 : index
    %c0_31 = arith.constant 0 : index
    %c0_32 = arith.constant 0 : index
    %49 = vector.load %arg3[%c9, %c0_31, %c0_32] : memref<27x8x4xbf16, #tpu.memory_space<vmem>>, vector<1x8x4xbf16>
    %50 = vector.shape_cast %49 : vector<1x8x4xbf16> to vector<8x4xbf16>
    %51 = vector.extract_strided_slice %2 {offsets = [0, 100], sizes = [4, 512], strides = [1, 1]} : vector<4x1024xbf16> to vector<4x512xbf16>
    %cst_33 = arith.constant dense<0.000000e+00> : vector<8x512xf32>
    %52 = tpu.matmul %50, %51, %cst_33 {dimension_numbers = #tpu.dot_dimension_numbers<[1], [0], [0], [1], [0, 0, 1, 1], [], []>} : vector<8x4xbf16>, vector<4x512xbf16>, vector<8x512xf32> -> vector<8x512xf32>
    %53 = arith.addf %48, %52 : vector<8x512xf32>
    %c10 = arith.constant 10 : index
    %c0_34 = arith.constant 0 : index
    %c0_35 = arith.constant 0 : index
    %54 = vector.load %arg3[%c10, %c0_34, %c0_35] : memref<27x8x4xbf16, #tpu.memory_space<vmem>>, vector<1x8x4xbf16>
    %55 = vector.shape_cast %54 : vector<1x8x4xbf16> to vector<8x4xbf16>
    %56 = vector.extract_strided_slice %2 {offsets = [0, 101], sizes = [4, 512], strides = [1, 1]} : vector<4x1024xbf16> to vector<4x512xbf16>
    %cst_36 = arith.constant dense<0.000000e+00> : vector<8x512xf32>
    %57 = tpu.matmul %55, %56, %cst_36 {dimension_numbers = #tpu.dot_dimension_numbers<[1], [0], [0], [1], [0, 0, 1, 1], [], []>} : vector<8x4xbf16>, vector<4x512xbf16>, vector<8x512xf32> -> vector<8x512xf32>
    %58 = arith.addf %53, %57 : vector<8x512xf32>
    %c11 = arith.constant 11 : index
    %c0_37 = arith.constant 0 : index
    %c0_38 = arith.constant 0 : index
    %59 = vector.load %arg3[%c11, %c0_37, %c0_38] : memref<27x8x4xbf16, #tpu.memory_space<vmem>>, vector<1x8x4xbf16>
    %60 = vector.shape_cast %59 : vector<1x8x4xbf16> to vector<8x4xbf16>
    %61 = vector.extract_strided_slice %2 {offsets = [0, 102], sizes = [4, 512], strides = [1, 1]} : vector<4x1024xbf16> to vector<4x512xbf16>
    %cst_39 = arith.constant dense<0.000000e+00> : vector<8x512xf32>
    %62 = tpu.matmul %60, %61, %cst_39 {dimension_numbers = #tpu.dot_dimension_numbers<[1], [0], [0], [1], [0, 0, 1, 1], [], []>} : vector<8x4xbf16>, vector<4x512xbf16>, vector<8x512xf32> -> vector<8x512xf32>
    %63 = arith.addf %58, %62 : vector<8x512xf32>
    %c12 = arith.constant 12 : index
    %c0_40 = arith.constant 0 : index
    %c0_41 = arith.constant 0 : index
    %64 = vector.load %arg3[%c12, %c0_40, %c0_41] : memref<27x8x4xbf16, #tpu.memory_space<vmem>>, vector<1x8x4xbf16>
    %65 = vector.shape_cast %64 : vector<1x8x4xbf16> to vector<8x4xbf16>
    %66 = vector.extract_strided_slice %2 {offsets = [0, 110], sizes = [4, 512], strides = [1, 1]} : vector<4x1024xbf16> to vector<4x512xbf16>
    %cst_42 = arith.constant dense<0.000000e+00> : vector<8x512xf32>
    %67 = tpu.matmul %65, %66, %cst_42 {dimension_numbers = #tpu.dot_dimension_numbers<[1], [0], [0], [1], [0, 0, 1, 1], [], []>} : vector<8x4xbf16>, vector<4x512xbf16>, vector<8x512xf32> -> vector<8x512xf32>
    %68 = arith.addf %63, %67 : vector<8x512xf32>
    %c13 = arith.constant 13 : index
    %c0_43 = arith.constant 0 : index
    %c0_44 = arith.constant 0 : index
    %69 = vector.load %arg3[%c13, %c0_43, %c0_44] : memref<27x8x4xbf16, #tpu.memory_space<vmem>>, vector<1x8x4xbf16>
    %70 = vector.shape_cast %69 : vector<1x8x4xbf16> to vector<8x4xbf16>
    %71 = vector.extract_strided_slice %2 {offsets = [0, 111], sizes = [4, 512], strides = [1, 1]} : vector<4x1024xbf16> to vector<4x512xbf16>
    %cst_45 = arith.constant dense<0.000000e+00> : vector<8x512xf32>
    %72 = tpu.matmul %70, %71, %cst_45 {dimension_numbers = #tpu.dot_dimension_numbers<[1], [0], [0], [1], [0, 0, 1, 1], [], []>} : vector<8x4xbf16>, vector<4x512xbf16>, vector<8x512xf32> -> vector<8x512xf32>
    %73 = arith.addf %68, %72 : vector<8x512xf32>
    %c14 = arith.constant 14 : index
    %c0_46 = arith.constant 0 : index
    %c0_47 = arith.constant 0 : index
    %74 = vector.load %arg3[%c14, %c0_46, %c0_47] : memref<27x8x4xbf16, #tpu.memory_space<vmem>>, vector<1x8x4xbf16>
    %75 = vector.shape_cast %74 : vector<1x8x4xbf16> to vector<8x4xbf16>
    %76 = vector.extract_strided_slice %2 {offsets = [0, 112], sizes = [4, 512], strides = [1, 1]} : vector<4x1024xbf16> to vector<4x512xbf16>
    %cst_48 = arith.constant dense<0.000000e+00> : vector<8x512xf32>
    %77 = tpu.matmul %75, %76, %cst_48 {dimension_numbers = #tpu.dot_dimension_numbers<[1], [0], [0], [1], [0, 0, 1, 1], [], []>} : vector<8x4xbf16>, vector<4x512xbf16>, vector<8x512xf32> -> vector<8x512xf32>
    %78 = arith.addf %73, %77 : vector<8x512xf32>
    %c15 = arith.constant 15 : index
    %c0_49 = arith.constant 0 : index
    %c0_50 = arith.constant 0 : index
    %79 = vector.load %arg3[%c15, %c0_49, %c0_50] : memref<27x8x4xbf16, #tpu.memory_space<vmem>>, vector<1x8x4xbf16>
    %80 = vector.shape_cast %79 : vector<1x8x4xbf16> to vector<8x4xbf16>
    %81 = vector.extract_strided_slice %2 {offsets = [0, 120], sizes = [4, 512], strides = [1, 1]} : vector<4x1024xbf16> to vector<4x512xbf16>
    %cst_51 = arith.constant dense<0.000000e+00> : vector<8x512xf32>
    %82 = tpu.matmul %80, %81, %cst_51 {dimension_numbers = #tpu.dot_dimension_numbers<[1], [0], [0], [1], [0, 0, 1, 1], [], []>} : vector<8x4xbf16>, vector<4x512xbf16>, vector<8x512xf32> -> vector<8x512xf32>
    %83 = arith.addf %78, %82 : vector<8x512xf32>
    %c16 = arith.constant 16 : index
    %c0_52 = arith.constant 0 : index
    %c0_53 = arith.constant 0 : index
    %84 = vector.load %arg3[%c16, %c0_52, %c0_53] : memref<27x8x4xbf16, #tpu.memory_space<vmem>>, vector<1x8x4xbf16>
    %85 = vector.shape_cast %84 : vector<1x8x4xbf16> to vector<8x4xbf16>
    %86 = vector.extract_strided_slice %2 {offsets = [0, 121], sizes = [4, 512], strides = [1, 1]} : vector<4x1024xbf16> to vector<4x512xbf16>
    %cst_54 = arith.constant dense<0.000000e+00> : vector<8x512xf32>
    %87 = tpu.matmul %85, %86, %cst_54 {dimension_numbers = #tpu.dot_dimension_numbers<[1], [0], [0], [1], [0, 0, 1, 1], [], []>} : vector<8x4xbf16>, vector<4x512xbf16>, vector<8x512xf32> -> vector<8x512xf32>
    %88 = arith.addf %83, %87 : vector<8x512xf32>
    %c17 = arith.constant 17 : index
    %c0_55 = arith.constant 0 : index
    %c0_56 = arith.constant 0 : index
    %89 = vector.load %arg3[%c17, %c0_55, %c0_56] : memref<27x8x4xbf16, #tpu.memory_space<vmem>>, vector<1x8x4xbf16>
    %90 = vector.shape_cast %89 : vector<1x8x4xbf16> to vector<8x4xbf16>
    %91 = vector.extract_strided_slice %2 {offsets = [0, 122], sizes = [4, 512], strides = [1, 1]} : vector<4x1024xbf16> to vector<4x512xbf16>
    %cst_57 = arith.constant dense<0.000000e+00> : vector<8x512xf32>
    %92 = tpu.matmul %90, %91, %cst_57 {dimension_numbers = #tpu.dot_dimension_numbers<[1], [0], [0], [1], [0, 0, 1, 1], [], []>} : vector<8x4xbf16>, vector<4x512xbf16>, vector<8x512xf32> -> vector<8x512xf32>
    %93 = arith.addf %88, %92 : vector<8x512xf32>
    %c18 = arith.constant 18 : index
    %c0_58 = arith.constant 0 : index
    %c0_59 = arith.constant 0 : index
    %94 = vector.load %arg3[%c18, %c0_58, %c0_59] : memref<27x8x4xbf16, #tpu.memory_space<vmem>>, vector<1x8x4xbf16>
    %95 = vector.shape_cast %94 : vector<1x8x4xbf16> to vector<8x4xbf16>
    %96 = vector.extract_strided_slice %2 {offsets = [0, 200], sizes = [4, 512], strides = [1, 1]} : vector<4x1024xbf16> to vector<4x512xbf16>
    %cst_60 = arith.constant dense<0.000000e+00> : vector<8x512xf32>
    %97 = tpu.matmul %95, %96, %cst_60 {dimension_numbers = #tpu.dot_dimension_numbers<[1], [0], [0], [1], [0, 0, 1, 1], [], []>} : vector<8x4xbf16>, vector<4x512xbf16>, vector<8x512xf32> -> vector<8x512xf32>
    %98 = arith.addf %93, %97 : vector<8x512xf32>
    %c19 = arith.constant 19 : index
    %c0_61 = arith.constant 0 : index
    %c0_62 = arith.constant 0 : index
    %99 = vector.load %arg3[%c19, %c0_61, %c0_62] : memref<27x8x4xbf16, #tpu.memory_space<vmem>>, vector<1x8x4xbf16>
    %100 = vector.shape_cast %99 : vector<1x8x4xbf16> to vector<8x4xbf16>
    %101 = vector.extract_strided_slice %2 {offsets = [0, 201], sizes = [4, 512], strides = [1, 1]} : vector<4x1024xbf16> to vector<4x512xbf16>
    %cst_63 = arith.constant dense<0.000000e+00> : vector<8x512xf32>
    %102 = tpu.matmul %100, %101, %cst_63 {dimension_numbers = #tpu.dot_dimension_numbers<[1], [0], [0], [1], [0, 0, 1, 1], [], []>} : vector<8x4xbf16>, vector<4x512xbf16>, vector<8x512xf32> -> vector<8x512xf32>
    %103 = arith.addf %98, %102 : vector<8x512xf32>
    %c20 = arith.constant 20 : index
    %c0_64 = arith.constant 0 : index
    %c0_65 = arith.constant 0 : index
    %104 = vector.load %arg3[%c20, %c0_64, %c0_65] : memref<27x8x4xbf16, #tpu.memory_space<vmem>>, vector<1x8x4xbf16>
    %105 = vector.shape_cast %104 : vector<1x8x4xbf16> to vector<8x4xbf16>
    %106 = vector.extract_strided_slice %2 {offsets = [0, 202], sizes = [4, 512], strides = [1, 1]} : vector<4x1024xbf16> to vector<4x512xbf16>
    %cst_66 = arith.constant dense<0.000000e+00> : vector<8x512xf32>
    %107 = tpu.matmul %105, %106, %cst_66 {dimension_numbers = #tpu.dot_dimension_numbers<[1], [0], [0], [1], [0, 0, 1, 1], [], []>} : vector<8x4xbf16>, vector<4x512xbf16>, vector<8x512xf32> -> vector<8x512xf32>
    %108 = arith.addf %103, %107 : vector<8x512xf32>
    %c21 = arith.constant 21 : index
    %c0_67 = arith.constant 0 : index
    %c0_68 = arith.constant 0 : index
    %109 = vector.load %arg3[%c21, %c0_67, %c0_68] : memref<27x8x4xbf16, #tpu.memory_space<vmem>>, vector<1x8x4xbf16>
    %110 = vector.shape_cast %109 : vector<1x8x4xbf16> to vector<8x4xbf16>
    %111 = vector.extract_strided_slice %2 {offsets = [0, 210], sizes = [4, 512], strides = [1, 1]} : vector<4x1024xbf16> to vector<4x512xbf16>
    %cst_69 = arith.constant dense<0.000000e+00> : vector<8x512xf32>
    %112 = tpu.matmul %110, %111, %cst_69 {dimension_numbers = #tpu.dot_dimension_numbers<[1], [0], [0], [1], [0, 0, 1, 1], [], []>} : vector<8x4xbf16>, vector<4x512xbf16>, vector<8x512xf32> -> vector<8x512xf32>
    %113 = arith.addf %108, %112 : vector<8x512xf32>
    %c22 = arith.constant 22 : index
    %c0_70 = arith.constant 0 : index
    %c0_71 = arith.constant 0 : index
    %114 = vector.load %arg3[%c22, %c0_70, %c0_71] : memref<27x8x4xbf16, #tpu.memory_space<vmem>>, vector<1x8x4xbf16>
    %115 = vector.shape_cast %114 : vector<1x8x4xbf16> to vector<8x4xbf16>
    %116 = vector.extract_strided_slice %2 {offsets = [0, 211], sizes = [4, 512], strides = [1, 1]} : vector<4x1024xbf16> to vector<4x512xbf16>
    %cst_72 = arith.constant dense<0.000000e+00> : vector<8x512xf32>
    %117 = tpu.matmul %115, %116, %cst_72 {dimension_numbers = #tpu.dot_dimension_numbers<[1], [0], [0], [1], [0, 0, 1, 1], [], []>} : vector<8x4xbf16>, vector<4x512xbf16>, vector<8x512xf32> -> vector<8x512xf32>
    %118 = arith.addf %113, %117 : vector<8x512xf32>
    %c23 = arith.constant 23 : index
    %c0_73 = arith.constant 0 : index
    %c0_74 = arith.constant 0 : index
    %119 = vector.load %arg3[%c23, %c0_73, %c0_74] : memref<27x8x4xbf16, #tpu.memory_space<vmem>>, vector<1x8x4xbf16>
    %120 = vector.shape_cast %119 : vector<1x8x4xbf16> to vector<8x4xbf16>
    %121 = vector.extract_strided_slice %2 {offsets = [0, 212], sizes = [4, 512], strides = [1, 1]} : vector<4x1024xbf16> to vector<4x512xbf16>
    %cst_75 = arith.constant dense<0.000000e+00> : vector<8x512xf32>
    %122 = tpu.matmul %120, %121, %cst_75 {dimension_numbers = #tpu.dot_dimension_numbers<[1], [0], [0], [1], [0, 0, 1, 1], [], []>} : vector<8x4xbf16>, vector<4x512xbf16>, vector<8x512xf32> -> vector<8x512xf32>
    %123 = arith.addf %118, %122 : vector<8x512xf32>
    %c24 = arith.constant 24 : index
    %c0_76 = arith.constant 0 : index
    %c0_77 = arith.constant 0 : index
    %124 = vector.load %arg3[%c24, %c0_76, %c0_77] : memref<27x8x4xbf16, #tpu.memory_space<vmem>>, vector<1x8x4xbf16>
    %125 = vector.shape_cast %124 : vector<1x8x4xbf16> to vector<8x4xbf16>
    %126 = vector.extract_strided_slice %2 {offsets = [0, 220], sizes = [4, 512], strides = [1, 1]} : vector<4x1024xbf16> to vector<4x512xbf16>
    %cst_78 = arith.constant dense<0.000000e+00> : vector<8x512xf32>
    %127 = tpu.matmul %125, %126, %cst_78 {dimension_numbers = #tpu.dot_dimension_numbers<[1], [0], [0], [1], [0, 0, 1, 1], [], []>} : vector<8x4xbf16>, vector<4x512xbf16>, vector<8x512xf32> -> vector<8x512xf32>
    %128 = arith.addf %123, %127 : vector<8x512xf32>
    %c25 = arith.constant 25 : index
    %c0_79 = arith.constant 0 : index
    %c0_80 = arith.constant 0 : index
    %129 = vector.load %arg3[%c25, %c0_79, %c0_80] : memref<27x8x4xbf16, #tpu.memory_space<vmem>>, vector<1x8x4xbf16>
    %130 = vector.shape_cast %129 : vector<1x8x4xbf16> to vector<8x4xbf16>
    %131 = vector.extract_strided_slice %2 {offsets = [0, 221], sizes = [4, 512], strides = [1, 1]} : vector<4x1024xbf16> to vector<4x512xbf16>
    %cst_81 = arith.constant dense<0.000000e+00> : vector<8x512xf32>
    %132 = tpu.matmul %130, %131, %cst_81 {dimension_numbers = #tpu.dot_dimension_numbers<[1], [0], [0], [1], [0, 0, 1, 1], [], []>} : vector<8x4xbf16>, vector<4x512xbf16>, vector<8x512xf32> -> vector<8x512xf32>
    %133 = arith.addf %128, %132 : vector<8x512xf32>
    %c26 = arith.constant 26 : index
    %c0_82 = arith.constant 0 : index
    %c0_83 = arith.constant 0 : index
    %134 = vector.load %arg3[%c26, %c0_82, %c0_83] : memref<27x8x4xbf16, #tpu.memory_space<vmem>>, vector<1x8x4xbf16>
    %135 = vector.shape_cast %134 : vector<1x8x4xbf16> to vector<8x4xbf16>
    %136 = vector.extract_strided_slice %2 {offsets = [0, 222], sizes = [4, 512], strides = [1, 1]} : vector<4x1024xbf16> to vector<4x512xbf16>
    %cst_84 = arith.constant dense<0.000000e+00> : vector<8x512xf32>
    %137 = tpu.matmul %135, %136, %cst_84 {dimension_numbers = #tpu.dot_dimension_numbers<[1], [0], [0], [1], [0, 0, 1, 1], [], []>} : vector<8x4xbf16>, vector<4x512xbf16>, vector<8x512xf32> -> vector<8x512xf32>
    %138 = arith.addf %133, %137 : vector<8x512xf32>
    %c0_85 = arith.constant 0 : index
    %c0_86 = arith.constant 0 : index
    %139 = vector.load %arg4[%c0_85, %c0_86] : memref<8x1xf32, #tpu.memory_space<vmem>>, vector<8x1xf32>
    %140 = vector.broadcast %139 : vector<8x1xf32> to vector<8x512xf32>
    %141 = arith.addf %138, %140 : vector<8x512xf32>
    %cst_87 = arith.constant 0.000000e+00 : f32
    %142 = vector.broadcast %cst_87 : f32 to vector<8x512xf32>
    %143 = arith.maximumf %141, %142 : vector<8x512xf32>
    %c0_88 = arith.constant 0 : index
    %c0_89 = arith.constant 0 : index
    %144 = vector.load %arg5[%c0_88, %c0_89] : memref<1x512xf32, #tpu.memory_space<vmem>>, vector<1x512xf32>
    %145 = vector.broadcast %144 : vector<1x512xf32> to vector<8x512xf32>
    %146 = arith.mulf %143, %145 : vector<8x512xf32>
    %147 = arith.truncf %146 : vector<8x512xf32> to vector<8x512xbf16>
    %c0_90 = arith.constant 0 : index
    %c0_91 = arith.constant 0 : index
    %148 = vector.load %arg6[%c0_90, %c0_91] : memref<8x512xbf16, #tpu.memory_space<vmem>>, vector<8x512xbf16>
    tpu.vector_store %arg6[%c0_90, %c0_91], %147 {strides = array<i32>} : memref<8x512xbf16, #tpu.memory_space<vmem>>, vector<8x512xbf16>,
    return
  }
  func.func @transform_0(%arg0: i32) -> (i32, i32) {
    %c0_i32 = arith.constant 0 : i32
    %c0_i32_0 = arith.constant 0 : i32
    return %c0_i32, %arg0 : i32, i32
  }
  func.func @transform_1(%arg0: i32) -> (i32, i32) {
    %c1_i32 = arith.constant 1 : i32
    %0 = arith.addi %arg0, %c1_i32 : i32
    %c0_i32 = arith.constant 0 : i32
    %c0_i32_0 = arith.constant 0 : i32
    return %c0_i32, %0 : i32, i32
  }
  func.func @transform_2(%arg0: i32) -> (i32, i32, i32) {
    %c0_i32 = arith.constant 0 : i32
    %c0_i32_0 = arith.constant 0 : i32
    %c0_i32_1 = arith.constant 0 : i32
    %c0_i32_2 = arith.constant 0 : i32
    return %c0_i32, %c0_i32_0, %c0_i32_1 : i32, i32, i32
  }
  func.func @transform_3(%arg0: i32) -> (i32, i32) {
    %c0_i32 = arith.constant 0 : i32
    %c0_i32_0 = arith.constant 0 : i32
    %c0_i32_1 = arith.constant 0 : i32
    return %c0_i32, %c0_i32_0 : i32, i32
  }
  func.func @transform_4(%arg0: i32) -> (i32, i32) {
    %c0_i32 = arith.constant 0 : i32
    %c0_i32_0 = arith.constant 0 : i32
    return %c0_i32, %arg0 : i32, i32
  }
  func.func @transform_5(%arg0: i32) -> (i32, i32) {
    %c0_i32 = arith.constant 0 : i32
    %c0_i32_0 = arith.constant 0 : i32
    return %c0_i32, %arg0 : i32, i32
  }
}

</mosaic_0001>

<llo_original>
// kernel: tpu_custom_call.1
$region0: #{tpu_custom_call.1}
  #allocation0 [shape = 'u32[]', space=smem, size = 0x4, offset = 0x4, fixed_abs, tag = 'smem constant byte address 0x4 - core index']
  #allocation1 [shape = 'u32[144,128]{1,0:T(1,128)}', space=vmem, size = 0x12000, scoped, tag = 'internal scratch']
  %s0 = inlined_call_operand.vmem [shape: bf16[4,3072], index: 0, kind: input, shape index: {}]
  %s1 = inlined_call_operand.vmem [shape: bf16[4,3072], index: 1, kind: input, shape index: {}]
  %s2 = inlined_call_operand.vmem [shape: bf16[27,8,4], index: 2, kind: input, shape index: {}]
  %s3 = inlined_call_operand.vmem [shape: f32[8,1], index: 3, kind: input, shape index: {}]
  %s4 = inlined_call_operand.vmem [shape: f32[1,2560], index: 4, kind: input, shape index: {}]
  %s5 = inlined_call_operand.hbm [shape: bf16[8,2560], index: 5, kind: output, shape index: {}]
  %s6 = sld [smem:[#allocation0]]
  $region53: #{tpu_custom_call.1} parent=0
    _
  %s8 = ssub.s32 1, %s6
  %s9 = scalar_select 0, %s8, %s6
  $region1: #{tpu_custom_call.1} parent=0
    #allocation2 [shape = 'u8[16384]{0}', space=vmem, size = 0x4000, scoped, tag = 'output window, operand 0']
    #allocation3 [shape = 's32[2]{0}', space=sflag, size = 0x8, scoped, tag = 'scoped memory for tpu_custom_call.1']
    %10 = vsyncpa [#allocation3], 0
    %s11 = scalar_lea.sflag [#allocation3], 1
    %12 = vsyncpa %s11, 0
    loop: start=0, step=1, limit=7
    $region2: #{tpu_custom_call.1} parent=1 // loop_pre_header
      _
    $region3: #{tpu_custom_call.1} parent=1 // loop_header
      %s14 = sphi 0, %s18
      %p15 = scmp.ge.s32.totalorder %s14, 7
      %s24 = sphi 0, %s26
      %s27 = sphi 0, %s24
      %s28 = sphi 0, %s27
      %s44 = sphi 0, %s28
      %s52 = sphi 0, %s54
      %s55 = sphi 0, %s52
      %s56 = sphi 0, %s55
      %s72 = sphi 0, %s56
      %s76 = sphi 0, %s76
      %s78 = sphi 0, %s76
      %s79 = sphi 0, %s78
      %s93 = sphi 0, %s79
      %s97 = sphi 0, %s97
      %s99 = sphi 0, %s97
      %s100 = sphi 0, %s99
      %s114 = sphi 0, %s100
      %s120 = sphi 0, %s122
      %s123 = sphi 0, %s120
      %s124 = sphi 0, %s123
      %s140 = sphi 0, %s124
      %s146 = sphi 0, %s148
      %s149 = sphi 0, %s146
      %s150 = sphi 0, %s149
      %s166 = sphi 0, %s150
    $region4: #{tpu_custom_call.1} parent=1 // loop_header_branch
      %17 = sbr.rel (%p15) target = $region8
    $region5: #{tpu_custom_call.1} parent=1 // loop_body
      %s19 = ssub.s32 %s14, 1
      %s20 = ssub.s32 %s14, 2
      %s21 = sadd.s32 %s14, 1
      %s22 = ssub.s32 %s14, %s21
      %p23 = scmp.eq.s32.totalorder %s22, 0
      %s25 = sadd.s32 %s24, 1
      %s26 = scalar_select %p23, %s24, %s25
      %p29 = pneg %p23
      %p30 = scmp.eq.s32.totalorder %s14, 4
      %p31 = por %p29, %p30
      %p32 = scmp.ne.s32.totalorder %s24, %s27
      %p33 = scmp.eq.s32.totalorder %s14, 0
      %p34 = por %p32, %p33
      %p35 = scmp.ne.s32.totalorder %s24, %s27
      %p36 = scmp.eq.s32.totalorder %s19, 4
      %p37 = por %p35, %p36
      %p38 = scmp.ne.s32.totalorder %s27, %s28
      %p39 = scmp.eq.s32.totalorder %s19, 0
      %p40 = por %p38, %p39
      %p41 = scmp.ne.s32.totalorder %s27, %s28
      %p42 = scmp.eq.s32.totalorder %s20, 4
      %p43 = por %p41, %p42
      %p45 = scmp.ne.s32.totalorder %s28, %s44
      %p46 = scmp.eq.s32.totalorder %s20, 0
      %p47 = por %p45, %p46
      %s48 = sadd.s32 %s14, 1
      %s49 = sadd.s32 %s21, 1
      %s50 = ssub.s32 %s48, %s49
      %p51 = scmp.eq.s32.totalorder %s50, 0
      %s53 = sadd.s32 %s52, 1
      %s54 = scalar_select %p51, %s52, %s53
      %p57 = pneg %p51
      %p58 = scmp.eq.s32.totalorder %s14, 4
      %p59 = por %p57, %p58
      %p60 = scmp.ne.s32.totalorder %s52, %s55
      %p61 = scmp.eq.s32.totalorder %s14, 0
      %p62 = por %p60, %p61
      %p63 = scmp.ne.s32.totalorder %s52, %s55
      %p64 = scmp.eq.s32.totalorder %s19, 4
      %p65 = por %p63, %p64
      %p66 = scmp.ne.s32.totalorder %s55, %s56
      %p67 = scmp.eq.s32.totalorder %s19, 0
      %p68 = por %p66, %p67
      %p69 = scmp.ne.s32.totalorder %s55, %s56
      %p70 = scmp.eq.s32.totalorder %s20, 4
      %p71 = por %p69, %p70
      %p73 = scmp.ne.s32.totalorder %s56, %s72
      %p74 = scmp.eq.s32.totalorder %s20, 0
      %p75 = por %p73, %p74
      %s77 = sadd.s32 %s76, 1
      %p80 = scmp.eq.s32.totalorder %s14, 4
      %p81 = scmp.ne.s32.totalorder %s76, %s78
      %p82 = scmp.eq.s32.totalorder %s14, 0
      %p83 = por %p81, %p82
      %p84 = scmp.ne.s32.totalorder %s76, %s78
      %p85 = scmp.eq.s32.totalorder %s19, 4
      %p86 = por %p84, %p85
      %p87 = scmp.ne.s32.totalorder %s78, %s79
      %p88 = scmp.eq.s32.totalorder %s19, 0
      %p89 = por %p87, %p88
      %p90 = scmp.ne.s32.totalorder %s78, %s79
      %p91 = scmp.eq.s32.totalorder %s20, 4
      %p92 = por %p90, %p91
      %p94 = scmp.ne.s32.totalorder %s79, %s93
      %p95 = scmp.eq.s32.totalorder %s20, 0
      %p96 = por %p94, %p95
      %s98 = sadd.s32 %s97, 1
      %p101 = scmp.eq.s32.totalorder %s14, 4
      %p102 = scmp.ne.s32.totalorder %s97, %s99
      %p103 = scmp.eq.s32.totalorder %s14, 0
      %p104 = por %p102, %p103
      %p105 = scmp.ne.s32.totalorder %s97, %s99
      %p106 = scmp.eq.s32.totalorder %s19, 4
      %p107 = por %p105, %p106
      %p108 = scmp.ne.s32.totalorder %s99, %s100
      %p109 = scmp.eq.s32.totalorder %s19, 0
      %p110 = por %p108, %p109
      %p111 = scmp.ne.s32.totalorder %s99, %s100
      %p112 = scmp.eq.s32.totalorder %s20, 4
      %p113 = por %p111, %p112
      %p115 = scmp.ne.s32.totalorder %s100, %s114
      %p116 = scmp.eq.s32.totalorder %s20, 0
      %p117 = por %p115, %p116
      %s118 = ssub.s32 %s14, %s21
      %p119 = scmp.eq.s32.totalorder %s118, 0
      %s121 = sadd.s32 %s120, 1
      %s122 = scalar_select %p119, %s120, %s121
      %p125 = pneg %p119
      %p126 = scmp.eq.s32.totalorder %s14, 4
      %p127 = por %p125, %p126
      %p128 = scmp.ne.s32.totalorder %s120, %s123
      %p129 = scmp.eq.s32.totalorder %s14, 0
      %p130 = por %p128, %p129
      %p131 = scmp.ne.s32.totalorder %s120, %s123
      %p132 = scmp.eq.s32.totalorder %s19, 4
      %p133 = por %p131, %p132
      %p134 = scmp.ne.s32.totalorder %s123, %s124
      %p135 = scmp.eq.s32.totalorder %s19, 0
      %p136 = por %p134, %p135
      %p137 = scmp.ne.s32.totalorder %s123, %s124
      %p138 = scmp.eq.s32.totalorder %s20, 4
      %p139 = por %p137, %p138
      %p141 = scmp.ne.s32.totalorder %s124, %s140
      %p142 = scmp.eq.s32.totalorder %s20, 0
      %p143 = por %p141, %p142
      %s144 = ssub.s32 %s14, %s21
      %p145 = scmp.eq.s32.totalorder %s144, 0
      %s147 = sadd.s32 %s146, 1
      %s148 = scalar_select %p145, %s146, %s147
      %p151 = pneg %p145
      %p152 = scmp.eq.s32.totalorder %s14, 4
      %p153 = por %p151, %p152
      %p154 = scmp.ne.s32.totalorder %s146, %s149
      %p155 = scmp.eq.s32.totalorder %s14, 0
      %p156 = por %p154, %p155
      %p157 = scmp.ne.s32.totalorder %s146, %s149
      %p158 = scmp.eq.s32.totalorder %s19, 4
      %p159 = por %p157, %p158
      %p160 = scmp.ne.s32.totalorder %s149, %s150
      %p161 = scmp.eq.s32.totalorder %s19, 0
      %p162 = por %p160, %p161
      %p163 = scmp.ne.s32.totalorder %s149, %s150
      %p164 = scmp.eq.s32.totalorder %s20, 4
      %p165 = por %p163, %p164
      %p167 = scmp.ne.s32.totalorder %s150, %s166
      %p168 = scmp.eq.s32.totalorder %s20, 0
      %p169 = por %p167, %p168
      %p170 = scmp.le.s32.totalorder 1, %s14
      %p171 = scmp.lt.s32.totalorder %s14, 6
      %p172 = pnand %p170, %p171
      %p173 = pneg %p172
      // Predicated region
      $region9: #{tpu_custom_call.1} parent=5 // pred_check
        _
      $region10: #{tpu_custom_call.1} parent=5 // pred_check_branch
        %175 = sbr.rel (%p172) target = $region12
      $region11: #{tpu_custom_call.1} parent=5 // pred_region
        %s176 = ssub.s32 %s14, 1
        // Predicated region
        $region13: #{tpu_custom_call.1} parent=11 // pred_check
          %p177 = pneg %p89
        $region14: #{tpu_custom_call.1} parent=11 // pred_check_branch
          %179 = sbr.rel (%p177) target = $region16
        $region15: #{tpu_custom_call.1} parent=11 // pred_region
          _
        $region16: #{tpu_custom_call.1} parent=11 // pred_fallthru
          _
        // Predicated region
        $region17: #{tpu_custom_call.1} parent=11 // pred_check
          %p180 = pneg %p110
        $region18: #{tpu_custom_call.1} parent=11 // pred_check_branch
          %182 = sbr.rel (%p180) target = $region20
        $region19: #{tpu_custom_call.1} parent=11 // pred_region
          _
        $region20: #{tpu_custom_call.1} parent=11 // pred_fallthru
          _
      $region12: #{tpu_custom_call.1} parent=5 // pred_fallthru
        _
      %p183 = scmp.lt.s32.totalorder %s14, 5
      // Predicated region
      $region21: #{tpu_custom_call.1} parent=5 // pred_check
        %p184 = pneg %p183
      $region22: #{tpu_custom_call.1} parent=5 // pred_check_branch
        %186 = sbr.rel (%p184) target = $region24
      $region23: #{tpu_custom_call.1} parent=5 // pred_region
        // Predicated region
        $region25: #{tpu_custom_call.1} parent=23 // pred_check
          %p187 = pneg %p34
        $region26: #{tpu_custom_call.1} parent=23 // pred_check_branch
          %189 = sbr.rel (%p187) target = $region28
        $region27: #{tpu_custom_call.1} parent=23 // pred_region
          %s190 = smul.u32 4, %s14
          %p191 = scmp.lt.s32.totalorder %s190, 23
          %s192 = scalar_select %p191, %s190, 23
          %s193 = smul.addr %s192, 2
          %s194 = scalar_lea.vmem %s0, %s193
          %s195 = smul.u32 4, %s14
        $region28: #{tpu_custom_call.1} parent=23 // pred_fallthru
          _
        // Predicated region
        $region29: #{tpu_custom_call.1} parent=23 // pred_check
          %p196 = pneg %p62
        $region30: #{tpu_custom_call.1} parent=23 // pred_check_branch
          %198 = sbr.rel (%p196) target = $region32
        $region31: #{tpu_custom_call.1} parent=23 // pred_region
          %s199 = sadd.s32 %s14, 1
          %s200 = smul.u32 4, %s199
          %p201 = scmp.lt.s32.totalorder %s200, 23
          %s202 = scalar_select %p201, %s200, 23
          %s203 = smul.addr %s202, 2
          %s204 = scalar_lea.vmem %s1, %s203
          %s205 = sadd.s32 %s14, 1
          %s206 = smul.u32 4, %s205
        $region32: #{tpu_custom_call.1} parent=23 // pred_fallthru
          _
        // Predicated region
        $region33: #{tpu_custom_call.1} parent=23 // pred_check
          %p207 = pneg %p130
        $region34: #{tpu_custom_call.1} parent=23 // pred_check_branch
          %209 = sbr.rel (%p207) target = $region36
        $region35: #{tpu_custom_call.1} parent=23 // pred_region
          %s210 = smul.u32 4, %s14
          %p211 = scmp.lt.s32.totalorder %s210, 19
          %s212 = scalar_select %p211, %s210, 19
          %s213 = scalar_lea.vmem %s4, %s212
          %s214 = smul.u32 4, %s14
        $region36: #{tpu_custom_call.1} parent=23 // pred_fallthru
          _
      $region24: #{tpu_custom_call.1} parent=5 // pred_fallthru
        _
      %p215 = scmp.le.s32.totalorder 1, %s14
      %p216 = scmp.lt.s32.totalorder %s14, 6
      %p217 = pnand %p215, %p216
      %p218 = pneg %p217
      // Predicated region
      $region37: #{tpu_custom_call.1} parent=5 // pred_check
        _
      $region38: #{tpu_custom_call.1} parent=5 // pred_check_branch
        %220 = sbr.rel (%p217) target = $region40
      $region39: #{tpu_custom_call.1} parent=5 // pred_region
        %s221 = ssub.s32 %s14, 1
        %s222 = smul.u32 4, %s19
        %p223 = scmp.lt.s32.totalorder %s222, 23
        %s224 = scalar_select %p223, %s222, 23
        %s225 = smul.addr %s224, 2
        %s226 = scalar_lea.vmem %s0, %s225
        %p227 = pneg %p40
        %p228 = pneg %p37
        %s229 = sadd.s32 %s19, 1
        %s230 = smul.u32 4, %s229
        %p231 = scmp.lt.s32.totalorder %s230, 23
        %s232 = scalar_select %p231, %s230, 23
        %s233 = smul.addr %s232, 2
        %s234 = scalar_lea.vmem %s1, %s233
        %p235 = pneg %p68
        %p236 = pneg %p65
        %p237 = pneg %p89
        %p238 = pneg %p86
        %p239 = pneg %p110
        %p240 = pneg %p107
        %s241 = smul.u32 4, %s19
        %p242 = scmp.lt.s32.totalorder %s241, 19
        %s243 = scalar_select %p242, %s241, 19
        %s244 = scalar_lea.vmem %s4, %s243
        %p245 = pneg %p136
        %p246 = pneg %p133
        %p247 = pneg %p162
        %p248 = pneg %p159
        %s249 = sand.u32 %s149, 1
        %s250 = scalar_lea.sflag [#allocation3], %s249
        %s251 = sand.u32 %s149, 1
        %s252 = smul.addr %s251, 16
        %s253 = scalar_lea.vmem [#allocation2], %s252
        %s254 = smul.u32 4, %s19
        %p255 = scmp.lt.s32.totalorder %s254, 23
        %s256 = scalar_select %p255, %s254, 23
        %s257 = smul.addr %s256, 2
        %s258 = scalar_lea.vmem %s0, %s257
        %s259 = smul.u32 4, %s19
        %s260 = sadd.s32 %s19, 1
        %s261 = smul.u32 4, %s260
        %p262 = scmp.lt.s32.totalorder %s261, 23
        %s263 = scalar_select %p262, %s261, 23
        %s264 = smul.addr %s263, 2
        %s265 = scalar_lea.vmem %s1, %s264
        %s266 = sadd.s32 %s19, 1
        %s267 = smul.u32 4, %s266
        %s268 = smul.u32 4, %s19
        %p269 = scmp.lt.s32.totalorder %s268, 19
        %s270 = scalar_select %p269, %s268, 19
        %s271 = scalar_lea.vmem %s4, %s270
        %s272 = smul.u32 4, %s19
        %s273 = smul.u32 4, %s19
        %v275 = vld [vmem:[%s258] sm:$0xff]
        %v276 = vld [vmem:[%s265] sm:$0xff]
        %v278 = vcombine.high %v275, %v275
        %v280 = vunpack.c.l.s4 1983009808
        %v281 = vunpack.c.0.s8 %v280
        %v282 = vlaneseq
        %v283 = vshrl.u32 %v282, 7
        %v284 = vsub.s32 %v281, %v283
        %v285 = vrot.slane %v275, %v284
        %v287 = vunpack.c.l.s4 1983009808
        %v288 = vunpack.c.0.s8 %v287
        %v289 = vlaneseq
        %v290 = vshrl.u32 %v289, 7
        %v291 = vsub.s32 %v288, %v290
        %v292 = vrot.slane %v278, %v291
        %v293 = vcombine.high %v285, %v285
        %v294 = vcombine.high %v292, %v292
        %v297 = vunpack.c.l.s4 1983009808
        %v298 = vunpack.c.0.s8 %v297
        %v299 = vlaneseq
        %v300 = vshrl.u32 %v299, 7
        %v301 = vsub.s32 %v298, %v300
        %v302 = vrot.slane %v276, %v301
        %v303 = vcombine.high %v302, %v302
        %v304 = vld [vmem:[%s2] sm:$0xf]
        %s305 = scalar_lea.vmem %s2, 4
        %v306 = vld [vmem:[%s305] sm:$0xf]
        %307 = vrot.lane.b32.xlu0 %v285, 127
        %v308 = vpop.permute.xlu0 %307
        %309 = vrot.lane.b32.xlu0 %v293, 127
        %v310 = vpop.permute.xlu0 %309
        %311 = vrot.lane.b32.xlu0 %v292, 127
        %v312 = vpop.permute.xlu0 %311
        %313 = vrot.lane.b32.xlu0 %v294, 127
        %v314 = vpop.permute.xlu0 %313
        %315 = vrot.lane.b32.xlu0 %v302, 127
        %v316 = vpop.permute.xlu0 %315
        %vm317 = vcmask 1039360
        %v318 = vsel %vm317, %v308, %v310
        %v319 = vsel %vm317, %v310, %v312
        %v320 = vsel %vm317, %v312, %v314
        %v321 = vsel %vm317, %v314, %v316
        %vm322 = vcmask 31744
        %v324 = vsel %vm322, %v306, 0
        %vm326 = vcmask 1041408
        %v328 = vsel %vm326, %v318, 0
        %v331 = vsel %vm326, %v319, 0
        %v334 = vsel %vm326, %v320, 0
        %v337 = vsel %vm326, %v321, 0
        %339 = vmatprep.subr.bf16.mxu0 0
        %340 = vmatpush1.bf16.msra.mxu0 0
        %341 = vmatprep.subr.bf16.mxu0 0
        %342 = vmatpush1.bf16.msra.mxu0 0
        %343 = vmatprep.subr.bf16.mxu0 0
        %344 = vmatpush1.bf16.msra.mxu0 0
        %345 = vmatprep.subr.bf16.mxu0 0
        %346 = vmatpush1.bf16.msra.mxu0 0
        %347 = vmatprep.subr.bf16.mxu0 0
        %348 = vmatpush1.bf16.msra.mxu0 0
        %349 = vmatprep.subr.bf16.mxu0 0
        %350 = vmatpush1.bf16.msra.mxu0 0
        %351 = vmatprep.subr.bf16.mxu0 0
        %352 = vmatpush1.bf16.msra.mxu0 0
        %353 = vmatprep.subr.bf16.mxu0 %v331
        %354 = vmatpush1.bf16.msra.mxu0 %v328
        %355 = vmatprep.subr.bf16.mxu0 0
        %356 = vmatpush2.bf16.msra.mxu0 0
        %357 = vmatprep.subr.bf16.mxu0 0
        %358 = vmatpush2.bf16.msra.mxu0 0
        %359 = vmatprep.subr.bf16.mxu0 0
        %360 = vmatpush2.bf16.msra.mxu0 0
        %361 = vmatprep.subr.bf16.mxu0 0
        %362 = vmatpush2.bf16.msra.mxu0 0
        %363 = vmatprep.subr.bf16.mxu0 0
        %364 = vmatpush2.bf16.msra.mxu0 0
        %365 = vmatprep.subr.bf16.mxu0 0
        %366 = vmatpush2.bf16.msra.mxu0 0
        %367 = vmatprep.subr.bf16.mxu0 0
        %368 = vmatpush2.bf16.msra.mxu0 0
        %369 = vmatprep.subr.bf16.mxu0 0
        %370 = vmatpush2.bf16.msra.mxu0 0
        %371 = vmatprep.mubr.bf16.mxu0 0
        %372 = vmatmul.mubr.bf16.gmra.mxu0 %v324
        %v373 = vpop.f32.mrf.mxu0
        %v374 = vadd.f32 0.0, %v373
        %v375 = vpop.f32.mrf.mxu0
        %v376 = vadd.f32 0.0, %v375
        %v377 = vpop.f32.mrf.mxu0
        %v378 = vpop.f32.mrf.mxu0
        %379 = vdwg.mxu0
        %380 = vmatprep.subr.bf16.mxu0 0
        %381 = vmatpush1.bf16.msra.mxu0 0
        %382 = vmatprep.subr.bf16.mxu0 0
        %383 = vmatpush1.bf16.msra.mxu0 0
        %384 = vmatprep.subr.bf16.mxu0 0
        %385 = vmatpush1.bf16.msra.mxu0 0
        %386 = vmatprep.subr.bf16.mxu0 0
        %387 = vmatpush1.bf16.msra.mxu0 0
        %388 = vmatprep.subr.bf16.mxu0 0
        %389 = vmatpush1.bf16.msra.mxu0 0
        %390 = vmatprep.subr.bf16.mxu0 0
        %391 = vmatpush1.bf16.msra.mxu0 0
        %392 = vmatprep.subr.bf16.mxu0 0
        %393 = vmatpush1.bf16.msra.mxu0 0
        %394 = vmatprep.subr.bf16.mxu0 %v337
        %395 = vmatpush1.bf16.msra.mxu0 %v334
        %396 = vmatprep.subr.bf16.mxu0 0
        %397 = vmatpush2.bf16.msra.mxu0 0
        %398 = vmatprep.subr.bf16.mxu0 0
        %399 = vmatpush2.bf16.msra.mxu0 0
        %400 = vmatprep.subr.bf16.mxu0 0
        %401 = vmatpush2.bf16.msra.mxu0 0
        %402 = vmatprep.subr.bf16.mxu0 0
        %403 = vmatpush2.bf16.msra.mxu0 0
        %404 = vmatprep.subr.bf16.mxu0 0
        %405 = vmatpush2.bf16.msra.mxu0 0
        %406 = vmatprep.subr.bf16.mxu0 0
        %407 = vmatpush2.bf16.msra.mxu0 0
        %408 = vmatprep.subr.bf16.mxu0 0
        %409 = vmatpush2.bf16.msra.mxu0 0
        %410 = vmatprep.subr.bf16.mxu0 0
        %411 = vmatpush2.bf16.msra.mxu0 0
        %412 = vmatprep.mubr.bf16.mxu0 0
        %413 = vmatmul.mubr.bf16.gmra.mxu0 %v324
        %v414 = vpop.f32.mrf.mxu0
        %v415 = vadd.f32 0.0, %v414
        %v416 = vpop.f32.mrf.mxu0
        %v417 = vadd.f32 0.0, %v416
        %v418 = vpop.f32.mrf.mxu0
        %v419 = vpop.f32.mrf.mxu0
        %420 = vdwg.mxu0
        %v422 = vsel %vm322, %v304, 0
        %v425 = vsel %vm326, %v285, 0
        %v428 = vsel %vm326, %v293, 0
        %v431 = vsel %vm326, %v292, 0
        %v434 = vsel %vm326, %v294, 0
        %436 = vmatprep.subr.bf16.mxu0 0
        %437 = vmatpush1.bf16.msra.mxu0 0
        %438 = vmatprep.subr.bf16.mxu0 0
        %439 = vmatpush1.bf16.msra.mxu0 0
        %440 = vmatprep.subr.bf16.mxu0 0
        %441 = vmatpush1.bf16.msra.mxu0 0
        %442 = vmatprep.subr.bf16.mxu0 0
        %443 = vmatpush1.bf16.msra.mxu0 0
        %444 = vmatprep.subr.bf16.mxu0 0
        %445 = vmatpush1.bf16.msra.mxu0 0
        %446 = vmatprep.subr.bf16.mxu0 0
        %447 = vmatpush1.bf16.msra.mxu0 0
        %448 = vmatprep.subr.bf16.mxu0 0
        %449 = vmatpush1.bf16.msra.mxu0 0
        %450 = vmatprep.subr.bf16.mxu0 %v428
        %451 = vmatpush1.bf16.msra.mxu0 %v425
        %452 = vmatprep.subr.bf16.mxu0 0
        %453 = vmatpush2.bf16.msra.mxu0 0
        %454 = vmatprep.subr.bf16.mxu0 0
        %455 = vmatpush2.bf16.msra.mxu0 0
        %456 = vmatprep.subr.bf16.mxu0 0
        %457 = vmatpush2.bf16.msra.mxu0 0
        %458 = vmatprep.subr.bf16.mxu0 0
        %459 = vmatpush2.bf16.msra.mxu0 0
        %460 = vmatprep.subr.bf16.mxu0 0
        %461 = vmatpush2.bf16.msra.mxu0 0
        %462 = vmatprep.subr.bf16.mxu0 0
        %463 = vmatpush2.bf16.msra.mxu0 0
        %464 = vmatprep.subr.bf16.mxu0 0
        %465 = vmatpush2.bf16.msra.mxu0 0
        %466 = vmatprep.subr.bf16.mxu0 0
        %467 = vmatpush2.bf16.msra.mxu0 0
        %468 = vmatprep.mubr.bf16.mxu0 0
        %469 = vmatmul.mubr.bf16.gmra.mxu0 %v422
        %v470 = vpop.f32.mrf.mxu0
        %v471 = vadd.f32 %v374, %v470
        %v472 = vpop.f32.mrf.mxu0
        %v473 = vadd.f32 %v376, %v472
        %v474 = vpop.f32.mrf.mxu0
        %v475 = vpop.f32.mrf.mxu0
        %476 = vdwg.mxu0
        %477 = vmatprep.subr.bf16.mxu0 0
        %478 = vmatpush1.bf16.msra.mxu0 0
        %479 = vmatprep.subr.bf16.mxu0 0
        %480 = vmatpush1.bf16.msra.mxu0 0
        %481 = vmatprep.subr.bf16.mxu0 0
        %482 = vmatpush1.bf16.msra.mxu0 0
        %483 = vmatprep.subr.bf16.mxu0 0
        %484 = vmatpush1.bf16.msra.mxu0 0
        %485 = vmatprep.subr.bf16.mxu0 0
        %486 = vmatpush1.bf16.msra.mxu0 0
        %487 = vmatprep.subr.bf16.mxu0 0
        %488 = vmatpush1.bf16.msra.mxu0 0
        %489 = vmatprep.subr.bf16.mxu0 0
        %490 = vmatpush1.bf16.msra.mxu0 0
        %491 = vmatprep.subr.bf16.mxu0 %v434
        %492 = vmatpush1.bf16.msra.mxu0 %v431
        %493 = vmatprep.subr.bf16.mxu0 0
        %494 = vmatpush2.bf16.msra.mxu0 0
        %495 = vmatprep.subr.bf16.mxu0 0
        %496 = vmatpush2.bf16.msra.mxu0 0
        %497 = vmatprep.subr.bf16.mxu0 0
        %498 = vmatpush2.bf16.msra.mxu0 0
        %499 = vmatprep.subr.bf16.mxu0 0
        %500 = vmatpush2.bf16.msra.mxu0 0
        %501 = vmatprep.subr.bf16.mxu0 0
        %502 = vmatpush2.bf16.msra.mxu0 0
        %503 = vmatprep.subr.bf16.mxu0 0
        %504 = vmatpush2.bf16.msra.mxu0 0
        %505 = vmatprep.subr.bf16.mxu0 0
        %506 = vmatpush2.bf16.msra.mxu0 0
        %507 = vmatprep.subr.bf16.mxu0 0
        %508 = vmatpush2.bf16.msra.mxu0 0
        %509 = vmatprep.mubr.bf16.mxu0 0
        %510 = vmatmul.mubr.bf16.gmra.mxu0 %v422
        %v511 = vpop.f32.mrf.mxu0
        %v512 = vadd.f32 %v415, %v511
        %v513 = vpop.f32.mrf.mxu0
        %v514 = vadd.f32 %v417, %v513
        %v515 = vpop.f32.mrf.mxu0
        %v516 = vpop.f32.mrf.mxu0
        %517 = vdwg.mxu0
        %s518 = scalar_lea.vmem %s2, 8
        %v519 = vld [vmem:[%s518] sm:$0xf]
        %520 = vrot.lane.b32.xlu0 %v285, 126
        %v521 = vpop.permute.xlu0 %520
        %522 = vrot.lane.b32.xlu0 %v293, 126
        %v523 = vpop.permute.xlu0 %522
        %524 = vrot.lane.b32.xlu0 %v292, 126
        %v525 = vpop.permute.xlu0 %524
        %526 = vrot.lane.b32.xlu0 %v294, 126
        %v527 = vpop.permute.xlu0 %526
        %528 = vrot.lane.b32.xlu0 %v302, 126
        %v529 = vpop.permute.xlu0 %528
        %vm530 = vcmask 1031168
        %v531 = vsel %vm530, %v521, %v523
        %v532 = vsel %vm530, %v523, %v525
        %v533 = vsel %vm530, %v525, %v527
        %v534 = vsel %vm530, %v527, %v529
        %v536 = vsel %vm322, %v519, 0
        %v539 = vsel %vm326, %v531, 0
        %v542 = vsel %vm326, %v532, 0
        %v545 = vsel %vm326, %v533, 0
        %v548 = vsel %vm326, %v534, 0
        %550 = vmatprep.subr.bf16.mxu0 0
        %551 = vmatpush1.bf16.msra.mxu0 0
        %552 = vmatprep.subr.bf16.mxu0 0
        %553 = vmatpush1.bf16.msra.mxu0 0
        %554 = vmatprep.subr.bf16.mxu0 0
        %555 = vmatpush1.bf16.msra.mxu0 0
        %556 = vmatprep.subr.bf16.mxu0 0
        %557 = vmatpush1.bf16.msra.mxu0 0
        %558 = vmatprep.subr.bf16.mxu0 0
        %559 = vmatpush1.bf16.msra.mxu0 0
        %560 = vmatprep.subr.bf16.mxu0 0
        %561 = vmatpush1.bf16.msra.mxu0 0
        %562 = vmatprep.subr.bf16.mxu0 0
        %563 = vmatpush1.bf16.msra.mxu0 0
        %564 = vmatprep.subr.bf16.mxu0 %v542
        %565 = vmatpush1.bf16.msra.mxu0 %v539
        %566 = vmatprep.subr.bf16.mxu0 0
        %567 = vmatpush2.bf16.msra.mxu0 0
        %568 = vmatprep.subr.bf16.mxu0 0
        %569 = vmatpush2.bf16.msra.mxu0 0
        %570 = vmatprep.subr.bf16.mxu0 0
        %571 = vmatpush2.bf16.msra.mxu0 0
        %572 = vmatprep.subr.bf16.mxu0 0
        %573 = vmatpush2.bf16.msra.mxu0 0
        %574 = vmatprep.subr.bf16.mxu0 0
        %575 = vmatpush2.bf16.msra.mxu0 0
        %576 = vmatprep.subr.bf16.mxu0 0
        %577 = vmatpush2.bf16.msra.mxu0 0
        %578 = vmatprep.subr.bf16.mxu0 0
        %579 = vmatpush2.bf16.msra.mxu0 0
        %580 = vmatprep.subr.bf16.mxu0 0
        %581 = vmatpush2.bf16.msra.mxu0 0
        %582 = vmatprep.mubr.bf16.mxu0 0
        %583 = vmatmul.mubr.bf16.gmra.mxu0 %v536
        %v584 = vpop.f32.mrf.mxu0
        %v585 = vadd.f32 0.0, %v584
        %v586 = vpop.f32.mrf.mxu0
        %v587 = vadd.f32 0.0, %v586
        %v588 = vpop.f32.mrf.mxu0
        %v589 = vpop.f32.mrf.mxu0
        %590 = vdwg.mxu0
        %591 = vmatprep.subr.bf16.mxu0 0
        %592 = vmatpush1.bf16.msra.mxu0 0
        %593 = vmatprep.subr.bf16.mxu0 0
        %594 = vmatpush1.bf16.msra.mxu0 0
        %595 = vmatprep.subr.bf16.mxu0 0
        %596 = vmatpush1.bf16.msra.mxu0 0
        %597 = vmatprep.subr.bf16.mxu0 0
        %598 = vmatpush1.bf16.msra.mxu0 0
        %599 = vmatprep.subr.bf16.mxu0 0
        %600 = vmatpush1.bf16.msra.mxu0 0
        %601 = vmatprep.subr.bf16.mxu0 0
        %602 = vmatpush1.bf16.msra.mxu0 0
        %603 = vmatprep.subr.bf16.mxu0 0
        %604 = vmatpush1.bf16.msra.mxu0 0
        %605 = vmatprep.subr.bf16.mxu0 %v548
        %606 = vmatpush1.bf16.msra.mxu0 %v545
        %607 = vmatprep.subr.bf16.mxu0 0
        %608 = vmatpush2.bf16.msra.mxu0 0
        %609 = vmatprep.subr.bf16.mxu0 0
        %610 = vmatpush2.bf16.msra.mxu0 0
        %611 = vmatprep.subr.bf16.mxu0 0
        %612 = vmatpush2.bf16.msra.mxu0 0
        %613 = vmatprep.subr.bf16.mxu0 0
        %614 = vmatpush2.bf16.msra.mxu0 0
        %615 = vmatprep.subr.bf16.mxu0 0
        %616 = vmatpush2.bf16.msra.mxu0 0
        %617 = vmatprep.subr.bf16.mxu0 0
        %618 = vmatpush2.bf16.msra.mxu0 0
        %619 = vmatprep.subr.bf16.mxu0 0
        %620 = vmatpush2.bf16.msra.mxu0 0
        %621 = vmatprep.subr.bf16.mxu0 0
        %622 = vmatpush2.bf16.msra.mxu0 0
        %623 = vmatprep.mubr.bf16.mxu0 0
        %624 = vmatmul.mubr.bf16.gmra.mxu0 %v536
        %v625 = vpop.f32.mrf.mxu0
        %v626 = vadd.f32 0.0, %v625
        %v627 = vpop.f32.mrf.mxu0
        %v628 = vadd.f32 0.0, %v627
        %v629 = vpop.f32.mrf.mxu0
        %v630 = vpop.f32.mrf.mxu0
        %631 = vdwg.mxu0
        %v632 = vadd.f32 %v471, %v585
        %v633 = vadd.f32 %v473, %v587
        %v634 = vadd.f32 %v512, %v626
        %v635 = vadd.f32 %v514, %v628
        %s636 = scalar_lea.vmem %s2, 12
        %v637 = vld [vmem:[%s636] sm:$0xf]
        %638 = vrot.lane.b32.xlu0 %v285, 118
        %v639 = vpop.permute.xlu0 %638
        %640 = vrot.lane.b32.xlu0 %v293, 118
        %v641 = vpop.permute.xlu0 %640
        %642 = vrot.lane.b32.xlu0 %v292, 118
        %v643 = vpop.permute.xlu0 %642
        %644 = vrot.lane.b32.xlu0 %v294, 118
        %v645 = vpop.permute.xlu0 %644
        %646 = vrot.lane.b32.xlu0 %v302, 118
        %v647 = vpop.permute.xlu0 %646
        %vm648 = vcmask 965632
        %v649 = vsel %vm648, %v639, %v641
        %v650 = vsel %vm648, %v641, %v643
        %v651 = vsel %vm648, %v643, %v645
        %v652 = vsel %vm648, %v645, %v647
        %v654 = vsel %vm322, %v637, 0
        %v657 = vsel %vm326, %v649, 0
        %v660 = vsel %vm326, %v650, 0
        %v663 = vsel %vm326, %v651, 0
        %v666 = vsel %vm326, %v652, 0
        %668 = vmatprep.subr.bf16.mxu0 0
        %669 = vmatpush1.bf16.msra.mxu0 0
        %670 = vmatprep.subr.bf16.mxu0 0
        %671 = vmatpush1.bf16.msra.mxu0 0
        %672 = vmatprep.subr.bf16.mxu0 0
        %673 = vmatpush1.bf16.msra.mxu0 0
        %674 = vmatprep.subr.bf16.mxu0 0
        %675 = vmatpush1.bf16.msra.mxu0 0
        %676 = vmatprep.subr.bf16.mxu0 0
        %677 = vmatpush1.bf16.msra.mxu0 0
        %678 = vmatprep.subr.bf16.mxu0 0
        %679 = vmatpush1.bf16.msra.mxu0 0
        %680 = vmatprep.subr.bf16.mxu0 0
        %681 = vmatpush1.bf16.msra.mxu0 0
        %682 = vmatprep.subr.bf16.mxu0 %v660
        %683 = vmatpush1.bf16.msra.mxu0 %v657
        %684 = vmatprep.subr.bf16.mxu0 0
        %685 = vmatpush2.bf16.msra.mxu0 0
        %686 = vmatprep.subr.bf16.mxu0 0
        %687 = vmatpush2.bf16.msra.mxu0 0
        %688 = vmatprep.subr.bf16.mxu0 0
        %689 = vmatpush2.bf16.msra.mxu0 0
        %690 = vmatprep.subr.bf16.mxu0 0
        %691 = vmatpush2.bf16.msra.mxu0 0
        %692 = vmatprep.subr.bf16.mxu0 0
        %693 = vmatpush2.bf16.msra.mxu0 0
        %694 = vmatprep.subr.bf16.mxu0 0
        %695 = vmatpush2.bf16.msra.mxu0 0
        %696 = vmatprep.subr.bf16.mxu0 0
        %697 = vmatpush2.bf16.msra.mxu0 0
        %698 = vmatprep.subr.bf16.mxu0 0
        %699 = vmatpush2.bf16.msra.mxu0 0
        %700 = vmatprep.mubr.bf16.mxu0 0
        %701 = vmatmul.mubr.bf16.gmra.mxu0 %v654
        %v702 = vpop.f32.mrf.mxu0
        %v703 = vadd.f32 0.0, %v702
        %v704 = vpop.f32.mrf.mxu0
        %v705 = vadd.f32 0.0, %v704
        %v706 = vpop.f32.mrf.mxu0
        %v707 = vpop.f32.mrf.mxu0
        %708 = vdwg.mxu0
        %709 = vmatprep.subr.bf16.mxu0 0
        %710 = vmatpush1.bf16.msra.mxu0 0
        %711 = vmatprep.subr.bf16.mxu0 0
        %712 = vmatpush1.bf16.msra.mxu0 0
        %713 = vmatprep.subr.bf16.mxu0 0
        %714 = vmatpush1.bf16.msra.mxu0 0
        %715 = vmatprep.subr.bf16.mxu0 0
        %716 = vmatpush1.bf16.msra.mxu0 0
        %717 = vmatprep.subr.bf16.mxu0 0
        %718 = vmatpush1.bf16.msra.mxu0 0
        %719 = vmatprep.subr.bf16.mxu0 0
        %720 = vmatpush1.bf16.msra.mxu0 0
        %721 = vmatprep.subr.bf16.mxu0 0
        %722 = vmatpush1.bf16.msra.mxu0 0
        %723 = vmatprep.subr.bf16.mxu0 %v666
        %724 = vmatpush1.bf16.msra.mxu0 %v663
        %725 = vmatprep.subr.bf16.mxu0 0
        %726 = vmatpush2.bf16.msra.mxu0 0
        %727 = vmatprep.subr.bf16.mxu0 0
        %728 = vmatpush2.bf16.msra.mxu0 0
        %729 = vmatprep.subr.bf16.mxu0 0
        %730 = vmatpush2.bf16.msra.mxu0 0
        %731 = vmatprep.subr.bf16.mxu0 0
        %732 = vmatpush2.bf16.msra.mxu0 0
        %733 = vmatprep.subr.bf16.mxu0 0
        %734 = vmatpush2.bf16.msra.mxu0 0
        %735 = vmatprep.subr.bf16.mxu0 0
        %736 = vmatpush2.bf16.msra.mxu0 0
        %737 = vmatprep.subr.bf16.mxu0 0
        %738 = vmatpush2.bf16.msra.mxu0 0
        %739 = vmatprep.subr.bf16.mxu0 0
        %740 = vmatpush2.bf16.msra.mxu0 0
        %741 = vmatprep.mubr.bf16.mxu0 0
        %742 = vmatmul.mubr.bf16.gmra.mxu0 %v654
        %v743 = vpop.f32.mrf.mxu0
        %v744 = vadd.f32 0.0, %v743
        %v745 = vpop.f32.mrf.mxu0
        %v746 = vadd.f32 0.0, %v745
        %v747 = vpop.f32.mrf.mxu0
        %v748 = vpop.f32.mrf.mxu0
        %749 = vdwg.mxu0
        %v750 = vadd.f32 %v632, %v703
        %v751 = vadd.f32 %v633, %v705
        %v752 = vadd.f32 %v634, %v744
        %v753 = vadd.f32 %v635, %v746
        %s754 = scalar_lea.vmem %s2, 16
        %v755 = vld [vmem:[%s754] sm:$0xf]
        %756 = vrot.lane.b32.xlu0 %v285, 117
        %v757 = vpop.permute.xlu0 %756
        %758 = vrot.lane.b32.xlu0 %v293, 117
        %v759 = vpop.permute.xlu0 %758
        %760 = vrot.lane.b32.xlu0 %v292, 117
        %v761 = vpop.permute.xlu0 %760
        %762 = vrot.lane.b32.xlu0 %v294, 117
        %v763 = vpop.permute.xlu0 %762
        %764 = vrot.lane.b32.xlu0 %v302, 117
        %v765 = vpop.permute.xlu0 %764
        %vm766 = vcmask 957440
        %v767 = vsel %vm766, %v757, %v759
        %v768 = vsel %vm766, %v759, %v761
        %v769 = vsel %vm766, %v761, %v763
        %v770 = vsel %vm766, %v763, %v765
        %v772 = vsel %vm322, %v755, 0
        %v775 = vsel %vm326, %v767, 0
        %v778 = vsel %vm326, %v768, 0
        %v781 = vsel %vm326, %v769, 0
        %v784 = vsel %vm326, %v770, 0
        %786 = vmatprep.subr.bf16.mxu0 0
        %787 = vmatpush1.bf16.msra.mxu0 0
        %788 = vmatprep.subr.bf16.mxu0 0
        %789 = vmatpush1.bf16.msra.mxu0 0
        %790 = vmatprep.subr.bf16.mxu0 0
        %791 = vmatpush1.bf16.msra.mxu0 0
        %792 = vmatprep.subr.bf16.mxu0 0
        %793 = vmatpush1.bf16.msra.mxu0 0
        %794 = vmatprep.subr.bf16.mxu0 0
        %795 = vmatpush1.bf16.msra.mxu0 0
        %796 = vmatprep.subr.bf16.mxu0 0
        %797 = vmatpush1.bf16.msra.mxu0 0
        %798 = vmatprep.subr.bf16.mxu0 0
        %799 = vmatpush1.bf16.msra.mxu0 0
        %800 = vmatprep.subr.bf16.mxu0 %v778
        %801 = vmatpush1.bf16.msra.mxu0 %v775
        %802 = vmatprep.subr.bf16.mxu0 0
        %803 = vmatpush2.bf16.msra.mxu0 0
        %804 = vmatprep.subr.bf16.mxu0 0
        %805 = vmatpush2.bf16.msra.mxu0 0
        %806 = vmatprep.subr.bf16.mxu0 0
        %807 = vmatpush2.bf16.msra.mxu0 0
        %808 = vmatprep.subr.bf16.mxu0 0
        %809 = vmatpush2.bf16.msra.mxu0 0
        %810 = vmatprep.subr.bf16.mxu0 0
        %811 = vmatpush2.bf16.msra.mxu0 0
        %812 = vmatprep.subr.bf16.mxu0 0
        %813 = vmatpush2.bf16.msra.mxu0 0
        %814 = vmatprep.subr.bf16.mxu0 0
        %815 = vmatpush2.bf16.msra.mxu0 0
        %816 = vmatprep.subr.bf16.mxu0 0
        %817 = vmatpush2.bf16.msra.mxu0 0
        %818 = vmatprep.mubr.bf16.mxu0 0
        %819 = vmatmul.mubr.bf16.gmra.mxu0 %v772
        %v820 = vpop.f32.mrf.mxu0
        %v821 = vadd.f32 0.0, %v820
        %v822 = vpop.f32.mrf.mxu0
        %v823 = vadd.f32 0.0, %v822
        %v824 = vpop.f32.mrf.mxu0
        %v825 = vpop.f32.mrf.mxu0
        %826 = vdwg.mxu0
        %827 = vmatprep.subr.bf16.mxu0 0
        %828 = vmatpush1.bf16.msra.mxu0 0
        %829 = vmatprep.subr.bf16.mxu0 0
        %830 = vmatpush1.bf16.msra.mxu0 0
        %831 = vmatprep.subr.bf16.mxu0 0
        %832 = vmatpush1.bf16.msra.mxu0 0
        %833 = vmatprep.subr.bf16.mxu0 0
        %834 = vmatpush1.bf16.msra.mxu0 0
        %835 = vmatprep.subr.bf16.mxu0 0
        %836 = vmatpush1.bf16.msra.mxu0 0
        %837 = vmatprep.subr.bf16.mxu0 0
        %838 = vmatpush1.bf16.msra.mxu0 0
        %839 = vmatprep.subr.bf16.mxu0 0
        %840 = vmatpush1.bf16.msra.mxu0 0
        %841 = vmatprep.subr.bf16.mxu0 %v784
        %842 = vmatpush1.bf16.msra.mxu0 %v781
        %843 = vmatprep.subr.bf16.mxu0 0
        %844 = vmatpush2.bf16.msra.mxu0 0
        %845 = vmatprep.subr.bf16.mxu0 0
        %846 = vmatpush2.bf16.msra.mxu0 0
        %847 = vmatprep.subr.bf16.mxu0 0
        %848 = vmatpush2.bf16.msra.mxu0 0
        %849 = vmatprep.subr.bf16.mxu0 0
        %850 = vmatpush2.bf16.msra.mxu0 0
        %851 = vmatprep.subr.bf16.mxu0 0
        %852 = vmatpush2.bf16.msra.mxu0 0
        %853 = vmatprep.subr.bf16.mxu0 0
        %854 = vmatpush2.bf16.msra.mxu0 0
        %855 = vmatprep.subr.bf16.mxu0 0
        %856 = vmatpush2.bf16.msra.mxu0 0
        %857 = vmatprep.subr.bf16.mxu0 0
        %858 = vmatpush2.bf16.msra.mxu0 0
        %859 = vmatprep.mubr.bf16.mxu0 0
        %860 = vmatmul.mubr.bf16.gmra.mxu0 %v772
        %v861 = vpop.f32.mrf.mxu0
        %v862 = vadd.f32 0.0, %v861
        %v863 = vpop.f32.mrf.mxu0
        %v864 = vadd.f32 0.0, %v863
        %v865 = vpop.f32.mrf.mxu0
        %v866 = vpop.f32.mrf.mxu0
        %867 = vdwg.mxu0
        %v868 = vadd.f32 %v750, %v821
        %v869 = vadd.f32 %v751, %v823
        %v870 = vadd.f32 %v752, %v862
        %v871 = vadd.f32 %v753, %v864
        %s872 = scalar_lea.vmem %s2, 20
        %v873 = vld [vmem:[%s872] sm:$0xf]
        %874 = vrot.lane.b32.xlu0 %v285, 116
        %v875 = vpop.permute.xlu0 %874
        %876 = vrot.lane.b32.xlu0 %v293, 116
        %v877 = vpop.permute.xlu0 %876
        %878 = vrot.lane.b32.xlu0 %v292, 116
        %v879 = vpop.permute.xlu0 %878
        %880 = vrot.lane.b32.xlu0 %v294, 116
        %v881 = vpop.permute.xlu0 %880
        %882 = vrot.lane.b32.xlu0 %v302, 116
        %v883 = vpop.permute.xlu0 %882
        %vm884 = vcmask 949248
        %v885 = vsel %vm884, %v875, %v877
        %v886 = vsel %vm884, %v877, %v879
        %v887 = vsel %vm884, %v879, %v881
        %v888 = vsel %vm884, %v881, %v883
        %v890 = vsel %vm322, %v873, 0
        %v893 = vsel %vm326, %v885, 0
        %v896 = vsel %vm326, %v886, 0
        %v899 = vsel %vm326, %v887, 0
        %v902 = vsel %vm326, %v888, 0
        %904 = vmatprep.subr.bf16.mxu0 0
        %905 = vmatpush1.bf16.msra.mxu0 0
        %906 = vmatprep.subr.bf16.mxu0 0
        %907 = vmatpush1.bf16.msra.mxu0 0
        %908 = vmatprep.subr.bf16.mxu0 0
        %909 = vmatpush1.bf16.msra.mxu0 0
        %910 = vmatprep.subr.bf16.mxu0 0
        %911 = vmatpush1.bf16.msra.mxu0 0
        %912 = vmatprep.subr.bf16.mxu0 0
        %913 = vmatpush1.bf16.msra.mxu0 0
        %914 = vmatprep.subr.bf16.mxu0 0
        %915 = vmatpush1.bf16.msra.mxu0 0
        %916 = vmatprep.subr.bf16.mxu0 0
        %917 = vmatpush1.bf16.msra.mxu0 0
        %918 = vmatprep.subr.bf16.mxu0 %v896
        %919 = vmatpush1.bf16.msra.mxu0 %v893
        %920 = vmatprep.subr.bf16.mxu0 0
        %921 = vmatpush2.bf16.msra.mxu0 0
        %922 = vmatprep.subr.bf16.mxu0 0
        %923 = vmatpush2.bf16.msra.mxu0 0
        %924 = vmatprep.subr.bf16.mxu0 0
        %925 = vmatpush2.bf16.msra.mxu0 0
        %926 = vmatprep.subr.bf16.mxu0 0
        %927 = vmatpush2.bf16.msra.mxu0 0
        %928 = vmatprep.subr.bf16.mxu0 0
        %929 = vmatpush2.bf16.msra.mxu0 0
        %930 = vmatprep.subr.bf16.mxu0 0
        %931 = vmatpush2.bf16.msra.mxu0 0
        %932 = vmatprep.subr.bf16.mxu0 0
        %933 = vmatpush2.bf16.msra.mxu0 0
        %934 = vmatprep.subr.bf16.mxu0 0
        %935 = vmatpush2.bf16.msra.mxu0 0
        %936 = vmatprep.mubr.bf16.mxu0 0
        %937 = vmatmul.mubr.bf16.gmra.mxu0 %v890
        %v938 = vpop.f32.mrf.mxu0
        %v939 = vadd.f32 0.0, %v938
        %v940 = vpop.f32.mrf.mxu0
        %v941 = vadd.f32 0.0, %v940
        %v942 = vpop.f32.mrf.mxu0
        %v943 = vpop.f32.mrf.mxu0
        %944 = vdwg.mxu0
        %945 = vmatprep.subr.bf16.mxu0 0
        %946 = vmatpush1.bf16.msra.mxu0 0
        %947 = vmatprep.subr.bf16.mxu0 0
        %948 = vmatpush1.bf16.msra.mxu0 0
        %949 = vmatprep.subr.bf16.mxu0 0
        %950 = vmatpush1.bf16.msra.mxu0 0
        %951 = vmatprep.subr.bf16.mxu0 0
        %952 = vmatpush1.bf16.msra.mxu0 0
        %953 = vmatprep.subr.bf16.mxu0 0
        %954 = vmatpush1.bf16.msra.mxu0 0
        %955 = vmatprep.subr.bf16.mxu0 0
        %956 = vmatpush1.bf16.msra.mxu0 0
        %957 = vmatprep.subr.bf16.mxu0 0
        %958 = vmatpush1.bf16.msra.mxu0 0
        %959 = vmatprep.subr.bf16.mxu0 %v902
        %960 = vmatpush1.bf16.msra.mxu0 %v899
        %961 = vmatprep.subr.bf16.mxu0 0
        %962 = vmatpush2.bf16.msra.mxu0 0
        %963 = vmatprep.subr.bf16.mxu0 0
        %964 = vmatpush2.bf16.msra.mxu0 0
        %965 = vmatprep.subr.bf16.mxu0 0
        %966 = vmatpush2.bf16.msra.mxu0 0
        %967 = vmatprep.subr.bf16.mxu0 0
        %968 = vmatpush2.bf16.msra.mxu0 0
        %969 = vmatprep.subr.bf16.mxu0 0
        %970 = vmatpush2.bf16.msra.mxu0 0
        %971 = vmatprep.subr.bf16.mxu0 0
        %972 = vmatpush2.bf16.msra.mxu0 0
        %973 = vmatprep.subr.bf16.mxu0 0
        %974 = vmatpush2.bf16.msra.mxu0 0
        %975 = vmatprep.subr.bf16.mxu0 0
        %976 = vmatpush2.bf16.msra.mxu0 0
        %977 = vmatprep.mubr.bf16.mxu0 0
        %978 = vmatmul.mubr.bf16.gmra.mxu0 %v890
        %v979 = vpop.f32.mrf.mxu0
        %v980 = vadd.f32 0.0, %v979
        %v981 = vpop.f32.mrf.mxu0
        %v982 = vadd.f32 0.0, %v981
        %v983 = vpop.f32.mrf.mxu0
        %v984 = vpop.f32.mrf.mxu0
        %985 = vdwg.mxu0
        %v986 = vadd.f32 %v868, %v939
        %v987 = vadd.f32 %v869, %v941
        %v988 = vadd.f32 %v870, %v980
        %v989 = vadd.f32 %v871, %v982
        %s990 = scalar_lea.vmem %s2, 24
        %v991 = vld [vmem:[%s990] sm:$0xf]
        %992 = vrot.lane.b32.xlu0 %v285, 108
        %v993 = vpop.permute.xlu0 %992
        %994 = vrot.lane.b32.xlu0 %v293, 108
        %v995 = vpop.permute.xlu0 %994
        %996 = vrot.lane.b32.xlu0 %v292, 108
        %v997 = vpop.permute.xlu0 %996
        %998 = vrot.lane.b32.xlu0 %v294, 108
        %v999 = vpop.permute.xlu0 %998
        %1000 = vrot.lane.b32.xlu0 %v302, 108
        %v1001 = vpop.permute.xlu0 %1000
        %vm1002 = vcmask 883712
        %v1003 = vsel %vm1002, %v993, %v995
        %v1004 = vsel %vm1002, %v995, %v997
        %v1005 = vsel %vm1002, %v997, %v999
        %v1006 = vsel %vm1002, %v999, %v1001
        %v1008 = vsel %vm322, %v991, 0
        %v1011 = vsel %vm326, %v1003, 0
        %v1014 = vsel %vm326, %v1004, 0
        %v1017 = vsel %vm326, %v1005, 0
        %v1020 = vsel %vm326, %v1006, 0
        %1022 = vmatprep.subr.bf16.mxu0 0
        %1023 = vmatpush1.bf16.msra.mxu0 0
        %1024 = vmatprep.subr.bf16.mxu0 0
        %1025 = vmatpush1.bf16.msra.mxu0 0
        %1026 = vmatprep.subr.bf16.mxu0 0
        %1027 = vmatpush1.bf16.msra.mxu0 0
        %1028 = vmatprep.subr.bf16.mxu0 0
        %1029 = vmatpush1.bf16.msra.mxu0 0
        %1030 = vmatprep.subr.bf16.mxu0 0
        %1031 = vmatpush1.bf16.msra.mxu0 0
        %1032 = vmatprep.subr.bf16.mxu0 0
        %1033 = vmatpush1.bf16.msra.mxu0 0
        %1034 = vmatprep.subr.bf16.mxu0 0
        %1035 = vmatpush1.bf16.msra.mxu0 0
        %1036 = vmatprep.subr.bf16.mxu0 %v1014
        %1037 = vmatpush1.bf16.msra.mxu0 %v1011
        %1038 = vmatprep.subr.bf16.mxu0 0
        %1039 = vmatpush2.bf16.msra.mxu0 0
        %1040 = vmatprep.subr.bf16.mxu0 0
        %1041 = vmatpush2.bf16.msra.mxu0 0
        %1042 = vmatprep.subr.bf16.mxu0 0
        %1043 = vmatpush2.bf16.msra.mxu0 0
        %1044 = vmatprep.subr.bf16.mxu0 0
        %1045 = vmatpush2.bf16.msra.mxu0 0
        %1046 = vmatprep.subr.bf16.mxu0 0
        %1047 = vmatpush2.bf16.msra.mxu0 0
        %1048 = vmatprep.subr.bf16.mxu0 0
        %1049 = vmatpush2.bf16.msra.mxu0 0
        %1050 = vmatprep.subr.bf16.mxu0 0
        %1051 = vmatpush2.bf16.msra.mxu0 0
        %1052 = vmatprep.subr.bf16.mxu0 0
        %1053 = vmatpush2.bf16.msra.mxu0 0
        %1054 = vmatprep.mubr.bf16.mxu0 0
        %1055 = vmatmul.mubr.bf16.gmra.mxu0 %v1008
        %v1056 = vpop.f32.mrf.mxu0
        %v1057 = vadd.f32 0.0, %v1056
        %v1058 = vpop.f32.mrf.mxu0
        %v1059 = vadd.f32 0.0, %v1058
        %v1060 = vpop.f32.mrf.mxu0
        %v1061 = vpop.f32.mrf.mxu0
        %1062 = vdwg.mxu0
        %1063 = vmatprep.subr.bf16.mxu0 0
        %1064 = vmatpush1.bf16.msra.mxu0 0
        %1065 = vmatprep.subr.bf16.mxu0 0
        %1066 = vmatpush1.bf16.msra.mxu0 0
        %1067 = vmatprep.subr.bf16.mxu0 0
        %1068 = vmatpush1.bf16.msra.mxu0 0
        %1069 = vmatprep.subr.bf16.mxu0 0
        %1070 = vmatpush1.bf16.msra.mxu0 0
        %1071 = vmatprep.subr.bf16.mxu0 0
        %1072 = vmatpush1.bf16.msra.mxu0 0
        %1073 = vmatprep.subr.bf16.mxu0 0
        %1074 = vmatpush1.bf16.msra.mxu0 0
        %1075 = vmatprep.subr.bf16.mxu0 0
        %1076 = vmatpush1.bf16.msra.mxu0 0
        %1077 = vmatprep.subr.bf16.mxu0 %v1020
        %1078 = vmatpush1.bf16.msra.mxu0 %v1017
        %1079 = vmatprep.subr.bf16.mxu0 0
        %1080 = vmatpush2.bf16.msra.mxu0 0
        %1081 = vmatprep.subr.bf16.mxu0 0
        %1082 = vmatpush2.bf16.msra.mxu0 0
        %1083 = vmatprep.subr.bf16.mxu0 0
        %1084 = vmatpush2.bf16.msra.mxu0 0
        %1085 = vmatprep.subr.bf16.mxu0 0
        %1086 = vmatpush2.bf16.msra.mxu0 0
        %1087 = vmatprep.subr.bf16.mxu0 0
        %1088 = vmatpush2.bf16.msra.mxu0 0
        %1089 = vmatprep.subr.bf16.mxu0 0
        %1090 = vmatpush2.bf16.msra.mxu0 0
        %1091 = vmatprep.subr.bf16.mxu0 0
        %1092 = vmatpush2.bf16.msra.mxu0 0
        %1093 = vmatprep.subr.bf16.mxu0 0
        %1094 = vmatpush2.bf16.msra.mxu0 0
        %1095 = vmatprep.mubr.bf16.mxu0 0
        %1096 = vmatmul.mubr.bf16.gmra.mxu0 %v1008
        %v1097 = vpop.f32.mrf.mxu0
        %v1098 = vadd.f32 0.0, %v1097
        %v1099 = vpop.f32.mrf.mxu0
        %v1100 = vadd.f32 0.0, %v1099
        %v1101 = vpop.f32.mrf.mxu0
        %v1102 = vpop.f32.mrf.mxu0
        %1103 = vdwg.mxu0
        %v1104 = vadd.f32 %v986, %v1057
        %v1105 = vadd.f32 %v987, %v1059
        %v1106 = vadd.f32 %v988, %v1098
        %v1107 = vadd.f32 %v989, %v1100
        %s1108 = scalar_lea.vmem %s2, 28
        %v1109 = vld [vmem:[%s1108] sm:$0xf]
        %1110 = vrot.lane.b32.xlu0 %v285, 107
        %v1111 = vpop.permute.xlu0 %1110
        %1112 = vrot.lane.b32.xlu0 %v293, 107
        %v1113 = vpop.permute.xlu0 %1112
        %1114 = vrot.lane.b32.xlu0 %v292, 107
        %v1115 = vpop.permute.xlu0 %1114
        %1116 = vrot.lane.b32.xlu0 %v294, 107
        %v1117 = vpop.permute.xlu0 %1116
        %1118 = vrot.lane.b32.xlu0 %v302, 107
        %v1119 = vpop.permute.xlu0 %1118
        %vm1120 = vcmask 875520
        %v1121 = vsel %vm1120, %v1111, %v1113
        %v1122 = vsel %vm1120, %v1113, %v1115
        %v1123 = vsel %vm1120, %v1115, %v1117
        %v1124 = vsel %vm1120, %v1117, %v1119
        %v1126 = vsel %vm322, %v1109, 0
        %v1129 = vsel %vm326, %v1121, 0
        %v1132 = vsel %vm326, %v1122, 0
        %v1135 = vsel %vm326, %v1123, 0
        %v1138 = vsel %vm326, %v1124, 0
        %1140 = vmatprep.subr.bf16.mxu0 0
        %1141 = vmatpush1.bf16.msra.mxu0 0
        %1142 = vmatprep.subr.bf16.mxu0 0
        %1143 = vmatpush1.bf16.msra.mxu0 0
        %1144 = vmatprep.subr.bf16.mxu0 0
        %1145 = vmatpush1.bf16.msra.mxu0 0
        %1146 = vmatprep.subr.bf16.mxu0 0
        %1147 = vmatpush1.bf16.msra.mxu0 0
        %1148 = vmatprep.subr.bf16.mxu0 0
        %1149 = vmatpush1.bf16.msra.mxu0 0
        %1150 = vmatprep.subr.bf16.mxu0 0
        %1151 = vmatpush1.bf16.msra.mxu0 0
        %1152 = vmatprep.subr.bf16.mxu0 0
        %1153 = vmatpush1.bf16.msra.mxu0 0
        %1154 = vmatprep.subr.bf16.mxu0 %v1132
        %1155 = vmatpush1.bf16.msra.mxu0 %v1129
        %1156 = vmatprep.subr.bf16.mxu0 0
        %1157 = vmatpush2.bf16.msra.mxu0 0
        %1158 = vmatprep.subr.bf16.mxu0 0
        %1159 = vmatpush2.bf16.msra.mxu0 0
        %1160 = vmatprep.subr.bf16.mxu0 0
        %1161 = vmatpush2.bf16.msra.mxu0 0
        %1162 = vmatprep.subr.bf16.mxu0 0
        %1163 = vmatpush2.bf16.msra.mxu0 0
        %1164 = vmatprep.subr.bf16.mxu0 0
        %1165 = vmatpush2.bf16.msra.mxu0 0
        %1166 = vmatprep.subr.bf16.mxu0 0
        %1167 = vmatpush2.bf16.msra.mxu0 0
        %1168 = vmatprep.subr.bf16.mxu0 0
        %1169 = vmatpush2.bf16.msra.mxu0 0
        %1170 = vmatprep.subr.bf16.mxu0 0
        %1171 = vmatpush2.bf16.msra.mxu0 0
        %1172 = vmatprep.mubr.bf16.mxu0 0
        %1173 = vmatmul.mubr.bf16.gmra.mxu0 %v1126
        %v1174 = vpop.f32.mrf.mxu0
        %v1175 = vadd.f32 0.0, %v1174
        %v1176 = vpop.f32.mrf.mxu0
        %v1177 = vadd.f32 0.0, %v1176
        %v1178 = vpop.f32.mrf.mxu0
        %v1179 = vpop.f32.mrf.mxu0
        %1180 = vdwg.mxu0
        %1181 = vmatprep.subr.bf16.mxu0 0
        %1182 = vmatpush1.bf16.msra.mxu0 0
        %1183 = vmatprep.subr.bf16.mxu0 0
        %1184 = vmatpush1.bf16.msra.mxu0 0
        %1185 = vmatprep.subr.bf16.mxu0 0
        %1186 = vmatpush1.bf16.msra.mxu0 0
        %1187 = vmatprep.subr.bf16.mxu0 0
        %1188 = vmatpush1.bf16.msra.mxu0 0
        %1189 = vmatprep.subr.bf16.mxu0 0
        %1190 = vmatpush1.bf16.msra.mxu0 0
        %1191 = vmatprep.subr.bf16.mxu0 0
        %1192 = vmatpush1.bf16.msra.mxu0 0
        %1193 = vmatprep.subr.bf16.mxu0 0
        %1194 = vmatpush1.bf16.msra.mxu0 0
        %1195 = vmatprep.subr.bf16.mxu0 %v1138
        %1196 = vmatpush1.bf16.msra.mxu0 %v1135
        %1197 = vmatprep.subr.bf16.mxu0 0
        %1198 = vmatpush2.bf16.msra.mxu0 0
        %1199 = vmatprep.subr.bf16.mxu0 0
        %1200 = vmatpush2.bf16.msra.mxu0 0
        %1201 = vmatprep.subr.bf16.mxu0 0
        %1202 = vmatpush2.bf16.msra.mxu0 0
        %1203 = vmatprep.subr.bf16.mxu0 0
        %1204 = vmatpush2.bf16.msra.mxu0 0
        %1205 = vmatprep.subr.bf16.mxu0 0
        %1206 = vmatpush2.bf16.msra.mxu0 0
        %1207 = vmatprep.subr.bf16.mxu0 0
        %1208 = vmatpush2.bf16.msra.mxu0 0
        %1209 = vmatprep.subr.bf16.mxu0 0
        %1210 = vmatpush2.bf16.msra.mxu0 0
        %1211 = vmatprep.subr.bf16.mxu0 0
        %1212 = vmatpush2.bf16.msra.mxu0 0
        %1213 = vmatprep.mubr.bf16.mxu0 0
        %1214 = vmatmul.mubr.bf16.gmra.mxu0 %v1126
        %v1215 = vpop.f32.mrf.mxu0
        %v1216 = vadd.f32 0.0, %v1215
        %v1217 = vpop.f32.mrf.mxu0
        %v1218 = vadd.f32 0.0, %v1217
        %v1219 = vpop.f32.mrf.mxu0
        %v1220 = vpop.f32.mrf.mxu0
        %1221 = vdwg.mxu0
        %v1222 = vadd.f32 %v1104, %v1175
        %v1223 = vadd.f32 %v1105, %v1177
        %v1224 = vadd.f32 %v1106, %v1216
        %v1225 = vadd.f32 %v1107, %v1218
        %s1226 = scalar_lea.vmem %s2, 32
        %v1227 = vld [vmem:[%s1226] sm:$0xf]
        %1228 = vrot.lane.b32.xlu0 %v285, 106
        %v1229 = vpop.permute.xlu0 %1228
        %1230 = vrot.lane.b32.xlu0 %v293, 106
        %v1231 = vpop.permute.xlu0 %1230
        %1232 = vrot.lane.b32.xlu0 %v292, 106
        %v1233 = vpop.permute.xlu0 %1232
        %1234 = vrot.lane.b32.xlu0 %v294, 106
        %v1235 = vpop.permute.xlu0 %1234
        %1236 = vrot.lane.b32.xlu0 %v302, 106
        %v1237 = vpop.permute.xlu0 %1236
        %vm1238 = vcmask 867328
        %v1239 = vsel %vm1238, %v1229, %v1231
        %v1240 = vsel %vm1238, %v1231, %v1233
        %v1241 = vsel %vm1238, %v1233, %v1235
        %v1242 = vsel %vm1238, %v1235, %v1237
        %v1244 = vsel %vm322, %v1227, 0
        %v1247 = vsel %vm326, %v1239, 0
        %v1250 = vsel %vm326, %v1240, 0
        %v1253 = vsel %vm326, %v1241, 0
        %v1256 = vsel %vm326, %v1242, 0
        %1258 = vmatprep.subr.bf16.mxu0 0
        %1259 = vmatpush1.bf16.msra.mxu0 0
        %1260 = vmatprep.subr.bf16.mxu0 0
        %1261 = vmatpush1.bf16.msra.mxu0 0
        %1262 = vmatprep.subr.bf16.mxu0 0
        %1263 = vmatpush1.bf16.msra.mxu0 0
        %1264 = vmatprep.subr.bf16.mxu0 0
        %1265 = vmatpush1.bf16.msra.mxu0 0
        %1266 = vmatprep.subr.bf16.mxu0 0
        %1267 = vmatpush1.bf16.msra.mxu0 0
        %1268 = vmatprep.subr.bf16.mxu0 0
        %1269 = vmatpush1.bf16.msra.mxu0 0
        %1270 = vmatprep.subr.bf16.mxu0 0
        %1271 = vmatpush1.bf16.msra.mxu0 0
        %1272 = vmatprep.subr.bf16.mxu0 %v1250
        %1273 = vmatpush1.bf16.msra.mxu0 %v1247
        %1274 = vmatprep.subr.bf16.mxu0 0
        %1275 = vmatpush2.bf16.msra.mxu0 0
        %1276 = vmatprep.subr.bf16.mxu0 0
        %1277 = vmatpush2.bf16.msra.mxu0 0
        %1278 = vmatprep.subr.bf16.mxu0 0
        %1279 = vmatpush2.bf16.msra.mxu0 0
        %1280 = vmatprep.subr.bf16.mxu0 0
        %1281 = vmatpush2.bf16.msra.mxu0 0
        %1282 = vmatprep.subr.bf16.mxu0 0
        %1283 = vmatpush2.bf16.msra.mxu0 0
        %1284 = vmatprep.subr.bf16.mxu0 0
        %1285 = vmatpush2.bf16.msra.mxu0 0
        %1286 = vmatprep.subr.bf16.mxu0 0
        %1287 = vmatpush2.bf16.msra.mxu0 0
        %1288 = vmatprep.subr.bf16.mxu0 0
        %1289 = vmatpush2.bf16.msra.mxu0 0
        %1290 = vmatprep.mubr.bf16.mxu0 0
        %1291 = vmatmul.mubr.bf16.gmra.mxu0 %v1244
        %v1292 = vpop.f32.mrf.mxu0
        %v1293 = vadd.f32 0.0, %v1292
        %v1294 = vpop.f32.mrf.mxu0
        %v1295 = vadd.f32 0.0, %v1294
        %v1296 = vpop.f32.mrf.mxu0
        %v1297 = vpop.f32.mrf.mxu0
        %1298 = vdwg.mxu0
        %1299 = vmatprep.subr.bf16.mxu0 0
        %1300 = vmatpush1.bf16.msra.mxu0 0
        %1301 = vmatprep.subr.bf16.mxu0 0
        %1302 = vmatpush1.bf16.msra.mxu0 0
        %1303 = vmatprep.subr.bf16.mxu0 0
        %1304 = vmatpush1.bf16.msra.mxu0 0
        %1305 = vmatprep.subr.bf16.mxu0 0
        %1306 = vmatpush1.bf16.msra.mxu0 0
        %1307 = vmatprep.subr.bf16.mxu0 0
        %1308 = vmatpush1.bf16.msra.mxu0 0
        %1309 = vmatprep.subr.bf16.mxu0 0
        %1310 = vmatpush1.bf16.msra.mxu0 0
        %1311 = vmatprep.subr.bf16.mxu0 0
        %1312 = vmatpush1.bf16.msra.mxu0 0
        %1313 = vmatprep.subr.bf16.mxu0 %v1256
        %1314 = vmatpush1.bf16.msra.mxu0 %v1253
        %1315 = vmatprep.subr.bf16.mxu0 0
        %1316 = vmatpush2.bf16.msra.mxu0 0
        %1317 = vmatprep.subr.bf16.mxu0 0
        %1318 = vmatpush2.bf16.msra.mxu0 0
        %1319 = vmatprep.subr.bf16.mxu0 0
        %1320 = vmatpush2.bf16.msra.mxu0 0
        %1321 = vmatprep.subr.bf16.mxu0 0
        %1322 = vmatpush2.bf16.msra.mxu0 0
        %1323 = vmatprep.subr.bf16.mxu0 0
        %1324 = vmatpush2.bf16.msra.mxu0 0
        %1325 = vmatprep.subr.bf16.mxu0 0
        %1326 = vmatpush2.bf16.msra.mxu0 0
        %1327 = vmatprep.subr.bf16.mxu0 0
        %1328 = vmatpush2.bf16.msra.mxu0 0
        %1329 = vmatprep.subr.bf16.mxu0 0
        %1330 = vmatpush2.bf16.msra.mxu0 0
        %1331 = vmatprep.mubr.bf16.mxu0 0
        %1332 = vmatmul.mubr.bf16.gmra.mxu0 %v1244
        %v1333 = vpop.f32.mrf.mxu0
        %v1334 = vadd.f32 0.0, %v1333
        %v1335 = vpop.f32.mrf.mxu0
        %v1336 = vadd.f32 0.0, %v1335
        %v1337 = vpop.f32.mrf.mxu0
        %v1338 = vpop.f32.mrf.mxu0
        %1339 = vdwg.mxu0
        %v1340 = vadd.f32 %v1222, %v1293
        %v1341 = vadd.f32 %v1223, %v1295
        %v1342 = vadd.f32 %v1224, %v1334
        %v1343 = vadd.f32 %v1225, %v1336
        %s1344 = scalar_lea.vmem %s2, 36
        %v1345 = vld [vmem:[%s1344] sm:$0xf]
        %1346 = vrot.lane.b32.xlu0 %v285, 28
        %v1347 = vpop.permute.xlu0 %1346
        %1348 = vrot.lane.b32.xlu0 %v293, 28
        %v1349 = vpop.permute.xlu0 %1348
        %1350 = vrot.lane.b32.xlu0 %v292, 28
        %v1351 = vpop.permute.xlu0 %1350
        %1352 = vrot.lane.b32.xlu0 %v294, 28
        %v1353 = vpop.permute.xlu0 %1352
        %1354 = vrot.lane.b32.xlu0 %v302, 28
        %v1355 = vpop.permute.xlu0 %1354
        %vm1356 = vcmask 228352
        %v1357 = vsel %vm1356, %v1347, %v1349
        %v1358 = vsel %vm1356, %v1349, %v1351
        %v1359 = vsel %vm1356, %v1351, %v1353
        %v1360 = vsel %vm1356, %v1353, %v1355
        %v1362 = vsel %vm322, %v1345, 0
        %v1365 = vsel %vm326, %v1357, 0
        %v1368 = vsel %vm326, %v1358, 0
        %v1371 = vsel %vm326, %v1359, 0
        %v1374 = vsel %vm326, %v1360, 0
        %1376 = vmatprep.subr.bf16.mxu0 0
        %1377 = vmatpush1.bf16.msra.mxu0 0
        %1378 = vmatprep.subr.bf16.mxu0 0
        %1379 = vmatpush1.bf16.msra.mxu0 0
        %1380 = vmatprep.subr.bf16.mxu0 0
        %1381 = vmatpush1.bf16.msra.mxu0 0
        %1382 = vmatprep.subr.bf16.mxu0 0
        %1383 = vmatpush1.bf16.msra.mxu0 0
        %1384 = vmatprep.subr.bf16.mxu0 0
        %1385 = vmatpush1.bf16.msra.mxu0 0
        %1386 = vmatprep.subr.bf16.mxu0 0
        %1387 = vmatpush1.bf16.msra.mxu0 0
        %1388 = vmatprep.subr.bf16.mxu0 0
        %1389 = vmatpush1.bf16.msra.mxu0 0
        %1390 = vmatprep.subr.bf16.mxu0 %v1368
        %1391 = vmatpush1.bf16.msra.mxu0 %v1365
        %1392 = vmatprep.subr.bf16.mxu0 0
        %1393 = vmatpush2.bf16.msra.mxu0 0
        %1394 = vmatprep.subr.bf16.mxu0 0
        %1395 = vmatpush2.bf16.msra.mxu0 0
        %1396 = vmatprep.subr.bf16.mxu0 0
        %1397 = vmatpush2.bf16.msra.mxu0 0
        %1398 = vmatprep.subr.bf16.mxu0 0
        %1399 = vmatpush2.bf16.msra.mxu0 0
        %1400 = vmatprep.subr.bf16.mxu0 0
        %1401 = vmatpush2.bf16.msra.mxu0 0
        %1402 = vmatprep.subr.bf16.mxu0 0
        %1403 = vmatpush2.bf16.msra.mxu0 0
        %1404 = vmatprep.subr.bf16.mxu0 0
        %1405 = vmatpush2.bf16.msra.mxu0 0
        %1406 = vmatprep.subr.bf16.mxu0 0
        %1407 = vmatpush2.bf16.msra.mxu0 0
        %1408 = vmatprep.mubr.bf16.mxu0 0
        %1409 = vmatmul.mubr.bf16.gmra.mxu0 %v1362
        %v1410 = vpop.f32.mrf.mxu0
        %v1411 = vadd.f32 0.0, %v1410
        %v1412 = vpop.f32.mrf.mxu0
        %v1413 = vadd.f32 0.0, %v1412
        %v1414 = vpop.f32.mrf.mxu0
        %v1415 = vpop.f32.mrf.mxu0
        %1416 = vdwg.mxu0
        %1417 = vmatprep.subr.bf16.mxu0 0
        %1418 = vmatpush1.bf16.msra.mxu0 0
        %1419 = vmatprep.subr.bf16.mxu0 0
        %1420 = vmatpush1.bf16.msra.mxu0 0
        %1421 = vmatprep.subr.bf16.mxu0 0
        %1422 = vmatpush1.bf16.msra.mxu0 0
        %1423 = vmatprep.subr.bf16.mxu0 0
        %1424 = vmatpush1.bf16.msra.mxu0 0
        %1425 = vmatprep.subr.bf16.mxu0 0
        %1426 = vmatpush1.bf16.msra.mxu0 0
        %1427 = vmatprep.subr.bf16.mxu0 0
        %1428 = vmatpush1.bf16.msra.mxu0 0
        %1429 = vmatprep.subr.bf16.mxu0 0
        %1430 = vmatpush1.bf16.msra.mxu0 0
        %1431 = vmatprep.subr.bf16.mxu0 %v1374
        %1432 = vmatpush1.bf16.msra.mxu0 %v1371
        %1433 = vmatprep.subr.bf16.mxu0 0
        %1434 = vmatpush2.bf16.msra.mxu0 0
        %1435 = vmatprep.subr.bf16.mxu0 0
        %1436 = vmatpush2.bf16.msra.mxu0 0
        %1437 = vmatprep.subr.bf16.mxu0 0
        %1438 = vmatpush2.bf16.msra.mxu0 0
        %1439 = vmatprep.subr.bf16.mxu0 0
        %1440 = vmatpush2.bf16.msra.mxu0 0
        %1441 = vmatprep.subr.bf16.mxu0 0
        %1442 = vmatpush2.bf16.msra.mxu0 0
        %1443 = vmatprep.subr.bf16.mxu0 0
        %1444 = vmatpush2.bf16.msra.mxu0 0
        %1445 = vmatprep.subr.bf16.mxu0 0
        %1446 = vmatpush2.bf16.msra.mxu0 0
        %1447 = vmatprep.subr.bf16.mxu0 0
        %1448 = vmatpush2.bf16.msra.mxu0 0
        %1449 = vmatprep.mubr.bf16.mxu0 0
        %1450 = vmatmul.mubr.bf16.gmra.mxu0 %v1362
        %v1451 = vpop.f32.mrf.mxu0
        %v1452 = vadd.f32 0.0, %v1451
        %v1453 = vpop.f32.mrf.mxu0
        %v1454 = vadd.f32 0.0, %v1453
        %v1455 = vpop.f32.mrf.mxu0
        %v1456 = vpop.f32.mrf.mxu0
        %1457 = vdwg.mxu0
        %v1458 = vadd.f32 %v1340, %v1411
        %v1459 = vadd.f32 %v1341, %v1413
        %v1460 = vadd.f32 %v1342, %v1452
        %v1461 = vadd.f32 %v1343, %v1454
        %s1462 = scalar_lea.vmem %s2, 40
        %v1463 = vld [vmem:[%s1462] sm:$0xf]
        %1464 = vrot.lane.b32.xlu0 %v285, 27
        %v1465 = vpop.permute.xlu0 %1464
        %1466 = vrot.lane.b32.xlu0 %v293, 27
        %v1467 = vpop.permute.xlu0 %1466
        %1468 = vrot.lane.b32.xlu0 %v292, 27
        %v1469 = vpop.permute.xlu0 %1468
        %1470 = vrot.lane.b32.xlu0 %v294, 27
        %v1471 = vpop.permute.xlu0 %1470
        %1472 = vrot.lane.b32.xlu0 %v302, 27
        %v1473 = vpop.permute.xlu0 %1472
        %vm1474 = vcmask 220160
        %v1475 = vsel %vm1474, %v1465, %v1467
        %v1476 = vsel %vm1474, %v1467, %v1469
        %v1477 = vsel %vm1474, %v1469, %v1471
        %v1478 = vsel %vm1474, %v1471, %v1473
        %v1480 = vsel %vm322, %v1463, 0
        %v1483 = vsel %vm326, %v1475, 0
        %v1486 = vsel %vm326, %v1476, 0
        %v1489 = vsel %vm326, %v1477, 0
        %v1492 = vsel %vm326, %v1478, 0
        %1494 = vmatprep.subr.bf16.mxu0 0
        %1495 = vmatpush1.bf16.msra.mxu0 0
        %1496 = vmatprep.subr.bf16.mxu0 0
        %1497 = vmatpush1.bf16.msra.mxu0 0
        %1498 = vmatprep.subr.bf16.mxu0 0
        %1499 = vmatpush1.bf16.msra.mxu0 0
        %1500 = vmatprep.subr.bf16.mxu0 0
        %1501 = vmatpush1.bf16.msra.mxu0 0
        %1502 = vmatprep.subr.bf16.mxu0 0
        %1503 = vmatpush1.bf16.msra.mxu0 0
        %1504 = vmatprep.subr.bf16.mxu0 0
        %1505 = vmatpush1.bf16.msra.mxu0 0
        %1506 = vmatprep.subr.bf16.mxu0 0
        %1507 = vmatpush1.bf16.msra.mxu0 0
        %1508 = vmatprep.subr.bf16.mxu0 %v1486
        %1509 = vmatpush1.bf16.msra.mxu0 %v1483
        %1510 = vmatprep.subr.bf16.mxu0 0
        %1511 = vmatpush2.bf16.msra.mxu0 0
        %1512 = vmatprep.subr.bf16.mxu0 0
        %1513 = vmatpush2.bf16.msra.mxu0 0
        %1514 = vmatprep.subr.bf16.mxu0 0
        %1515 = vmatpush2.bf16.msra.mxu0 0
        %1516 = vmatprep.subr.bf16.mxu0 0
        %1517 = vmatpush2.bf16.msra.mxu0 0
        %1518 = vmatprep.subr.bf16.mxu0 0
        %1519 = vmatpush2.bf16.msra.mxu0 0
        %1520 = vmatprep.subr.bf16.mxu0 0
        %1521 = vmatpush2.bf16.msra.mxu0 0
        %1522 = vmatprep.subr.bf16.mxu0 0
        %1523 = vmatpush2.bf16.msra.mxu0 0
        %1524 = vmatprep.subr.bf16.mxu0 0
        %1525 = vmatpush2.bf16.msra.mxu0 0
        %1526 = vmatprep.mubr.bf16.mxu0 0
        %1527 = vmatmul.mubr.bf16.gmra.mxu0 %v1480
        %v1528 = vpop.f32.mrf.mxu0
        %v1529 = vadd.f32 0.0, %v1528
        %v1530 = vpop.f32.mrf.mxu0
        %v1531 = vadd.f32 0.0, %v1530
        %v1532 = vpop.f32.mrf.mxu0
        %v1533 = vpop.f32.mrf.mxu0
        %1534 = vdwg.mxu0
        %1535 = vmatprep.subr.bf16.mxu0 0
        %1536 = vmatpush1.bf16.msra.mxu0 0
        %1537 = vmatprep.subr.bf16.mxu0 0
        %1538 = vmatpush1.bf16.msra.mxu0 0
        %1539 = vmatprep.subr.bf16.mxu0 0
        %1540 = vmatpush1.bf16.msra.mxu0 0
        %1541 = vmatprep.subr.bf16.mxu0 0
        %1542 = vmatpush1.bf16.msra.mxu0 0
        %1543 = vmatprep.subr.bf16.mxu0 0
        %1544 = vmatpush1.bf16.msra.mxu0 0
        %1545 = vmatprep.subr.bf16.mxu0 0
        %1546 = vmatpush1.bf16.msra.mxu0 0
        %1547 = vmatprep.subr.bf16.mxu0 0
        %1548 = vmatpush1.bf16.msra.mxu0 0
        %1549 = vmatprep.subr.bf16.mxu0 %v1492
        %1550 = vmatpush1.bf16.msra.mxu0 %v1489
        %1551 = vmatprep.subr.bf16.mxu0 0
        %1552 = vmatpush2.bf16.msra.mxu0 0
        %1553 = vmatprep.subr.bf16.mxu0 0
        %1554 = vmatpush2.bf16.msra.mxu0 0
        %1555 = vmatprep.subr.bf16.mxu0 0
        %1556 = vmatpush2.bf16.msra.mxu0 0
        %1557 = vmatprep.subr.bf16.mxu0 0
        %1558 = vmatpush2.bf16.msra.mxu0 0
        %1559 = vmatprep.subr.bf16.mxu0 0
        %1560 = vmatpush2.bf16.msra.mxu0 0
        %1561 = vmatprep.subr.bf16.mxu0 0
        %1562 = vmatpush2.bf16.msra.mxu0 0
        %1563 = vmatprep.subr.bf16.mxu0 0
        %1564 = vmatpush2.bf16.msra.mxu0 0
        %1565 = vmatprep.subr.bf16.mxu0 0
        %1566 = vmatpush2.bf16.msra.mxu0 0
        %1567 = vmatprep.mubr.bf16.mxu0 0
        %1568 = vmatmul.mubr.bf16.gmra.mxu0 %v1480
        %v1569 = vpop.f32.mrf.mxu0
        %v1570 = vadd.f32 0.0, %v1569
        %v1571 = vpop.f32.mrf.mxu0
        %v1572 = vadd.f32 0.0, %v1571
        %v1573 = vpop.f32.mrf.mxu0
        %v1574 = vpop.f32.mrf.mxu0
        %1575 = vdwg.mxu0
        %v1576 = vadd.f32 %v1458, %v1529
        %v1577 = vadd.f32 %v1459, %v1531
        %v1578 = vadd.f32 %v1460, %v1570
        %v1579 = vadd.f32 %v1461, %v1572
        %s1580 = scalar_lea.vmem %s2, 44
        %v1581 = vld [vmem:[%s1580] sm:$0xf]
        %1582 = vrot.lane.b32.xlu0 %v285, 26
        %v1583 = vpop.permute.xlu0 %1582
        %1584 = vrot.lane.b32.xlu0 %v293, 26
        %v1585 = vpop.permute.xlu0 %1584
        %1586 = vrot.lane.b32.xlu0 %v292, 26
        %v1587 = vpop.permute.xlu0 %1586
        %1588 = vrot.lane.b32.xlu0 %v294, 26
        %v1589 = vpop.permute.xlu0 %1588
        %1590 = vrot.lane.b32.xlu0 %v302, 26
        %v1591 = vpop.permute.xlu0 %1590
        %vm1592 = vcmask 211968
        %v1593 = vsel %vm1592, %v1583, %v1585
        %v1594 = vsel %vm1592, %v1585, %v1587
        %v1595 = vsel %vm1592, %v1587, %v1589
        %v1596 = vsel %vm1592, %v1589, %v1591
        %v1598 = vsel %vm322, %v1581, 0
        %v1601 = vsel %vm326, %v1593, 0
        %v1604 = vsel %vm326, %v1594, 0
        %v1607 = vsel %vm326, %v1595, 0
        %v1610 = vsel %vm326, %v1596, 0
        %1612 = vmatprep.subr.bf16.mxu0 0
        %1613 = vmatpush1.bf16.msra.mxu0 0
        %1614 = vmatprep.subr.bf16.mxu0 0
        %1615 = vmatpush1.bf16.msra.mxu0 0
        %1616 = vmatprep.subr.bf16.mxu0 0
        %1617 = vmatpush1.bf16.msra.mxu0 0
        %1618 = vmatprep.subr.bf16.mxu0 0
        %1619 = vmatpush1.bf16.msra.mxu0 0
        %1620 = vmatprep.subr.bf16.mxu0 0
        %1621 = vmatpush1.bf16.msra.mxu0 0
        %1622 = vmatprep.subr.bf16.mxu0 0
        %1623 = vmatpush1.bf16.msra.mxu0 0
        %1624 = vmatprep.subr.bf16.mxu0 0
        %1625 = vmatpush1.bf16.msra.mxu0 0
        %1626 = vmatprep.subr.bf16.mxu0 %v1604
        %1627 = vmatpush1.bf16.msra.mxu0 %v1601
        %1628 = vmatprep.subr.bf16.mxu0 0
        %1629 = vmatpush2.bf16.msra.mxu0 0
        %1630 = vmatprep.subr.bf16.mxu0 0
        %1631 = vmatpush2.bf16.msra.mxu0 0
        %1632 = vmatprep.subr.bf16.mxu0 0
        %1633 = vmatpush2.bf16.msra.mxu0 0
        %1634 = vmatprep.subr.bf16.mxu0 0
        %1635 = vmatpush2.bf16.msra.mxu0 0
        %1636 = vmatprep.subr.bf16.mxu0 0
        %1637 = vmatpush2.bf16.msra.mxu0 0
        %1638 = vmatprep.subr.bf16.mxu0 0
        %1639 = vmatpush2.bf16.msra.mxu0 0
        %1640 = vmatprep.subr.bf16.mxu0 0
        %1641 = vmatpush2.bf16.msra.mxu0 0
        %1642 = vmatprep.subr.bf16.mxu0 0
        %1643 = vmatpush2.bf16.msra.mxu0 0
        %1644 = vmatprep.mubr.bf16.mxu0 0
        %1645 = vmatmul.mubr.bf16.gmra.mxu0 %v1598
        %v1646 = vpop.f32.mrf.mxu0
        %v1647 = vadd.f32 0.0, %v1646
        %v1648 = vpop.f32.mrf.mxu0
        %v1649 = vadd.f32 0.0, %v1648
        %v1650 = vpop.f32.mrf.mxu0
        %v1651 = vpop.f32.mrf.mxu0
        %1652 = vdwg.mxu0
        %1653 = vmatprep.subr.bf16.mxu0 0
        %1654 = vmatpush1.bf16.msra.mxu0 0
        %1655 = vmatprep.subr.bf16.mxu0 0
        %1656 = vmatpush1.bf16.msra.mxu0 0
        %1657 = vmatprep.subr.bf16.mxu0 0
        %1658 = vmatpush1.bf16.msra.mxu0 0
        %1659 = vmatprep.subr.bf16.mxu0 0
        %1660 = vmatpush1.bf16.msra.mxu0 0
        %1661 = vmatprep.subr.bf16.mxu0 0
        %1662 = vmatpush1.bf16.msra.mxu0 0
        %1663 = vmatprep.subr.bf16.mxu0 0
        %1664 = vmatpush1.bf16.msra.mxu0 0
        %1665 = vmatprep.subr.bf16.mxu0 0
        %1666 = vmatpush1.bf16.msra.mxu0 0
        %1667 = vmatprep.subr.bf16.mxu0 %v1610
        %1668 = vmatpush1.bf16.msra.mxu0 %v1607
        %1669 = vmatprep.subr.bf16.mxu0 0
        %1670 = vmatpush2.bf16.msra.mxu0 0
        %1671 = vmatprep.subr.bf16.mxu0 0
        %1672 = vmatpush2.bf16.msra.mxu0 0
        %1673 = vmatprep.subr.bf16.mxu0 0
        %1674 = vmatpush2.bf16.msra.mxu0 0
        %1675 = vmatprep.subr.bf16.mxu0 0
        %1676 = vmatpush2.bf16.msra.mxu0 0
        %1677 = vmatprep.subr.bf16.mxu0 0
        %1678 = vmatpush2.bf16.msra.mxu0 0
        %1679 = vmatprep.subr.bf16.mxu0 0
        %1680 = vmatpush2.bf16.msra.mxu0 0
        %1681 = vmatprep.subr.bf16.mxu0 0
        %1682 = vmatpush2.bf16.msra.mxu0 0
        %1683 = vmatprep.subr.bf16.mxu0 0
        %1684 = vmatpush2.bf16.msra.mxu0 0
        %1685 = vmatprep.mubr.bf16.mxu0 0
        %1686 = vmatmul.mubr.bf16.gmra.mxu0 %v1598
        %v1687 = vpop.f32.mrf.mxu0
        %v1688 = vadd.f32 0.0, %v1687
        %v1689 = vpop.f32.mrf.mxu0
        %v1690 = vadd.f32 0.0, %v1689
        %v1691 = vpop.f32.mrf.mxu0
        %v1692 = vpop.f32.mrf.mxu0
        %1693 = vdwg.mxu0
        %v1694 = vadd.f32 %v1576, %v1647
        %v1695 = vadd.f32 %v1577, %v1649
        %v1696 = vadd.f32 %v1578, %v1688
        %v1697 = vadd.f32 %v1579, %v1690
        %s1698 = scalar_lea.vmem %s2, 48
        %v1699 = vld [vmem:[%s1698] sm:$0xf]
        %1700 = vrot.lane.b32.xlu0 %v285, 18
        %v1701 = vpop.permute.xlu0 %1700
        %1702 = vrot.lane.b32.xlu0 %v293, 18
        %v1703 = vpop.permute.xlu0 %1702
        %1704 = vrot.lane.b32.xlu0 %v292, 18
        %v1705 = vpop.permute.xlu0 %1704
        %1706 = vrot.lane.b32.xlu0 %v294, 18
        %v1707 = vpop.permute.xlu0 %1706
        %1708 = vrot.lane.b32.xlu0 %v302, 18
        %v1709 = vpop.permute.xlu0 %1708
        %vm1710 = vcmask 146432
        %v1711 = vsel %vm1710, %v1701, %v1703
        %v1712 = vsel %vm1710, %v1703, %v1705
        %v1713 = vsel %vm1710, %v1705, %v1707
        %v1714 = vsel %vm1710, %v1707, %v1709
        %v1716 = vsel %vm322, %v1699, 0
        %v1719 = vsel %vm326, %v1711, 0
        %v1722 = vsel %vm326, %v1712, 0
        %v1725 = vsel %vm326, %v1713, 0
        %v1728 = vsel %vm326, %v1714, 0
        %1730 = vmatprep.subr.bf16.mxu0 0
        %1731 = vmatpush1.bf16.msra.mxu0 0
        %1732 = vmatprep.subr.bf16.mxu0 0
        %1733 = vmatpush1.bf16.msra.mxu0 0
        %1734 = vmatprep.subr.bf16.mxu0 0
        %1735 = vmatpush1.bf16.msra.mxu0 0
        %1736 = vmatprep.subr.bf16.mxu0 0
        %1737 = vmatpush1.bf16.msra.mxu0 0
        %1738 = vmatprep.subr.bf16.mxu0 0
        %1739 = vmatpush1.bf16.msra.mxu0 0
        %1740 = vmatprep.subr.bf16.mxu0 0
        %1741 = vmatpush1.bf16.msra.mxu0 0
        %1742 = vmatprep.subr.bf16.mxu0 0
        %1743 = vmatpush1.bf16.msra.mxu0 0
        %1744 = vmatprep.subr.bf16.mxu0 %v1722
        %1745 = vmatpush1.bf16.msra.mxu0 %v1719
        %1746 = vmatprep.subr.bf16.mxu0 0
        %1747 = vmatpush2.bf16.msra.mxu0 0
        %1748 = vmatprep.subr.bf16.mxu0 0
        %1749 = vmatpush2.bf16.msra.mxu0 0
        %1750 = vmatprep.subr.bf16.mxu0 0
        %1751 = vmatpush2.bf16.msra.mxu0 0
        %1752 = vmatprep.subr.bf16.mxu0 0
        %1753 = vmatpush2.bf16.msra.mxu0 0
        %1754 = vmatprep.subr.bf16.mxu0 0
        %1755 = vmatpush2.bf16.msra.mxu0 0
        %1756 = vmatprep.subr.bf16.mxu0 0
        %1757 = vmatpush2.bf16.msra.mxu0 0
        %1758 = vmatprep.subr.bf16.mxu0 0
        %1759 = vmatpush2.bf16.msra.mxu0 0
        %1760 = vmatprep.subr.bf16.mxu0 0
        %1761 = vmatpush2.bf16.msra.mxu0 0
        %1762 = vmatprep.mubr.bf16.mxu0 0
        %1763 = vmatmul.mubr.bf16.gmra.mxu0 %v1716
        %v1764 = vpop.f32.mrf.mxu0
        %v1765 = vadd.f32 0.0, %v1764
        %v1766 = vpop.f32.mrf.mxu0
        %v1767 = vadd.f32 0.0, %v1766
        %v1768 = vpop.f32.mrf.mxu0
        %v1769 = vpop.f32.mrf.mxu0
        %1770 = vdwg.mxu0
        %1771 = vmatprep.subr.bf16.mxu0 0
        %1772 = vmatpush1.bf16.msra.mxu0 0
        %1773 = vmatprep.subr.bf16.mxu0 0
        %1774 = vmatpush1.bf16.msra.mxu0 0
        %1775 = vmatprep.subr.bf16.mxu0 0
        %1776 = vmatpush1.bf16.msra.mxu0 0
        %1777 = vmatprep.subr.bf16.mxu0 0
        %1778 = vmatpush1.bf16.msra.mxu0 0
        %1779 = vmatprep.subr.bf16.mxu0 0
        %1780 = vmatpush1.bf16.msra.mxu0 0
        %1781 = vmatprep.subr.bf16.mxu0 0
        %1782 = vmatpush1.bf16.msra.mxu0 0
        %1783 = vmatprep.subr.bf16.mxu0 0
        %1784 = vmatpush1.bf16.msra.mxu0 0
        %1785 = vmatprep.subr.bf16.mxu0 %v1728
        %1786 = vmatpush1.bf16.msra.mxu0 %v1725
        %1787 = vmatprep.subr.bf16.mxu0 0
        %1788 = vmatpush2.bf16.msra.mxu0 0
        %1789 = vmatprep.subr.bf16.mxu0 0
        %1790 = vmatpush2.bf16.msra.mxu0 0
        %1791 = vmatprep.subr.bf16.mxu0 0
        %1792 = vmatpush2.bf16.msra.mxu0 0
        %1793 = vmatprep.subr.bf16.mxu0 0
        %1794 = vmatpush2.bf16.msra.mxu0 0
        %1795 = vmatprep.subr.bf16.mxu0 0
        %1796 = vmatpush2.bf16.msra.mxu0 0
        %1797 = vmatprep.subr.bf16.mxu0 0
        %1798 = vmatpush2.bf16.msra.mxu0 0
        %1799 = vmatprep.subr.bf16.mxu0 0
        %1800 = vmatpush2.bf16.msra.mxu0 0
        %1801 = vmatprep.subr.bf16.mxu0 0
        %1802 = vmatpush2.bf16.msra.mxu0 0
        %1803 = vmatprep.mubr.bf16.mxu0 0
        %1804 = vmatmul.mubr.bf16.gmra.mxu0 %v1716
        %v1805 = vpop.f32.mrf.mxu0
        %v1806 = vadd.f32 0.0, %v1805
        %v1807 = vpop.f32.mrf.mxu0
        %v1808 = vadd.f32 0.0, %v1807
        %v1809 = vpop.f32.mrf.mxu0
        %v1810 = vpop.f32.mrf.mxu0
        %1811 = vdwg.mxu0
        %v1812 = vadd.f32 %v1694, %v1765
        %v1813 = vadd.f32 %v1695, %v1767
        %v1814 = vadd.f32 %v1696, %v1806
        %v1815 = vadd.f32 %v1697, %v1808
        %s1816 = scalar_lea.vmem %s2, 52
        %v1817 = vld [vmem:[%s1816] sm:$0xf]
        %1818 = vrot.lane.b32.xlu0 %v285, 17
        %v1819 = vpop.permute.xlu0 %1818
        %1820 = vrot.lane.b32.xlu0 %v293, 17
        %v1821 = vpop.permute.xlu0 %1820
        %1822 = vrot.lane.b32.xlu0 %v292, 17
        %v1823 = vpop.permute.xlu0 %1822
        %1824 = vrot.lane.b32.xlu0 %v294, 17
        %v1825 = vpop.permute.xlu0 %1824
        %1826 = vrot.lane.b32.xlu0 %v302, 17
        %v1827 = vpop.permute.xlu0 %1826
        %vm1828 = vcmask 138240
        %v1829 = vsel %vm1828, %v1819, %v1821
        %v1830 = vsel %vm1828, %v1821, %v1823
        %v1831 = vsel %vm1828, %v1823, %v1825
        %v1832 = vsel %vm1828, %v1825, %v1827
        %v1834 = vsel %vm322, %v1817, 0
        %v1837 = vsel %vm326, %v1829, 0
        %v1840 = vsel %vm326, %v1830, 0
        %v1843 = vsel %vm326, %v1831, 0
        %v1846 = vsel %vm326, %v1832, 0
        %1848 = vmatprep.subr.bf16.mxu0 0
        %1849 = vmatpush1.bf16.msra.mxu0 0
        %1850 = vmatprep.subr.bf16.mxu0 0
        %1851 = vmatpush1.bf16.msra.mxu0 0
        %1852 = vmatprep.subr.bf16.mxu0 0
        %1853 = vmatpush1.bf16.msra.mxu0 0
        %1854 = vmatprep.subr.bf16.mxu0 0
        %1855 = vmatpush1.bf16.msra.mxu0 0
        %1856 = vmatprep.subr.bf16.mxu0 0
        %1857 = vmatpush1.bf16.msra.mxu0 0
        %1858 = vmatprep.subr.bf16.mxu0 0
        %1859 = vmatpush1.bf16.msra.mxu0 0
        %1860 = vmatprep.subr.bf16.mxu0 0
        %1861 = vmatpush1.bf16.msra.mxu0 0
        %1862 = vmatprep.subr.bf16.mxu0 %v1840
        %1863 = vmatpush1.bf16.msra.mxu0 %v1837
        %1864 = vmatprep.subr.bf16.mxu0 0
        %1865 = vmatpush2.bf16.msra.mxu0 0
        %1866 = vmatprep.subr.bf16.mxu0 0
        %1867 = vmatpush2.bf16.msra.mxu0 0
        %1868 = vmatprep.subr.bf16.mxu0 0
        %1869 = vmatpush2.bf16.msra.mxu0 0
        %1870 = vmatprep.subr.bf16.mxu0 0
        %1871 = vmatpush2.bf16.msra.mxu0 0
        %1872 = vmatprep.subr.bf16.mxu0 0
        %1873 = vmatpush2.bf16.msra.mxu0 0
        %1874 = vmatprep.subr.bf16.mxu0 0
        %1875 = vmatpush2.bf16.msra.mxu0 0
        %1876 = vmatprep.subr.bf16.mxu0 0
        %1877 = vmatpush2.bf16.msra.mxu0 0
        %1878 = vmatprep.subr.bf16.mxu0 0
        %1879 = vmatpush2.bf16.msra.mxu0 0
        %1880 = vmatprep.mubr.bf16.mxu0 0
        %1881 = vmatmul.mubr.bf16.gmra.mxu0 %v1834
        %v1882 = vpop.f32.mrf.mxu0
        %v1883 = vadd.f32 0.0, %v1882
        %v1884 = vpop.f32.mrf.mxu0
        %v1885 = vadd.f32 0.0, %v1884
        %v1886 = vpop.f32.mrf.mxu0
        %v1887 = vpop.f32.mrf.mxu0
        %1888 = vdwg.mxu0
        %1889 = vmatprep.subr.bf16.mxu0 0
        %1890 = vmatpush1.bf16.msra.mxu0 0
        %1891 = vmatprep.subr.bf16.mxu0 0
        %1892 = vmatpush1.bf16.msra.mxu0 0
        %1893 = vmatprep.subr.bf16.mxu0 0
        %1894 = vmatpush1.bf16.msra.mxu0 0
        %1895 = vmatprep.subr.bf16.mxu0 0
        %1896 = vmatpush1.bf16.msra.mxu0 0
        %1897 = vmatprep.subr.bf16.mxu0 0
        %1898 = vmatpush1.bf16.msra.mxu0 0
        %1899 = vmatprep.subr.bf16.mxu0 0
        %1900 = vmatpush1.bf16.msra.mxu0 0
        %1901 = vmatprep.subr.bf16.mxu0 0
        %1902 = vmatpush1.bf16.msra.mxu0 0
        %1903 = vmatprep.subr.bf16.mxu0 %v1846
        %1904 = vmatpush1.bf16.msra.mxu0 %v1843
        %1905 = vmatprep.subr.bf16.mxu0 0
        %1906 = vmatpush2.bf16.msra.mxu0 0
        %1907 = vmatprep.subr.bf16.mxu0 0
        %1908 = vmatpush2.bf16.msra.mxu0 0
        %1909 = vmatprep.subr.bf16.mxu0 0
        %1910 = vmatpush2.bf16.msra.mxu0 0
        %1911 = vmatprep.subr.bf16.mxu0 0
        %1912 = vmatpush2.bf16.msra.mxu0 0
        %1913 = vmatprep.subr.bf16.mxu0 0
        %1914 = vmatpush2.bf16.msra.mxu0 0
        %1915 = vmatprep.subr.bf16.mxu0 0
        %1916 = vmatpush2.bf16.msra.mxu0 0
        %1917 = vmatprep.subr.bf16.mxu0 0
        %1918 = vmatpush2.bf16.msra.mxu0 0
        %1919 = vmatprep.subr.bf16.mxu0 0
        %1920 = vmatpush2.bf16.msra.mxu0 0
        %1921 = vmatprep.mubr.bf16.mxu0 0
        %1922 = vmatmul.mubr.bf16.gmra.mxu0 %v1834
        %v1923 = vpop.f32.mrf.mxu0
        %v1924 = vadd.f32 0.0, %v1923
        %v1925 = vpop.f32.mrf.mxu0
        %v1926 = vadd.f32 0.0, %v1925
        %v1927 = vpop.f32.mrf.mxu0
        %v1928 = vpop.f32.mrf.mxu0
        %1929 = vdwg.mxu0
        %v1930 = vadd.f32 %v1812, %v1883
        %v1931 = vadd.f32 %v1813, %v1885
        %v1932 = vadd.f32 %v1814, %v1924
        %v1933 = vadd.f32 %v1815, %v1926
        %s1934 = scalar_lea.vmem %s2, 56
        %v1935 = vld [vmem:[%s1934] sm:$0xf]
        %1936 = vrot.lane.b32.xlu0 %v285, 16
        %v1937 = vpop.permute.xlu0 %1936
        %1938 = vrot.lane.b32.xlu0 %v293, 16
        %v1939 = vpop.permute.xlu0 %1938
        %1940 = vrot.lane.b32.xlu0 %v292, 16
        %v1941 = vpop.permute.xlu0 %1940
        %1942 = vrot.lane.b32.xlu0 %v294, 16
        %v1943 = vpop.permute.xlu0 %1942
        %1944 = vrot.lane.b32.xlu0 %v302, 16
        %v1945 = vpop.permute.xlu0 %1944
        %vm1946 = vcmask 130048
        %v1947 = vsel %vm1946, %v1937, %v1939
        %v1948 = vsel %vm1946, %v1939, %v1941
        %v1949 = vsel %vm1946, %v1941, %v1943
        %v1950 = vsel %vm1946, %v1943, %v1945
        %v1952 = vsel %vm322, %v1935, 0
        %v1955 = vsel %vm326, %v1947, 0
        %v1958 = vsel %vm326, %v1948, 0
        %v1961 = vsel %vm326, %v1949, 0
        %v1964 = vsel %vm326, %v1950, 0
        %1966 = vmatprep.subr.bf16.mxu0 0
        %1967 = vmatpush1.bf16.msra.mxu0 0
        %1968 = vmatprep.subr.bf16.mxu0 0
        %1969 = vmatpush1.bf16.msra.mxu0 0
        %1970 = vmatprep.subr.bf16.mxu0 0
        %1971 = vmatpush1.bf16.msra.mxu0 0
        %1972 = vmatprep.subr.bf16.mxu0 0
        %1973 = vmatpush1.bf16.msra.mxu0 0
        %1974 = vmatprep.subr.bf16.mxu0 0
        %1975 = vmatpush1.bf16.msra.mxu0 0
        %1976 = vmatprep.subr.bf16.mxu0 0
        %1977 = vmatpush1.bf16.msra.mxu0 0
        %1978 = vmatprep.subr.bf16.mxu0 0
        %1979 = vmatpush1.bf16.msra.mxu0 0
        %1980 = vmatprep.subr.bf16.mxu0 %v1958
        %1981 = vmatpush1.bf16.msra.mxu0 %v1955
        %1982 = vmatprep.subr.bf16.mxu0 0
        %1983 = vmatpush2.bf16.msra.mxu0 0
        %1984 = vmatprep.subr.bf16.mxu0 0
        %1985 = vmatpush2.bf16.msra.mxu0 0
        %1986 = vmatprep.subr.bf16.mxu0 0
        %1987 = vmatpush2.bf16.msra.mxu0 0
        %1988 = vmatprep.subr.bf16.mxu0 0
        %1989 = vmatpush2.bf16.msra.mxu0 0
        %1990 = vmatprep.subr.bf16.mxu0 0
        %1991 = vmatpush2.bf16.msra.mxu0 0
        %1992 = vmatprep.subr.bf16.mxu0 0
        %1993 = vmatpush2.bf16.msra.mxu0 0
        %1994 = vmatprep.subr.bf16.mxu0 0
        %1995 = vmatpush2.bf16.msra.mxu0 0
        %1996 = vmatprep.subr.bf16.mxu0 0
        %1997 = vmatpush2.bf16.msra.mxu0 0
        %1998 = vmatprep.mubr.bf16.mxu0 0
        %1999 = vmatmul.mubr.bf16.gmra.mxu0 %v1952
        %v2000 = vpop.f32.mrf.mxu0
        %v2001 = vadd.f32 0.0, %v2000
        %v2002 = vpop.f32.mrf.mxu0
        %v2003 = vadd.f32 0.0, %v2002
        %v2004 = vpop.f32.mrf.mxu0
        %v2005 = vpop.f32.mrf.mxu0
        %2006 = vdwg.mxu0
        %2007 = vmatprep.subr.bf16.mxu0 0
        %2008 = vmatpush1.bf16.msra.mxu0 0
        %2009 = vmatprep.subr.bf16.mxu0 0
        %2010 = vmatpush1.bf16.msra.mxu0 0
        %2011 = vmatprep.subr.bf16.mxu0 0
        %2012 = vmatpush1.bf16.msra.mxu0 0
        %2013 = vmatprep.subr.bf16.mxu0 0
        %2014 = vmatpush1.bf16.msra.mxu0 0
        %2015 = vmatprep.subr.bf16.mxu0 0
        %2016 = vmatpush1.bf16.msra.mxu0 0
        %2017 = vmatprep.subr.bf16.mxu0 0
        %2018 = vmatpush1.bf16.msra.mxu0 0
        %2019 = vmatprep.subr.bf16.mxu0 0
        %2020 = vmatpush1.bf16.msra.mxu0 0
        %2021 = vmatprep.subr.bf16.mxu0 %v1964
        %2022 = vmatpush1.bf16.msra.mxu0 %v1961
        %2023 = vmatprep.subr.bf16.mxu0 0
        %2024 = vmatpush2.bf16.msra.mxu0 0
        %2025 = vmatprep.subr.bf16.mxu0 0
        %2026 = vmatpush2.bf16.msra.mxu0 0
        %2027 = vmatprep.subr.bf16.mxu0 0
        %2028 = vmatpush2.bf16.msra.mxu0 0
        %2029 = vmatprep.subr.bf16.mxu0 0
        %2030 = vmatpush2.bf16.msra.mxu0 0
        %2031 = vmatprep.subr.bf16.mxu0 0
        %2032 = vmatpush2.bf16.msra.mxu0 0
        %2033 = vmatprep.subr.bf16.mxu0 0
        %2034 = vmatpush2.bf16.msra.mxu0 0
        %2035 = vmatprep.subr.bf16.mxu0 0
        %2036 = vmatpush2.bf16.msra.mxu0 0
        %2037 = vmatprep.subr.bf16.mxu0 0
        %2038 = vmatpush2.bf16.msra.mxu0 0
        %2039 = vmatprep.mubr.bf16.mxu0 0
        %2040 = vmatmul.mubr.bf16.gmra.mxu0 %v1952
        %v2041 = vpop.f32.mrf.mxu0
        %v2042 = vadd.f32 0.0, %v2041
        %v2043 = vpop.f32.mrf.mxu0
        %v2044 = vadd.f32 0.0, %v2043
        %v2045 = vpop.f32.mrf.mxu0
        %v2046 = vpop.f32.mrf.mxu0
        %2047 = vdwg.mxu0
        %v2048 = vadd.f32 %v1930, %v2001
        %v2049 = vadd.f32 %v1931, %v2003
        %v2050 = vadd.f32 %v1932, %v2042
        %v2051 = vadd.f32 %v1933, %v2044
        %s2052 = scalar_lea.vmem %s2, 60
        %v2053 = vld [vmem:[%s2052] sm:$0xf]
        %2054 = vrot.lane.b32.xlu0 %v285, 8
        %v2055 = vpop.permute.xlu0 %2054
        %2056 = vrot.lane.b32.xlu0 %v293, 8
        %v2057 = vpop.permute.xlu0 %2056
        %2058 = vrot.lane.b32.xlu0 %v292, 8
        %v2059 = vpop.permute.xlu0 %2058
        %2060 = vrot.lane.b32.xlu0 %v294, 8
        %v2061 = vpop.permute.xlu0 %2060
        %2062 = vrot.lane.b32.xlu0 %v302, 8
        %v2063 = vpop.permute.xlu0 %2062
        %vm2064 = vcmask 64512
        %v2065 = vsel %vm2064, %v2055, %v2057
        %v2066 = vsel %vm2064, %v2057, %v2059
        %v2067 = vsel %vm2064, %v2059, %v2061
        %v2068 = vsel %vm2064, %v2061, %v2063
        %v2070 = vsel %vm322, %v2053, 0
        %v2073 = vsel %vm326, %v2065, 0
        %v2076 = vsel %vm326, %v2066, 0
        %v2079 = vsel %vm326, %v2067, 0
        %v2082 = vsel %vm326, %v2068, 0
        %2084 = vmatprep.subr.bf16.mxu0 0
        %2085 = vmatpush1.bf16.msra.mxu0 0
        %2086 = vmatprep.subr.bf16.mxu0 0
        %2087 = vmatpush1.bf16.msra.mxu0 0
        %2088 = vmatprep.subr.bf16.mxu0 0
        %2089 = vmatpush1.bf16.msra.mxu0 0
        %2090 = vmatprep.subr.bf16.mxu0 0
        %2091 = vmatpush1.bf16.msra.mxu0 0
        %2092 = vmatprep.subr.bf16.mxu0 0
        %2093 = vmatpush1.bf16.msra.mxu0 0
        %2094 = vmatprep.subr.bf16.mxu0 0
        %2095 = vmatpush1.bf16.msra.mxu0 0
        %2096 = vmatprep.subr.bf16.mxu0 0
        %2097 = vmatpush1.bf16.msra.mxu0 0
        %2098 = vmatprep.subr.bf16.mxu0 %v2076
        %2099 = vmatpush1.bf16.msra.mxu0 %v2073
        %2100 = vmatprep.subr.bf16.mxu0 0
        %2101 = vmatpush2.bf16.msra.mxu0 0
        %2102 = vmatprep.subr.bf16.mxu0 0
        %2103 = vmatpush2.bf16.msra.mxu0 0
        %2104 = vmatprep.subr.bf16.mxu0 0
        %2105 = vmatpush2.bf16.msra.mxu0 0
        %2106 = vmatprep.subr.bf16.mxu0 0
        %2107 = vmatpush2.bf16.msra.mxu0 0
        %2108 = vmatprep.subr.bf16.mxu0 0
        %2109 = vmatpush2.bf16.msra.mxu0 0
        %2110 = vmatprep.subr.bf16.mxu0 0
        %2111 = vmatpush2.bf16.msra.mxu0 0
        %2112 = vmatprep.subr.bf16.mxu0 0
        %2113 = vmatpush2.bf16.msra.mxu0 0
        %2114 = vmatprep.subr.bf16.mxu0 0
        %2115 = vmatpush2.bf16.msra.mxu0 0
        %2116 = vmatprep.mubr.bf16.mxu0 0
        %2117 = vmatmul.mubr.bf16.gmra.mxu0 %v2070
        %v2118 = vpop.f32.mrf.mxu0
        %v2119 = vadd.f32 0.0, %v2118
        %v2120 = vpop.f32.mrf.mxu0
        %v2121 = vadd.f32 0.0, %v2120
        %v2122 = vpop.f32.mrf.mxu0
        %v2123 = vpop.f32.mrf.mxu0
        %2124 = vdwg.mxu0
        %2125 = vmatprep.subr.bf16.mxu0 0
        %2126 = vmatpush1.bf16.msra.mxu0 0
        %2127 = vmatprep.subr.bf16.mxu0 0
        %2128 = vmatpush1.bf16.msra.mxu0 0
        %2129 = vmatprep.subr.bf16.mxu0 0
        %2130 = vmatpush1.bf16.msra.mxu0 0
        %2131 = vmatprep.subr.bf16.mxu0 0
        %2132 = vmatpush1.bf16.msra.mxu0 0
        %2133 = vmatprep.subr.bf16.mxu0 0
        %2134 = vmatpush1.bf16.msra.mxu0 0
        %2135 = vmatprep.subr.bf16.mxu0 0
        %2136 = vmatpush1.bf16.msra.mxu0 0
        %2137 = vmatprep.subr.bf16.mxu0 0
        %2138 = vmatpush1.bf16.msra.mxu0 0
        %2139 = vmatprep.subr.bf16.mxu0 %v2082
        %2140 = vmatpush1.bf16.msra.mxu0 %v2079
        %2141 = vmatprep.subr.bf16.mxu0 0
        %2142 = vmatpush2.bf16.msra.mxu0 0
        %2143 = vmatprep.subr.bf16.mxu0 0
        %2144 = vmatpush2.bf16.msra.mxu0 0
        %2145 = vmatprep.subr.bf16.mxu0 0
        %2146 = vmatpush2.bf16.msra.mxu0 0
        %2147 = vmatprep.subr.bf16.mxu0 0
        %2148 = vmatpush2.bf16.msra.mxu0 0
        %2149 = vmatprep.subr.bf16.mxu0 0
        %2150 = vmatpush2.bf16.msra.mxu0 0
        %2151 = vmatprep.subr.bf16.mxu0 0
        %2152 = vmatpush2.bf16.msra.mxu0 0
        %2153 = vmatprep.subr.bf16.mxu0 0
        %2154 = vmatpush2.bf16.msra.mxu0 0
        %2155 = vmatprep.subr.bf16.mxu0 0
        %2156 = vmatpush2.bf16.msra.mxu0 0
        %2157 = vmatprep.mubr.bf16.mxu0 0
        %2158 = vmatmul.mubr.bf16.gmra.mxu0 %v2070
        %v2159 = vpop.f32.mrf.mxu0
        %v2160 = vadd.f32 0.0, %v2159
        %v2161 = vpop.f32.mrf.mxu0
        %v2162 = vadd.f32 0.0, %v2161
        %v2163 = vpop.f32.mrf.mxu0
        %v2164 = vpop.f32.mrf.mxu0
        %2165 = vdwg.mxu0
        %v2166 = vadd.f32 %v2048, %v2119
        %v2167 = vadd.f32 %v2049, %v2121
        %v2168 = vadd.f32 %v2050, %v2160
        %v2169 = vadd.f32 %v2051, %v2162
        %s2170 = scalar_lea.vmem %s2, 64
        %v2171 = vld [vmem:[%s2170] sm:$0xf]
        %2172 = vrot.lane.b32.xlu0 %v285, 7
        %v2173 = vpop.permute.xlu0 %2172
        %2174 = vrot.lane.b32.xlu0 %v293, 7
        %v2175 = vpop.permute.xlu0 %2174
        %2176 = vrot.lane.b32.xlu0 %v292, 7
        %v2177 = vpop.permute.xlu0 %2176
        %2178 = vrot.lane.b32.xlu0 %v294, 7
        %v2179 = vpop.permute.xlu0 %2178
        %2180 = vrot.lane.b32.xlu0 %v302, 7
        %v2181 = vpop.permute.xlu0 %2180
        %vm2182 = vcmask 56320
        %v2183 = vsel %vm2182, %v2173, %v2175
        %v2184 = vsel %vm2182, %v2175, %v2177
        %v2185 = vsel %vm2182, %v2177, %v2179
        %v2186 = vsel %vm2182, %v2179, %v2181
        %v2188 = vsel %vm322, %v2171, 0
        %v2191 = vsel %vm326, %v2183, 0
        %v2194 = vsel %vm326, %v2184, 0
        %v2197 = vsel %vm326, %v2185, 0
        %v2200 = vsel %vm326, %v2186, 0
        %2202 = vmatprep.subr.bf16.mxu0 0
        %2203 = vmatpush1.bf16.msra.mxu0 0
        %2204 = vmatprep.subr.bf16.mxu0 0
        %2205 = vmatpush1.bf16.msra.mxu0 0
        %2206 = vmatprep.subr.bf16.mxu0 0
        %2207 = vmatpush1.bf16.msra.mxu0 0
        %2208 = vmatprep.subr.bf16.mxu0 0
        %2209 = vmatpush1.bf16.msra.mxu0 0
        %2210 = vmatprep.subr.bf16.mxu0 0
        %2211 = vmatpush1.bf16.msra.mxu0 0
        %2212 = vmatprep.subr.bf16.mxu0 0
        %2213 = vmatpush1.bf16.msra.mxu0 0
        %2214 = vmatprep.subr.bf16.mxu0 0
        %2215 = vmatpush1.bf16.msra.mxu0 0
        %2216 = vmatprep.subr.bf16.mxu0 %v2194
        %2217 = vmatpush1.bf16.msra.mxu0 %v2191
        %2218 = vmatprep.subr.bf16.mxu0 0
        %2219 = vmatpush2.bf16.msra.mxu0 0
        %2220 = vmatprep.subr.bf16.mxu0 0
        %2221 = vmatpush2.bf16.msra.mxu0 0
        %2222 = vmatprep.subr.bf16.mxu0 0
        %2223 = vmatpush2.bf16.msra.mxu0 0
        %2224 = vmatprep.subr.bf16.mxu0 0
        %2225 = vmatpush2.bf16.msra.mxu0 0
        %2226 = vmatprep.subr.bf16.mxu0 0
        %2227 = vmatpush2.bf16.msra.mxu0 0
        %2228 = vmatprep.subr.bf16.mxu0 0
        %2229 = vmatpush2.bf16.msra.mxu0 0
        %2230 = vmatprep.subr.bf16.mxu0 0
        %2231 = vmatpush2.bf16.msra.mxu0 0
        %2232 = vmatprep.subr.bf16.mxu0 0
        %2233 = vmatpush2.bf16.msra.mxu0 0
        %2234 = vmatprep.mubr.bf16.mxu0 0
        %2235 = vmatmul.mubr.bf16.gmra.mxu0 %v2188
        %v2236 = vpop.f32.mrf.mxu0
        %v2237 = vadd.f32 0.0, %v2236
        %v2238 = vpop.f32.mrf.mxu0
        %v2239 = vadd.f32 0.0, %v2238
        %v2240 = vpop.f32.mrf.mxu0
        %v2241 = vpop.f32.mrf.mxu0
        %2242 = vdwg.mxu0
        %2243 = vmatprep.subr.bf16.mxu0 0
        %2244 = vmatpush1.bf16.msra.mxu0 0
        %2245 = vmatprep.subr.bf16.mxu0 0
        %2246 = vmatpush1.bf16.msra.mxu0 0
        %2247 = vmatprep.subr.bf16.mxu0 0
        %2248 = vmatpush1.bf16.msra.mxu0 0
        %2249 = vmatprep.subr.bf16.mxu0 0
        %2250 = vmatpush1.bf16.msra.mxu0 0
        %2251 = vmatprep.subr.bf16.mxu0 0
        %2252 = vmatpush1.bf16.msra.mxu0 0
        %2253 = vmatprep.subr.bf16.mxu0 0
        %2254 = vmatpush1.bf16.msra.mxu0 0
        %2255 = vmatprep.subr.bf16.mxu0 0
        %2256 = vmatpush1.bf16.msra.mxu0 0
        %2257 = vmatprep.subr.bf16.mxu0 %v2200
        %2258 = vmatpush1.bf16.msra.mxu0 %v2197
        %2259 = vmatprep.subr.bf16.mxu0 0
        %2260 = vmatpush2.bf16.msra.mxu0 0
        %2261 = vmatprep.subr.bf16.mxu0 0
        %2262 = vmatpush2.bf16.msra.mxu0 0
        %2263 = vmatprep.subr.bf16.mxu0 0
        %2264 = vmatpush2.bf16.msra.mxu0 0
        %2265 = vmatprep.subr.bf16.mxu0 0
        %2266 = vmatpush2.bf16.msra.mxu0 0
        %2267 = vmatprep.subr.bf16.mxu0 0
        %2268 = vmatpush2.bf16.msra.mxu0 0
        %2269 = vmatprep.subr.bf16.mxu0 0
        %2270 = vmatpush2.bf16.msra.mxu0 0
        %2271 = vmatprep.subr.bf16.mxu0 0
        %2272 = vmatpush2.bf16.msra.mxu0 0
        %2273 = vmatprep.subr.bf16.mxu0 0
        %2274 = vmatpush2.bf16.msra.mxu0 0
        %2275 = vmatprep.mubr.bf16.mxu0 0
        %2276 = vmatmul.mubr.bf16.gmra.mxu0 %v2188
        %v2277 = vpop.f32.mrf.mxu0
        %v2278 = vadd.f32 0.0, %v2277
        %v2279 = vpop.f32.mrf.mxu0
        %v2280 = vadd.f32 0.0, %v2279
        %v2281 = vpop.f32.mrf.mxu0
        %v2282 = vpop.f32.mrf.mxu0
        %2283 = vdwg.mxu0
        %v2284 = vadd.f32 %v2166, %v2237
        %v2285 = vadd.f32 %v2167, %v2239
        %v2286 = vadd.f32 %v2168, %v2278
        %v2287 = vadd.f32 %v2169, %v2280
        %s2288 = scalar_lea.vmem %s2, 68
        %v2289 = vld [vmem:[%s2288] sm:$0xf]
        %2290 = vrot.lane.b32.xlu0 %v285, 6
        %v2291 = vpop.permute.xlu0 %2290
        %2292 = vrot.lane.b32.xlu0 %v293, 6
        %v2293 = vpop.permute.xlu0 %2292
        %2294 = vrot.lane.b32.xlu0 %v292, 6
        %v2295 = vpop.permute.xlu0 %2294
        %2296 = vrot.lane.b32.xlu0 %v294, 6
        %v2297 = vpop.permute.xlu0 %2296
        %2298 = vrot.lane.b32.xlu0 %v302, 6
        %v2299 = vpop.permute.xlu0 %2298
        %vm2300 = vcmask 48128
        %v2301 = vsel %vm2300, %v2291, %v2293
        %v2302 = vsel %vm2300, %v2293, %v2295
        %v2303 = vsel %vm2300, %v2295, %v2297
        %v2304 = vsel %vm2300, %v2297, %v2299
        %v2306 = vsel %vm322, %v2289, 0
        %v2309 = vsel %vm326, %v2301, 0
        %v2312 = vsel %vm326, %v2302, 0
        %v2315 = vsel %vm326, %v2303, 0
        %v2318 = vsel %vm326, %v2304, 0
        %2320 = vmatprep.subr.bf16.mxu0 0
        %2321 = vmatpush1.bf16.msra.mxu0 0
        %2322 = vmatprep.subr.bf16.mxu0 0
        %2323 = vmatpush1.bf16.msra.mxu0 0
        %2324 = vmatprep.subr.bf16.mxu0 0
        %2325 = vmatpush1.bf16.msra.mxu0 0
        %2326 = vmatprep.subr.bf16.mxu0 0
        %2327 = vmatpush1.bf16.msra.mxu0 0
        %2328 = vmatprep.subr.bf16.mxu0 0
        %2329 = vmatpush1.bf16.msra.mxu0 0
        %2330 = vmatprep.subr.bf16.mxu0 0
        %2331 = vmatpush1.bf16.msra.mxu0 0
        %2332 = vmatprep.subr.bf16.mxu0 0
        %2333 = vmatpush1.bf16.msra.mxu0 0
        %2334 = vmatprep.subr.bf16.mxu0 %v2312
        %2335 = vmatpush1.bf16.msra.mxu0 %v2309
        %2336 = vmatprep.subr.bf16.mxu0 0
        %2337 = vmatpush2.bf16.msra.mxu0 0
        %2338 = vmatprep.subr.bf16.mxu0 0
        %2339 = vmatpush2.bf16.msra.mxu0 0
        %2340 = vmatprep.subr.bf16.mxu0 0
        %2341 = vmatpush2.bf16.msra.mxu0 0
        %2342 = vmatprep.subr.bf16.mxu0 0
        %2343 = vmatpush2.bf16.msra.mxu0 0
        %2344 = vmatprep.subr.bf16.mxu0 0
        %2345 = vmatpush2.bf16.msra.mxu0 0
        %2346 = vmatprep.subr.bf16.mxu0 0
        %2347 = vmatpush2.bf16.msra.mxu0 0
        %2348 = vmatprep.subr.bf16.mxu0 0
        %2349 = vmatpush2.bf16.msra.mxu0 0
        %2350 = vmatprep.subr.bf16.mxu0 0
        %2351 = vmatpush2.bf16.msra.mxu0 0
        %2352 = vmatprep.mubr.bf16.mxu0 0
        %2353 = vmatmul.mubr.bf16.gmra.mxu0 %v2306
        %v2354 = vpop.f32.mrf.mxu0
        %v2355 = vadd.f32 0.0, %v2354
        %v2356 = vpop.f32.mrf.mxu0
        %v2357 = vadd.f32 0.0, %v2356
        %v2358 = vpop.f32.mrf.mxu0
        %v2359 = vpop.f32.mrf.mxu0
        %2360 = vdwg.mxu0
        %2361 = vmatprep.subr.bf16.mxu0 0
        %2362 = vmatpush1.bf16.msra.mxu0 0
        %2363 = vmatprep.subr.bf16.mxu0 0
        %2364 = vmatpush1.bf16.msra.mxu0 0
        %2365 = vmatprep.subr.bf16.mxu0 0
        %2366 = vmatpush1.bf16.msra.mxu0 0
        %2367 = vmatprep.subr.bf16.mxu0 0
        %2368 = vmatpush1.bf16.msra.mxu0 0
        %2369 = vmatprep.subr.bf16.mxu0 0
        %2370 = vmatpush1.bf16.msra.mxu0 0
        %2371 = vmatprep.subr.bf16.mxu0 0
        %2372 = vmatpush1.bf16.msra.mxu0 0
        %2373 = vmatprep.subr.bf16.mxu0 0
        %2374 = vmatpush1.bf16.msra.mxu0 0
        %2375 = vmatprep.subr.bf16.mxu0 %v2318
        %2376 = vmatpush1.bf16.msra.mxu0 %v2315
        %2377 = vmatprep.subr.bf16.mxu0 0
        %2378 = vmatpush2.bf16.msra.mxu0 0
        %2379 = vmatprep.subr.bf16.mxu0 0
        %2380 = vmatpush2.bf16.msra.mxu0 0
        %2381 = vmatprep.subr.bf16.mxu0 0
        %2382 = vmatpush2.bf16.msra.mxu0 0
        %2383 = vmatprep.subr.bf16.mxu0 0
        %2384 = vmatpush2.bf16.msra.mxu0 0
        %2385 = vmatprep.subr.bf16.mxu0 0
        %2386 = vmatpush2.bf16.msra.mxu0 0
        %2387 = vmatprep.subr.bf16.mxu0 0
        %2388 = vmatpush2.bf16.msra.mxu0 0
        %2389 = vmatprep.subr.bf16.mxu0 0
        %2390 = vmatpush2.bf16.msra.mxu0 0
        %2391 = vmatprep.subr.bf16.mxu0 0
        %2392 = vmatpush2.bf16.msra.mxu0 0
        %2393 = vmatprep.mubr.bf16.mxu0 0
        %2394 = vmatmul.mubr.bf16.gmra.mxu0 %v2306
        %v2395 = vpop.f32.mrf.mxu0
        %v2396 = vadd.f32 0.0, %v2395
        %v2397 = vpop.f32.mrf.mxu0
        %v2398 = vadd.f32 0.0, %v2397
        %v2399 = vpop.f32.mrf.mxu0
        %v2400 = vpop.f32.mrf.mxu0
        %2401 = vdwg.mxu0
        %v2402 = vadd.f32 %v2284, %v2355
        %v2403 = vadd.f32 %v2285, %v2357
        %v2404 = vadd.f32 %v2286, %v2396
        %v2405 = vadd.f32 %v2287, %v2398
        %s2406 = scalar_lea.vmem %s2, 72
        %v2407 = vld [vmem:[%s2406] sm:$0xf]
        %2408 = vrot.lane.b32.xlu0 %v293, 56
        %v2409 = vpop.permute.xlu0 %2408
        %2410 = vrot.lane.b32.xlu0 %v292, 56
        %v2411 = vpop.permute.xlu0 %2410
        %2412 = vrot.lane.b32.xlu0 %v294, 56
        %v2413 = vpop.permute.xlu0 %2412
        %2414 = vrot.lane.b32.xlu0 %v302, 56
        %v2415 = vpop.permute.xlu0 %2414
        %2416 = vrot.lane.b32.xlu0 %v303, 56
        %v2417 = vpop.permute.xlu0 %2416
        %vm2418 = vcmask 457728
        %v2419 = vsel %vm2418, %v2409, %v2411
        %v2420 = vsel %vm2418, %v2411, %v2413
        %v2421 = vsel %vm2418, %v2413, %v2415
        %v2422 = vsel %vm2418, %v2415, %v2417
        %v2424 = vsel %vm322, %v2407, 0
        %v2427 = vsel %vm326, %v2419, 0
        %v2430 = vsel %vm326, %v2420, 0
        %v2433 = vsel %vm326, %v2421, 0
        %v2436 = vsel %vm326, %v2422, 0
        %2438 = vmatprep.subr.bf16.mxu0 0
        %2439 = vmatpush1.bf16.msra.mxu0 0
        %2440 = vmatprep.subr.bf16.mxu0 0
        %2441 = vmatpush1.bf16.msra.mxu0 0
        %2442 = vmatprep.subr.bf16.mxu0 0
        %2443 = vmatpush1.bf16.msra.mxu0 0
        %2444 = vmatprep.subr.bf16.mxu0 0
        %2445 = vmatpush1.bf16.msra.mxu0 0
        %2446 = vmatprep.subr.bf16.mxu0 0
        %2447 = vmatpush1.bf16.msra.mxu0 0
        %2448 = vmatprep.subr.bf16.mxu0 0
        %2449 = vmatpush1.bf16.msra.mxu0 0
        %2450 = vmatprep.subr.bf16.mxu0 0
        %2451 = vmatpush1.bf16.msra.mxu0 0
        %2452 = vmatprep.subr.bf16.mxu0 %v2430
        %2453 = vmatpush1.bf16.msra.mxu0 %v2427
        %2454 = vmatprep.subr.bf16.mxu0 0
        %2455 = vmatpush2.bf16.msra.mxu0 0
        %2456 = vmatprep.subr.bf16.mxu0 0
        %2457 = vmatpush2.bf16.msra.mxu0 0
        %2458 = vmatprep.subr.bf16.mxu0 0
        %2459 = vmatpush2.bf16.msra.mxu0 0
        %2460 = vmatprep.subr.bf16.mxu0 0
        %2461 = vmatpush2.bf16.msra.mxu0 0
        %2462 = vmatprep.subr.bf16.mxu0 0
        %2463 = vmatpush2.bf16.msra.mxu0 0
        %2464 = vmatprep.subr.bf16.mxu0 0
        %2465 = vmatpush2.bf16.msra.mxu0 0
        %2466 = vmatprep.subr.bf16.mxu0 0
        %2467 = vmatpush2.bf16.msra.mxu0 0
        %2468 = vmatprep.subr.bf16.mxu0 0
        %2469 = vmatpush2.bf16.msra.mxu0 0
        %2470 = vmatprep.mubr.bf16.mxu0 0
        %2471 = vmatmul.mubr.bf16.gmra.mxu0 %v2424
        %v2472 = vpop.f32.mrf.mxu0
        %v2473 = vadd.f32 0.0, %v2472
        %v2474 = vpop.f32.mrf.mxu0
        %v2475 = vadd.f32 0.0, %v2474
        %v2476 = vpop.f32.mrf.mxu0
        %v2477 = vpop.f32.mrf.mxu0
        %2478 = vdwg.mxu0
        %2479 = vmatprep.subr.bf16.mxu0 0
        %2480 = vmatpush1.bf16.msra.mxu0 0
        %2481 = vmatprep.subr.bf16.mxu0 0
        %2482 = vmatpush1.bf16.msra.mxu0 0
        %2483 = vmatprep.subr.bf16.mxu0 0
        %2484 = vmatpush1.bf16.msra.mxu0 0
        %2485 = vmatprep.subr.bf16.mxu0 0
        %2486 = vmatpush1.bf16.msra.mxu0 0
        %2487 = vmatprep.subr.bf16.mxu0 0
        %2488 = vmatpush1.bf16.msra.mxu0 0
        %2489 = vmatprep.subr.bf16.mxu0 0
        %2490 = vmatpush1.bf16.msra.mxu0 0
        %2491 = vmatprep.subr.bf16.mxu0 0
        %2492 = vmatpush1.bf16.msra.mxu0 0
        %2493 = vmatprep.subr.bf16.mxu0 %v2436
        %2494 = vmatpush1.bf16.msra.mxu0 %v2433
        %2495 = vmatprep.subr.bf16.mxu0 0
        %2496 = vmatpush2.bf16.msra.mxu0 0
        %2497 = vmatprep.subr.bf16.mxu0 0
        %2498 = vmatpush2.bf16.msra.mxu0 0
        %2499 = vmatprep.subr.bf16.mxu0 0
        %2500 = vmatpush2.bf16.msra.mxu0 0
        %2501 = vmatprep.subr.bf16.mxu0 0
        %2502 = vmatpush2.bf16.msra.mxu0 0
        %2503 = vmatprep.subr.bf16.mxu0 0
        %2504 = vmatpush2.bf16.msra.mxu0 0
        %2505 = vmatprep.subr.bf16.mxu0 0
        %2506 = vmatpush2.bf16.msra.mxu0 0
        %2507 = vmatprep.subr.bf16.mxu0 0
        %2508 = vmatpush2.bf16.msra.mxu0 0
        %2509 = vmatprep.subr.bf16.mxu0 0
        %2510 = vmatpush2.bf16.msra.mxu0 0
        %2511 = vmatprep.mubr.bf16.mxu0 0
        %2512 = vmatmul.mubr.bf16.gmra.mxu0 %v2424
        %v2513 = vpop.f32.mrf.mxu0
        %v2514 = vadd.f32 0.0, %v2513
        %v2515 = vpop.f32.mrf.mxu0
        %v2516 = vadd.f32 0.0, %v2515
        %v2517 = vpop.f32.mrf.mxu0
        %v2518 = vpop.f32.mrf.mxu0
        %2519 = vdwg.mxu0
        %v2520 = vadd.f32 %v2402, %v2473
        %v2521 = vadd.f32 %v2403, %v2475
        %v2522 = vadd.f32 %v2404, %v2514
        %v2523 = vadd.f32 %v2405, %v2516
        %s2524 = scalar_lea.vmem %s2, 76
        %v2525 = vld [vmem:[%s2524] sm:$0xf]
        %2526 = vrot.lane.b32.xlu0 %v293, 55
        %v2527 = vpop.permute.xlu0 %2526
        %2528 = vrot.lane.b32.xlu0 %v292, 55
        %v2529 = vpop.permute.xlu0 %2528
        %2530 = vrot.lane.b32.xlu0 %v294, 55
        %v2531 = vpop.permute.xlu0 %2530
        %2532 = vrot.lane.b32.xlu0 %v302, 55
        %v2533 = vpop.permute.xlu0 %2532
        %2534 = vrot.lane.b32.xlu0 %v303, 55
        %v2535 = vpop.permute.xlu0 %2534
        %vm2536 = vcmask 449536
        %v2537 = vsel %vm2536, %v2527, %v2529
        %v2538 = vsel %vm2536, %v2529, %v2531
        %v2539 = vsel %vm2536, %v2531, %v2533
        %v2540 = vsel %vm2536, %v2533, %v2535
        %v2542 = vsel %vm322, %v2525, 0
        %v2545 = vsel %vm326, %v2537, 0
        %v2548 = vsel %vm326, %v2538, 0
        %v2551 = vsel %vm326, %v2539, 0
        %v2554 = vsel %vm326, %v2540, 0
        %2556 = vmatprep.subr.bf16.mxu0 0
        %2557 = vmatpush1.bf16.msra.mxu0 0
        %2558 = vmatprep.subr.bf16.mxu0 0
        %2559 = vmatpush1.bf16.msra.mxu0 0
        %2560 = vmatprep.subr.bf16.mxu0 0
        %2561 = vmatpush1.bf16.msra.mxu0 0
        %2562 = vmatprep.subr.bf16.mxu0 0
        %2563 = vmatpush1.bf16.msra.mxu0 0
        %2564 = vmatprep.subr.bf16.mxu0 0
        %2565 = vmatpush1.bf16.msra.mxu0 0
        %2566 = vmatprep.subr.bf16.mxu0 0
        %2567 = vmatpush1.bf16.msra.mxu0 0
        %2568 = vmatprep.subr.bf16.mxu0 0
        %2569 = vmatpush1.bf16.msra.mxu0 0
        %2570 = vmatprep.subr.bf16.mxu0 %v2548
        %2571 = vmatpush1.bf16.msra.mxu0 %v2545
        %2572 = vmatprep.subr.bf16.mxu0 0
        %2573 = vmatpush2.bf16.msra.mxu0 0
        %2574 = vmatprep.subr.bf16.mxu0 0
        %2575 = vmatpush2.bf16.msra.mxu0 0
        %2576 = vmatprep.subr.bf16.mxu0 0
        %2577 = vmatpush2.bf16.msra.mxu0 0
        %2578 = vmatprep.subr.bf16.mxu0 0
        %2579 = vmatpush2.bf16.msra.mxu0 0
        %2580 = vmatprep.subr.bf16.mxu0 0
        %2581 = vmatpush2.bf16.msra.mxu0 0
        %2582 = vmatprep.subr.bf16.mxu0 0
        %2583 = vmatpush2.bf16.msra.mxu0 0
        %2584 = vmatprep.subr.bf16.mxu0 0
        %2585 = vmatpush2.bf16.msra.mxu0 0
        %2586 = vmatprep.subr.bf16.mxu0 0
        %2587 = vmatpush2.bf16.msra.mxu0 0
        %2588 = vmatprep.mubr.bf16.mxu0 0
        %2589 = vmatmul.mubr.bf16.gmra.mxu0 %v2542
        %v2590 = vpop.f32.mrf.mxu0
        %v2591 = vadd.f32 0.0, %v2590
        %v2592 = vpop.f32.mrf.mxu0
        %v2593 = vadd.f32 0.0, %v2592
        %v2594 = vpop.f32.mrf.mxu0
        %v2595 = vpop.f32.mrf.mxu0
        %2596 = vdwg.mxu0
        %2597 = vmatprep.subr.bf16.mxu0 0
        %2598 = vmatpush1.bf16.msra.mxu0 0
        %2599 = vmatprep.subr.bf16.mxu0 0
        %2600 = vmatpush1.bf16.msra.mxu0 0
        %2601 = vmatprep.subr.bf16.mxu0 0
        %2602 = vmatpush1.bf16.msra.mxu0 0
        %2603 = vmatprep.subr.bf16.mxu0 0
        %2604 = vmatpush1.bf16.msra.mxu0 0
        %2605 = vmatprep.subr.bf16.mxu0 0
        %2606 = vmatpush1.bf16.msra.mxu0 0
        %2607 = vmatprep.subr.bf16.mxu0 0
        %2608 = vmatpush1.bf16.msra.mxu0 0
        %2609 = vmatprep.subr.bf16.mxu0 0
        %2610 = vmatpush1.bf16.msra.mxu0 0
        %2611 = vmatprep.subr.bf16.mxu0 %v2554
        %2612 = vmatpush1.bf16.msra.mxu0 %v2551
        %2613 = vmatprep.subr.bf16.mxu0 0
        %2614 = vmatpush2.bf16.msra.mxu0 0
        %2615 = vmatprep.subr.bf16.mxu0 0
        %2616 = vmatpush2.bf16.msra.mxu0 0
        %2617 = vmatprep.subr.bf16.mxu0 0
        %2618 = vmatpush2.bf16.msra.mxu0 0
        %2619 = vmatprep.subr.bf16.mxu0 0
        %2620 = vmatpush2.bf16.msra.mxu0 0
        %2621 = vmatprep.subr.bf16.mxu0 0
        %2622 = vmatpush2.bf16.msra.mxu0 0
        %2623 = vmatprep.subr.bf16.mxu0 0
        %2624 = vmatpush2.bf16.msra.mxu0 0
        %2625 = vmatprep.subr.bf16.mxu0 0
        %2626 = vmatpush2.bf16.msra.mxu0 0
        %2627 = vmatprep.subr.bf16.mxu0 0
        %2628 = vmatpush2.bf16.msra.mxu0 0
        %2629 = vmatprep.mubr.bf16.mxu0 0
        %2630 = vmatmul.mubr.bf16.gmra.mxu0 %v2542
        %v2631 = vpop.f32.mrf.mxu0
        %v2632 = vadd.f32 0.0, %v2631
        %v2633 = vpop.f32.mrf.mxu0
        %v2634 = vadd.f32 0.0, %v2633
        %v2635 = vpop.f32.mrf.mxu0
        %v2636 = vpop.f32.mrf.mxu0
        %2637 = vdwg.mxu0
        %v2638 = vadd.f32 %v2520, %v2591
        %v2639 = vadd.f32 %v2521, %v2593
        %v2640 = vadd.f32 %v2522, %v2632
        %v2641 = vadd.f32 %v2523, %v2634
        %s2642 = scalar_lea.vmem %s2, 80
        %v2643 = vld [vmem:[%s2642] sm:$0xf]
        %2644 = vrot.lane.b32.xlu0 %v293, 54
        %v2645 = vpop.permute.xlu0 %2644
        %2646 = vrot.lane.b32.xlu0 %v292, 54
        %v2647 = vpop.permute.xlu0 %2646
        %2648 = vrot.lane.b32.xlu0 %v294, 54
        %v2649 = vpop.permute.xlu0 %2648
        %2650 = vrot.lane.b32.xlu0 %v302, 54
        %v2651 = vpop.permute.xlu0 %2650
        %2652 = vrot.lane.b32.xlu0 %v303, 54
        %v2653 = vpop.permute.xlu0 %2652
        %vm2654 = vcmask 441344
        %v2655 = vsel %vm2654, %v2645, %v2647
        %v2656 = vsel %vm2654, %v2647, %v2649
        %v2657 = vsel %vm2654, %v2649, %v2651
        %v2658 = vsel %vm2654, %v2651, %v2653
        %v2660 = vsel %vm322, %v2643, 0
        %v2663 = vsel %vm326, %v2655, 0
        %v2666 = vsel %vm326, %v2656, 0
        %v2669 = vsel %vm326, %v2657, 0
        %v2672 = vsel %vm326, %v2658, 0
        %2674 = vmatprep.subr.bf16.mxu0 0
        %2675 = vmatpush1.bf16.msra.mxu0 0
        %2676 = vmatprep.subr.bf16.mxu0 0
        %2677 = vmatpush1.bf16.msra.mxu0 0
        %2678 = vmatprep.subr.bf16.mxu0 0
        %2679 = vmatpush1.bf16.msra.mxu0 0
        %2680 = vmatprep.subr.bf16.mxu0 0
        %2681 = vmatpush1.bf16.msra.mxu0 0
        %2682 = vmatprep.subr.bf16.mxu0 0
        %2683 = vmatpush1.bf16.msra.mxu0 0
        %2684 = vmatprep.subr.bf16.mxu0 0
        %2685 = vmatpush1.bf16.msra.mxu0 0
        %2686 = vmatprep.subr.bf16.mxu0 0
        %2687 = vmatpush1.bf16.msra.mxu0 0
        %2688 = vmatprep.subr.bf16.mxu0 %v2666
        %2689 = vmatpush1.bf16.msra.mxu0 %v2663
        %2690 = vmatprep.subr.bf16.mxu0 0
        %2691 = vmatpush2.bf16.msra.mxu0 0
        %2692 = vmatprep.subr.bf16.mxu0 0
        %2693 = vmatpush2.bf16.msra.mxu0 0
        %2694 = vmatprep.subr.bf16.mxu0 0
        %2695 = vmatpush2.bf16.msra.mxu0 0
        %2696 = vmatprep.subr.bf16.mxu0 0
        %2697 = vmatpush2.bf16.msra.mxu0 0
        %2698 = vmatprep.subr.bf16.mxu0 0
        %2699 = vmatpush2.bf16.msra.mxu0 0
        %2700 = vmatprep.subr.bf16.mxu0 0
        %2701 = vmatpush2.bf16.msra.mxu0 0
        %2702 = vmatprep.subr.bf16.mxu0 0
        %2703 = vmatpush2.bf16.msra.mxu0 0
        %2704 = vmatprep.subr.bf16.mxu0 0
        %2705 = vmatpush2.bf16.msra.mxu0 0
        %2706 = vmatprep.mubr.bf16.mxu0 0
        %2707 = vmatmul.mubr.bf16.gmra.mxu0 %v2660
        %v2708 = vpop.f32.mrf.mxu0
        %v2709 = vadd.f32 0.0, %v2708
        %v2710 = vpop.f32.mrf.mxu0
        %v2711 = vadd.f32 0.0, %v2710
        %v2712 = vpop.f32.mrf.mxu0
        %v2713 = vpop.f32.mrf.mxu0
        %2714 = vdwg.mxu0
        %2715 = vmatprep.subr.bf16.mxu0 0
        %2716 = vmatpush1.bf16.msra.mxu0 0
        %2717 = vmatprep.subr.bf16.mxu0 0
        %2718 = vmatpush1.bf16.msra.mxu0 0
        %2719 = vmatprep.subr.bf16.mxu0 0
        %2720 = vmatpush1.bf16.msra.mxu0 0
        %2721 = vmatprep.subr.bf16.mxu0 0
        %2722 = vmatpush1.bf16.msra.mxu0 0
        %2723 = vmatprep.subr.bf16.mxu0 0
        %2724 = vmatpush1.bf16.msra.mxu0 0
        %2725 = vmatprep.subr.bf16.mxu0 0
        %2726 = vmatpush1.bf16.msra.mxu0 0
        %2727 = vmatprep.subr.bf16.mxu0 0
        %2728 = vmatpush1.bf16.msra.mxu0 0
        %2729 = vmatprep.subr.bf16.mxu0 %v2672
        %2730 = vmatpush1.bf16.msra.mxu0 %v2669
        %2731 = vmatprep.subr.bf16.mxu0 0
        %2732 = vmatpush2.bf16.msra.mxu0 0
        %2733 = vmatprep.subr.bf16.mxu0 0
        %2734 = vmatpush2.bf16.msra.mxu0 0
        %2735 = vmatprep.subr.bf16.mxu0 0
        %2736 = vmatpush2.bf16.msra.mxu0 0
        %2737 = vmatprep.subr.bf16.mxu0 0
        %2738 = vmatpush2.bf16.msra.mxu0 0
        %2739 = vmatprep.subr.bf16.mxu0 0
        %2740 = vmatpush2.bf16.msra.mxu0 0
        %2741 = vmatprep.subr.bf16.mxu0 0
        %2742 = vmatpush2.bf16.msra.mxu0 0
        %2743 = vmatprep.subr.bf16.mxu0 0
        %2744 = vmatpush2.bf16.msra.mxu0 0
        %2745 = vmatprep.subr.bf16.mxu0 0
        %2746 = vmatpush2.bf16.msra.mxu0 0
        %2747 = vmatprep.mubr.bf16.mxu0 0
        %2748 = vmatmul.mubr.bf16.gmra.mxu0 %v2660
        %v2749 = vpop.f32.mrf.mxu0
        %v2750 = vadd.f32 0.0, %v2749
        %v2751 = vpop.f32.mrf.mxu0
        %v2752 = vadd.f32 0.0, %v2751
        %v2753 = vpop.f32.mrf.mxu0
        %v2754 = vpop.f32.mrf.mxu0
        %2755 = vdwg.mxu0
        %v2756 = vadd.f32 %v2638, %v2709
        %v2757 = vadd.f32 %v2639, %v2711
        %v2758 = vadd.f32 %v2640, %v2750
        %v2759 = vadd.f32 %v2641, %v2752
        %s2760 = scalar_lea.vmem %s2, 84
        %v2761 = vld [vmem:[%s2760] sm:$0xf]
        %2762 = vrot.lane.b32.xlu0 %v293, 46
        %v2763 = vpop.permute.xlu0 %2762
        %2764 = vrot.lane.b32.xlu0 %v292, 46
        %v2765 = vpop.permute.xlu0 %2764
        %2766 = vrot.lane.b32.xlu0 %v294, 46
        %v2767 = vpop.permute.xlu0 %2766
        %2768 = vrot.lane.b32.xlu0 %v302, 46
        %v2769 = vpop.permute.xlu0 %2768
        %2770 = vrot.lane.b32.xlu0 %v303, 46
        %v2771 = vpop.permute.xlu0 %2770
        %vm2772 = vcmask 375808
        %v2773 = vsel %vm2772, %v2763, %v2765
        %v2774 = vsel %vm2772, %v2765, %v2767
        %v2775 = vsel %vm2772, %v2767, %v2769
        %v2776 = vsel %vm2772, %v2769, %v2771
        %v2778 = vsel %vm322, %v2761, 0
        %v2781 = vsel %vm326, %v2773, 0
        %v2784 = vsel %vm326, %v2774, 0
        %v2787 = vsel %vm326, %v2775, 0
        %v2790 = vsel %vm326, %v2776, 0
        %2792 = vmatprep.subr.bf16.mxu0 0
        %2793 = vmatpush1.bf16.msra.mxu0 0
        %2794 = vmatprep.subr.bf16.mxu0 0
        %2795 = vmatpush1.bf16.msra.mxu0 0
        %2796 = vmatprep.subr.bf16.mxu0 0
        %2797 = vmatpush1.bf16.msra.mxu0 0
        %2798 = vmatprep.subr.bf16.mxu0 0
        %2799 = vmatpush1.bf16.msra.mxu0 0
        %2800 = vmatprep.subr.bf16.mxu0 0
        %2801 = vmatpush1.bf16.msra.mxu0 0
        %2802 = vmatprep.subr.bf16.mxu0 0
        %2803 = vmatpush1.bf16.msra.mxu0 0
        %2804 = vmatprep.subr.bf16.mxu0 0
        %2805 = vmatpush1.bf16.msra.mxu0 0
        %2806 = vmatprep.subr.bf16.mxu0 %v2784
        %2807 = vmatpush1.bf16.msra.mxu0 %v2781
        %2808 = vmatprep.subr.bf16.mxu0 0
        %2809 = vmatpush2.bf16.msra.mxu0 0
        %2810 = vmatprep.subr.bf16.mxu0 0
        %2811 = vmatpush2.bf16.msra.mxu0 0
        %2812 = vmatprep.subr.bf16.mxu0 0
        %2813 = vmatpush2.bf16.msra.mxu0 0
        %2814 = vmatprep.subr.bf16.mxu0 0
        %2815 = vmatpush2.bf16.msra.mxu0 0
        %2816 = vmatprep.subr.bf16.mxu0 0
        %2817 = vmatpush2.bf16.msra.mxu0 0
        %2818 = vmatprep.subr.bf16.mxu0 0
        %2819 = vmatpush2.bf16.msra.mxu0 0
        %2820 = vmatprep.subr.bf16.mxu0 0
        %2821 = vmatpush2.bf16.msra.mxu0 0
        %2822 = vmatprep.subr.bf16.mxu0 0
        %2823 = vmatpush2.bf16.msra.mxu0 0
        %2824 = vmatprep.mubr.bf16.mxu0 0
        %2825 = vmatmul.mubr.bf16.gmra.mxu0 %v2778
        %v2826 = vpop.f32.mrf.mxu0
        %v2827 = vadd.f32 0.0, %v2826
        %v2828 = vpop.f32.mrf.mxu0
        %v2829 = vadd.f32 0.0, %v2828
        %v2830 = vpop.f32.mrf.mxu0
        %v2831 = vpop.f32.mrf.mxu0
        %2832 = vdwg.mxu0
        %2833 = vmatprep.subr.bf16.mxu0 0
        %2834 = vmatpush1.bf16.msra.mxu0 0
        %2835 = vmatprep.subr.bf16.mxu0 0
        %2836 = vmatpush1.bf16.msra.mxu0 0
        %2837 = vmatprep.subr.bf16.mxu0 0
        %2838 = vmatpush1.bf16.msra.mxu0 0
        %2839 = vmatprep.subr.bf16.mxu0 0
        %2840 = vmatpush1.bf16.msra.mxu0 0
        %2841 = vmatprep.subr.bf16.mxu0 0
        %2842 = vmatpush1.bf16.msra.mxu0 0
        %2843 = vmatprep.subr.bf16.mxu0 0
        %2844 = vmatpush1.bf16.msra.mxu0 0
        %2845 = vmatprep.subr.bf16.mxu0 0
        %2846 = vmatpush1.bf16.msra.mxu0 0
        %2847 = vmatprep.subr.bf16.mxu0 %v2790
        %2848 = vmatpush1.bf16.msra.mxu0 %v2787
        %2849 = vmatprep.subr.bf16.mxu0 0
        %2850 = vmatpush2.bf16.msra.mxu0 0
        %2851 = vmatprep.subr.bf16.mxu0 0
        %2852 = vmatpush2.bf16.msra.mxu0 0
        %2853 = vmatprep.subr.bf16.mxu0 0
        %2854 = vmatpush2.bf16.msra.mxu0 0
        %2855 = vmatprep.subr.bf16.mxu0 0
        %2856 = vmatpush2.bf16.msra.mxu0 0
        %2857 = vmatprep.subr.bf16.mxu0 0
        %2858 = vmatpush2.bf16.msra.mxu0 0
        %2859 = vmatprep.subr.bf16.mxu0 0
        %2860 = vmatpush2.bf16.msra.mxu0 0
        %2861 = vmatprep.subr.bf16.mxu0 0
        %2862 = vmatpush2.bf16.msra.mxu0 0
        %2863 = vmatprep.subr.bf16.mxu0 0
        %2864 = vmatpush2.bf16.msra.mxu0 0
        %2865 = vmatprep.mubr.bf16.mxu0 0
        %2866 = vmatmul.mubr.bf16.gmra.mxu0 %v2778
        %v2867 = vpop.f32.mrf.mxu0
        %v2868 = vadd.f32 0.0, %v2867
        %v2869 = vpop.f32.mrf.mxu0
        %v2870 = vadd.f32 0.0, %v2869
        %v2871 = vpop.f32.mrf.mxu0
        %v2872 = vpop.f32.mrf.mxu0
        %2873 = vdwg.mxu0
        %v2874 = vadd.f32 %v2756, %v2827
        %v2875 = vadd.f32 %v2757, %v2829
        %v2876 = vadd.f32 %v2758, %v2868
        %v2877 = vadd.f32 %v2759, %v2870
        %s2878 = scalar_lea.vmem %s2, 88
        %v2879 = vld [vmem:[%s2878] sm:$0xf]
        %2880 = vrot.lane.b32.xlu0 %v293, 45
        %v2881 = vpop.permute.xlu0 %2880
        %2882 = vrot.lane.b32.xlu0 %v292, 45
        %v2883 = vpop.permute.xlu0 %2882
        %2884 = vrot.lane.b32.xlu0 %v294, 45
        %v2885 = vpop.permute.xlu0 %2884
        %2886 = vrot.lane.b32.xlu0 %v302, 45
        %v2887 = vpop.permute.xlu0 %2886
        %2888 = vrot.lane.b32.xlu0 %v303, 45
        %v2889 = vpop.permute.xlu0 %2888
        %vm2890 = vcmask 367616
        %v2891 = vsel %vm2890, %v2881, %v2883
        %v2892 = vsel %vm2890, %v2883, %v2885
        %v2893 = vsel %vm2890, %v2885, %v2887
        %v2894 = vsel %vm2890, %v2887, %v2889
        %v2896 = vsel %vm322, %v2879, 0
        %v2899 = vsel %vm326, %v2891, 0
        %v2902 = vsel %vm326, %v2892, 0
        %v2905 = vsel %vm326, %v2893, 0
        %v2908 = vsel %vm326, %v2894, 0
        %2910 = vmatprep.subr.bf16.mxu0 0
        %2911 = vmatpush1.bf16.msra.mxu0 0
        %2912 = vmatprep.subr.bf16.mxu0 0
        %2913 = vmatpush1.bf16.msra.mxu0 0
        %2914 = vmatprep.subr.bf16.mxu0 0
        %2915 = vmatpush1.bf16.msra.mxu0 0
        %2916 = vmatprep.subr.bf16.mxu0 0
        %2917 = vmatpush1.bf16.msra.mxu0 0
        %2918 = vmatprep.subr.bf16.mxu0 0
        %2919 = vmatpush1.bf16.msra.mxu0 0
        %2920 = vmatprep.subr.bf16.mxu0 0
        %2921 = vmatpush1.bf16.msra.mxu0 0
        %2922 = vmatprep.subr.bf16.mxu0 0
        %2923 = vmatpush1.bf16.msra.mxu0 0
        %2924 = vmatprep.subr.bf16.mxu0 %v2902
        %2925 = vmatpush1.bf16.msra.mxu0 %v2899
        %2926 = vmatprep.subr.bf16.mxu0 0
        %2927 = vmatpush2.bf16.msra.mxu0 0
        %2928 = vmatprep.subr.bf16.mxu0 0
        %2929 = vmatpush2.bf16.msra.mxu0 0
        %2930 = vmatprep.subr.bf16.mxu0 0
        %2931 = vmatpush2.bf16.msra.mxu0 0
        %2932 = vmatprep.subr.bf16.mxu0 0
        %2933 = vmatpush2.bf16.msra.mxu0 0
        %2934 = vmatprep.subr.bf16.mxu0 0
        %2935 = vmatpush2.bf16.msra.mxu0 0
        %2936 = vmatprep.subr.bf16.mxu0 0
        %2937 = vmatpush2.bf16.msra.mxu0 0
        %2938 = vmatprep.subr.bf16.mxu0 0
        %2939 = vmatpush2.bf16.msra.mxu0 0
        %2940 = vmatprep.subr.bf16.mxu0 0
        %2941 = vmatpush2.bf16.msra.mxu0 0
        %2942 = vmatprep.mubr.bf16.mxu0 0
        %2943 = vmatmul.mubr.bf16.gmra.mxu0 %v2896
        %v2944 = vpop.f32.mrf.mxu0
        %v2945 = vadd.f32 0.0, %v2944
        %v2946 = vpop.f32.mrf.mxu0
        %v2947 = vadd.f32 0.0, %v2946
        %v2948 = vpop.f32.mrf.mxu0
        %v2949 = vpop.f32.mrf.mxu0
        %2950 = vdwg.mxu0
        %2951 = vmatprep.subr.bf16.mxu0 0
        %2952 = vmatpush1.bf16.msra.mxu0 0
        %2953 = vmatprep.subr.bf16.mxu0 0
        %2954 = vmatpush1.bf16.msra.mxu0 0
        %2955 = vmatprep.subr.bf16.mxu0 0
        %2956 = vmatpush1.bf16.msra.mxu0 0
        %2957 = vmatprep.subr.bf16.mxu0 0
        %2958 = vmatpush1.bf16.msra.mxu0 0
        %2959 = vmatprep.subr.bf16.mxu0 0
        %2960 = vmatpush1.bf16.msra.mxu0 0
        %2961 = vmatprep.subr.bf16.mxu0 0
        %2962 = vmatpush1.bf16.msra.mxu0 0
        %2963 = vmatprep.subr.bf16.mxu0 0
        %2964 = vmatpush1.bf16.msra.mxu0 0
        %2965 = vmatprep.subr.bf16.mxu0 %v2908
        %2966 = vmatpush1.bf16.msra.mxu0 %v2905
        %2967 = vmatprep.subr.bf16.mxu0 0
        %2968 = vmatpush2.bf16.msra.mxu0 0
        %2969 = vmatprep.subr.bf16.mxu0 0
        %2970 = vmatpush2.bf16.msra.mxu0 0
        %2971 = vmatprep.subr.bf16.mxu0 0
        %2972 = vmatpush2.bf16.msra.mxu0 0
        %2973 = vmatprep.subr.bf16.mxu0 0
        %2974 = vmatpush2.bf16.msra.mxu0 0
        %2975 = vmatprep.subr.bf16.mxu0 0
        %2976 = vmatpush2.bf16.msra.mxu0 0
        %2977 = vmatprep.subr.bf16.mxu0 0
        %2978 = vmatpush2.bf16.msra.mxu0 0
        %2979 = vmatprep.subr.bf16.mxu0 0
        %2980 = vmatpush2.bf16.msra.mxu0 0
        %2981 = vmatprep.subr.bf16.mxu0 0
        %2982 = vmatpush2.bf16.msra.mxu0 0
        %2983 = vmatprep.mubr.bf16.mxu0 0
        %2984 = vmatmul.mubr.bf16.gmra.mxu0 %v2896
        %v2985 = vpop.f32.mrf.mxu0
        %v2986 = vadd.f32 0.0, %v2985
        %v2987 = vpop.f32.mrf.mxu0
        %v2988 = vadd.f32 0.0, %v2987
        %v2989 = vpop.f32.mrf.mxu0
        %v2990 = vpop.f32.mrf.mxu0
        %2991 = vdwg.mxu0
        %v2992 = vadd.f32 %v2874, %v2945
        %v2993 = vadd.f32 %v2875, %v2947
        %v2994 = vadd.f32 %v2876, %v2986
        %v2995 = vadd.f32 %v2877, %v2988
        %s2996 = scalar_lea.vmem %s2, 92
        %v2997 = vld [vmem:[%s2996] sm:$0xf]
        %2998 = vrot.lane.b32.xlu0 %v293, 44
        %v2999 = vpop.permute.xlu0 %2998
        %3000 = vrot.lane.b32.xlu0 %v292, 44
        %v3001 = vpop.permute.xlu0 %3000
        %3002 = vrot.lane.b32.xlu0 %v294, 44
        %v3003 = vpop.permute.xlu0 %3002
        %3004 = vrot.lane.b32.xlu0 %v302, 44
        %v3005 = vpop.permute.xlu0 %3004
        %3006 = vrot.lane.b32.xlu0 %v303, 44
        %v3007 = vpop.permute.xlu0 %3006
        %vm3008 = vcmask 359424
        %v3009 = vsel %vm3008, %v2999, %v3001
        %v3010 = vsel %vm3008, %v3001, %v3003
        %v3011 = vsel %vm3008, %v3003, %v3005
        %v3012 = vsel %vm3008, %v3005, %v3007
        %v3014 = vsel %vm322, %v2997, 0
        %v3017 = vsel %vm326, %v3009, 0
        %v3020 = vsel %vm326, %v3010, 0
        %v3023 = vsel %vm326, %v3011, 0
        %v3026 = vsel %vm326, %v3012, 0
        %3028 = vmatprep.subr.bf16.mxu0 0
        %3029 = vmatpush1.bf16.msra.mxu0 0
        %3030 = vmatprep.subr.bf16.mxu0 0
        %3031 = vmatpush1.bf16.msra.mxu0 0
        %3032 = vmatprep.subr.bf16.mxu0 0
        %3033 = vmatpush1.bf16.msra.mxu0 0
        %3034 = vmatprep.subr.bf16.mxu0 0
        %3035 = vmatpush1.bf16.msra.mxu0 0
        %3036 = vmatprep.subr.bf16.mxu0 0
        %3037 = vmatpush1.bf16.msra.mxu0 0
        %3038 = vmatprep.subr.bf16.mxu0 0
        %3039 = vmatpush1.bf16.msra.mxu0 0
        %3040 = vmatprep.subr.bf16.mxu0 0
        %3041 = vmatpush1.bf16.msra.mxu0 0
        %3042 = vmatprep.subr.bf16.mxu0 %v3020
        %3043 = vmatpush1.bf16.msra.mxu0 %v3017
        %3044 = vmatprep.subr.bf16.mxu0 0
        %3045 = vmatpush2.bf16.msra.mxu0 0
        %3046 = vmatprep.subr.bf16.mxu0 0
        %3047 = vmatpush2.bf16.msra.mxu0 0
        %3048 = vmatprep.subr.bf16.mxu0 0
        %3049 = vmatpush2.bf16.msra.mxu0 0
        %3050 = vmatprep.subr.bf16.mxu0 0
        %3051 = vmatpush2.bf16.msra.mxu0 0
        %3052 = vmatprep.subr.bf16.mxu0 0
        %3053 = vmatpush2.bf16.msra.mxu0 0
        %3054 = vmatprep.subr.bf16.mxu0 0
        %3055 = vmatpush2.bf16.msra.mxu0 0
        %3056 = vmatprep.subr.bf16.mxu0 0
        %3057 = vmatpush2.bf16.msra.mxu0 0
        %3058 = vmatprep.subr.bf16.mxu0 0
        %3059 = vmatpush2.bf16.msra.mxu0 0
        %3060 = vmatprep.mubr.bf16.mxu0 0
        %3061 = vmatmul.mubr.bf16.gmra.mxu0 %v3014
        %v3062 = vpop.f32.mrf.mxu0
        %v3063 = vadd.f32 0.0, %v3062
        %v3064 = vpop.f32.mrf.mxu0
        %v3065 = vadd.f32 0.0, %v3064
        %v3066 = vpop.f32.mrf.mxu0
        %v3067 = vpop.f32.mrf.mxu0
        %3068 = vdwg.mxu0
        %3069 = vmatprep.subr.bf16.mxu0 0
        %3070 = vmatpush1.bf16.msra.mxu0 0
        %3071 = vmatprep.subr.bf16.mxu0 0
        %3072 = vmatpush1.bf16.msra.mxu0 0
        %3073 = vmatprep.subr.bf16.mxu0 0
        %3074 = vmatpush1.bf16.msra.mxu0 0
        %3075 = vmatprep.subr.bf16.mxu0 0
        %3076 = vmatpush1.bf16.msra.mxu0 0
        %3077 = vmatprep.subr.bf16.mxu0 0
        %3078 = vmatpush1.bf16.msra.mxu0 0
        %3079 = vmatprep.subr.bf16.mxu0 0
        %3080 = vmatpush1.bf16.msra.mxu0 0
        %3081 = vmatprep.subr.bf16.mxu0 0
        %3082 = vmatpush1.bf16.msra.mxu0 0
        %3083 = vmatprep.subr.bf16.mxu0 %v3026
        %3084 = vmatpush1.bf16.msra.mxu0 %v3023
        %3085 = vmatprep.subr.bf16.mxu0 0
        %3086 = vmatpush2.bf16.msra.mxu0 0
        %3087 = vmatprep.subr.bf16.mxu0 0
        %3088 = vmatpush2.bf16.msra.mxu0 0
        %3089 = vmatprep.subr.bf16.mxu0 0
        %3090 = vmatpush2.bf16.msra.mxu0 0
        %3091 = vmatprep.subr.bf16.mxu0 0
        %3092 = vmatpush2.bf16.msra.mxu0 0
        %3093 = vmatprep.subr.bf16.mxu0 0
        %3094 = vmatpush2.bf16.msra.mxu0 0
        %3095 = vmatprep.subr.bf16.mxu0 0
        %3096 = vmatpush2.bf16.msra.mxu0 0
        %3097 = vmatprep.subr.bf16.mxu0 0
        %3098 = vmatpush2.bf16.msra.mxu0 0
        %3099 = vmatprep.subr.bf16.mxu0 0
        %3100 = vmatpush2.bf16.msra.mxu0 0
        %3101 = vmatprep.mubr.bf16.mxu0 0
        %3102 = vmatmul.mubr.bf16.gmra.mxu0 %v3014
        %v3103 = vpop.f32.mrf.mxu0
        %v3104 = vadd.f32 0.0, %v3103
        %v3105 = vpop.f32.mrf.mxu0
        %v3106 = vadd.f32 0.0, %v3105
        %v3107 = vpop.f32.mrf.mxu0
        %v3108 = vpop.f32.mrf.mxu0
        %3109 = vdwg.mxu0
        %v3110 = vadd.f32 %v2992, %v3063
        %v3111 = vadd.f32 %v2993, %v3065
        %v3112 = vadd.f32 %v2994, %v3104
        %v3113 = vadd.f32 %v2995, %v3106
        %s3114 = scalar_lea.vmem %s2, 96
        %v3115 = vld [vmem:[%s3114] sm:$0xf]
        %3116 = vrot.lane.b32.xlu0 %v293, 36
        %v3117 = vpop.permute.xlu0 %3116
        %3118 = vrot.lane.b32.xlu0 %v292, 36
        %v3119 = vpop.permute.xlu0 %3118
        %3120 = vrot.lane.b32.xlu0 %v294, 36
        %v3121 = vpop.permute.xlu0 %3120
        %3122 = vrot.lane.b32.xlu0 %v302, 36
        %v3123 = vpop.permute.xlu0 %3122
        %3124 = vrot.lane.b32.xlu0 %v303, 36
        %v3125 = vpop.permute.xlu0 %3124
        %vm3126 = vcmask 293888
        %v3127 = vsel %vm3126, %v3117, %v3119
        %v3128 = vsel %vm3126, %v3119, %v3121
        %v3129 = vsel %vm3126, %v3121, %v3123
        %v3130 = vsel %vm3126, %v3123, %v3125
        %v3132 = vsel %vm322, %v3115, 0
        %v3135 = vsel %vm326, %v3127, 0
        %v3138 = vsel %vm326, %v3128, 0
        %v3141 = vsel %vm326, %v3129, 0
        %v3144 = vsel %vm326, %v3130, 0
        %3146 = vmatprep.subr.bf16.mxu0 0
        %3147 = vmatpush1.bf16.msra.mxu0 0
        %3148 = vmatprep.subr.bf16.mxu0 0
        %3149 = vmatpush1.bf16.msra.mxu0 0
        %3150 = vmatprep.subr.bf16.mxu0 0
        %3151 = vmatpush1.bf16.msra.mxu0 0
        %3152 = vmatprep.subr.bf16.mxu0 0
        %3153 = vmatpush1.bf16.msra.mxu0 0
        %3154 = vmatprep.subr.bf16.mxu0 0
        %3155 = vmatpush1.bf16.msra.mxu0 0
        %3156 = vmatprep.subr.bf16.mxu0 0
        %3157 = vmatpush1.bf16.msra.mxu0 0
        %3158 = vmatprep.subr.bf16.mxu0 0
        %3159 = vmatpush1.bf16.msra.mxu0 0
        %3160 = vmatprep.subr.bf16.mxu0 %v3138
        %3161 = vmatpush1.bf16.msra.mxu0 %v3135
        %3162 = vmatprep.subr.bf16.mxu0 0
        %3163 = vmatpush2.bf16.msra.mxu0 0
        %3164 = vmatprep.subr.bf16.mxu0 0
        %3165 = vmatpush2.bf16.msra.mxu0 0
        %3166 = vmatprep.subr.bf16.mxu0 0
        %3167 = vmatpush2.bf16.msra.mxu0 0
        %3168 = vmatprep.subr.bf16.mxu0 0
        %3169 = vmatpush2.bf16.msra.mxu0 0
        %3170 = vmatprep.subr.bf16.mxu0 0
        %3171 = vmatpush2.bf16.msra.mxu0 0
        %3172 = vmatprep.subr.bf16.mxu0 0
        %3173 = vmatpush2.bf16.msra.mxu0 0
        %3174 = vmatprep.subr.bf16.mxu0 0
        %3175 = vmatpush2.bf16.msra.mxu0 0
        %3176 = vmatprep.subr.bf16.mxu0 0
        %3177 = vmatpush2.bf16.msra.mxu0 0
        %3178 = vmatprep.mubr.bf16.mxu0 0
        %3179 = vmatmul.mubr.bf16.gmra.mxu0 %v3132
        %v3180 = vpop.f32.mrf.mxu0
        %v3181 = vadd.f32 0.0, %v3180
        %v3182 = vpop.f32.mrf.mxu0
        %v3183 = vadd.f32 0.0, %v3182
        %v3184 = vpop.f32.mrf.mxu0
        %v3185 = vpop.f32.mrf.mxu0
        %3186 = vdwg.mxu0
        %3187 = vmatprep.subr.bf16.mxu0 0
        %3188 = vmatpush1.bf16.msra.mxu0 0
        %3189 = vmatprep.subr.bf16.mxu0 0
        %3190 = vmatpush1.bf16.msra.mxu0 0
        %3191 = vmatprep.subr.bf16.mxu0 0
        %3192 = vmatpush1.bf16.msra.mxu0 0
        %3193 = vmatprep.subr.bf16.mxu0 0
        %3194 = vmatpush1.bf16.msra.mxu0 0
        %3195 = vmatprep.subr.bf16.mxu0 0
        %3196 = vmatpush1.bf16.msra.mxu0 0
        %3197 = vmatprep.subr.bf16.mxu0 0
        %3198 = vmatpush1.bf16.msra.mxu0 0
        %3199 = vmatprep.subr.bf16.mxu0 0
        %3200 = vmatpush1.bf16.msra.mxu0 0
        %3201 = vmatprep.subr.bf16.mxu0 %v3144
        %3202 = vmatpush1.bf16.msra.mxu0 %v3141
        %3203 = vmatprep.subr.bf16.mxu0 0
        %3204 = vmatpush2.bf16.msra.mxu0 0
        %3205 = vmatprep.subr.bf16.mxu0 0
        %3206 = vmatpush2.bf16.msra.mxu0 0
        %3207 = vmatprep.subr.bf16.mxu0 0
        %3208 = vmatpush2.bf16.msra.mxu0 0
        %3209 = vmatprep.subr.bf16.mxu0 0
        %3210 = vmatpush2.bf16.msra.mxu0 0
        %3211 = vmatprep.subr.bf16.mxu0 0
        %3212 = vmatpush2.bf16.msra.mxu0 0
        %3213 = vmatprep.subr.bf16.mxu0 0
        %3214 = vmatpush2.bf16.msra.mxu0 0
        %3215 = vmatprep.subr.bf16.mxu0 0
        %3216 = vmatpush2.bf16.msra.mxu0 0
        %3217 = vmatprep.subr.bf16.mxu0 0
        %3218 = vmatpush2.bf16.msra.mxu0 0
        %3219 = vmatprep.mubr.bf16.mxu0 0
        %3220 = vmatmul.mubr.bf16.gmra.mxu0 %v3132
        %v3221 = vpop.f32.mrf.mxu0
        %v3222 = vadd.f32 0.0, %v3221
        %v3223 = vpop.f32.mrf.mxu0
        %v3224 = vadd.f32 0.0, %v3223
        %v3225 = vpop.f32.mrf.mxu0
        %v3226 = vpop.f32.mrf.mxu0
        %3227 = vdwg.mxu0
        %v3228 = vadd.f32 %v3110, %v3181
        %v3229 = vadd.f32 %v3111, %v3183
        %v3230 = vadd.f32 %v3112, %v3222
        %v3231 = vadd.f32 %v3113, %v3224
        %s3232 = scalar_lea.vmem %s2, 100
        %v3233 = vld [vmem:[%s3232] sm:$0xf]
        %3234 = vrot.lane.b32.xlu0 %v293, 35
        %v3235 = vpop.permute.xlu0 %3234
        %3236 = vrot.lane.b32.xlu0 %v292, 35
        %v3237 = vpop.permute.xlu0 %3236
        %3238 = vrot.lane.b32.xlu0 %v294, 35
        %v3239 = vpop.permute.xlu0 %3238
        %3240 = vrot.lane.b32.xlu0 %v302, 35
        %v3241 = vpop.permute.xlu0 %3240
        %3242 = vrot.lane.b32.xlu0 %v303, 35
        %v3243 = vpop.permute.xlu0 %3242
        %vm3244 = vcmask 285696
        %v3245 = vsel %vm3244, %v3235, %v3237
        %v3246 = vsel %vm3244, %v3237, %v3239
        %v3247 = vsel %vm3244, %v3239, %v3241
        %v3248 = vsel %vm3244, %v3241, %v3243
        %v3250 = vsel %vm322, %v3233, 0
        %v3253 = vsel %vm326, %v3245, 0
        %v3256 = vsel %vm326, %v3246, 0
        %v3259 = vsel %vm326, %v3247, 0
        %v3262 = vsel %vm326, %v3248, 0
        %3264 = vmatprep.subr.bf16.mxu0 0
        %3265 = vmatpush1.bf16.msra.mxu0 0
        %3266 = vmatprep.subr.bf16.mxu0 0
        %3267 = vmatpush1.bf16.msra.mxu0 0
        %3268 = vmatprep.subr.bf16.mxu0 0
        %3269 = vmatpush1.bf16.msra.mxu0 0
        %3270 = vmatprep.subr.bf16.mxu0 0
        %3271 = vmatpush1.bf16.msra.mxu0 0
        %3272 = vmatprep.subr.bf16.mxu0 0
        %3273 = vmatpush1.bf16.msra.mxu0 0
        %3274 = vmatprep.subr.bf16.mxu0 0
        %3275 = vmatpush1.bf16.msra.mxu0 0
        %3276 = vmatprep.subr.bf16.mxu0 0
        %3277 = vmatpush1.bf16.msra.mxu0 0
        %3278 = vmatprep.subr.bf16.mxu0 %v3256
        %3279 = vmatpush1.bf16.msra.mxu0 %v3253
        %3280 = vmatprep.subr.bf16.mxu0 0
        %3281 = vmatpush2.bf16.msra.mxu0 0
        %3282 = vmatprep.subr.bf16.mxu0 0
        %3283 = vmatpush2.bf16.msra.mxu0 0
        %3284 = vmatprep.subr.bf16.mxu0 0
        %3285 = vmatpush2.bf16.msra.mxu0 0
        %3286 = vmatprep.subr.bf16.mxu0 0
        %3287 = vmatpush2.bf16.msra.mxu0 0
        %3288 = vmatprep.subr.bf16.mxu0 0
        %3289 = vmatpush2.bf16.msra.mxu0 0
        %3290 = vmatprep.subr.bf16.mxu0 0
        %3291 = vmatpush2.bf16.msra.mxu0 0
        %3292 = vmatprep.subr.bf16.mxu0 0
        %3293 = vmatpush2.bf16.msra.mxu0 0
        %3294 = vmatprep.subr.bf16.mxu0 0
        %3295 = vmatpush2.bf16.msra.mxu0 0
        %3296 = vmatprep.mubr.bf16.mxu0 0
        %3297 = vmatmul.mubr.bf16.gmra.mxu0 %v3250
        %v3298 = vpop.f32.mrf.mxu0
        %v3299 = vadd.f32 0.0, %v3298
        %v3300 = vpop.f32.mrf.mxu0
        %v3301 = vadd.f32 0.0, %v3300
        %v3302 = vpop.f32.mrf.mxu0
        %v3303 = vpop.f32.mrf.mxu0
        %3304 = vdwg.mxu0
        %3305 = vmatprep.subr.bf16.mxu0 0
        %3306 = vmatpush1.bf16.msra.mxu0 0
        %3307 = vmatprep.subr.bf16.mxu0 0
        %3308 = vmatpush1.bf16.msra.mxu0 0
        %3309 = vmatprep.subr.bf16.mxu0 0
        %3310 = vmatpush1.bf16.msra.mxu0 0
        %3311 = vmatprep.subr.bf16.mxu0 0
        %3312 = vmatpush1.bf16.msra.mxu0 0
        %3313 = vmatprep.subr.bf16.mxu0 0
        %3314 = vmatpush1.bf16.msra.mxu0 0
        %3315 = vmatprep.subr.bf16.mxu0 0
        %3316 = vmatpush1.bf16.msra.mxu0 0
        %3317 = vmatprep.subr.bf16.mxu0 0
        %3318 = vmatpush1.bf16.msra.mxu0 0
        %3319 = vmatprep.subr.bf16.mxu0 %v3262
        %3320 = vmatpush1.bf16.msra.mxu0 %v3259
        %3321 = vmatprep.subr.bf16.mxu0 0
        %3322 = vmatpush2.bf16.msra.mxu0 0
        %3323 = vmatprep.subr.bf16.mxu0 0
        %3324 = vmatpush2.bf16.msra.mxu0 0
        %3325 = vmatprep.subr.bf16.mxu0 0
        %3326 = vmatpush2.bf16.msra.mxu0 0
        %3327 = vmatprep.subr.bf16.mxu0 0
        %3328 = vmatpush2.bf16.msra.mxu0 0
        %3329 = vmatprep.subr.bf16.mxu0 0
        %3330 = vmatpush2.bf16.msra.mxu0 0
        %3331 = vmatprep.subr.bf16.mxu0 0
        %3332 = vmatpush2.bf16.msra.mxu0 0
        %3333 = vmatprep.subr.bf16.mxu0 0
        %3334 = vmatpush2.bf16.msra.mxu0 0
        %3335 = vmatprep.subr.bf16.mxu0 0
        %3336 = vmatpush2.bf16.msra.mxu0 0
        %3337 = vmatprep.mubr.bf16.mxu0 0
        %3338 = vmatmul.mubr.bf16.gmra.mxu0 %v3250
        %v3339 = vpop.f32.mrf.mxu0
        %v3340 = vadd.f32 0.0, %v3339
        %v3341 = vpop.f32.mrf.mxu0
        %v3342 = vadd.f32 0.0, %v3341
        %v3343 = vpop.f32.mrf.mxu0
        %v3344 = vpop.f32.mrf.mxu0
        %3345 = vdwg.mxu0
        %v3346 = vadd.f32 %v3228, %v3299
        %v3347 = vadd.f32 %v3229, %v3301
        %v3348 = vadd.f32 %v3230, %v3340
        %v3349 = vadd.f32 %v3231, %v3342
        %s3350 = scalar_lea.vmem %s2, 104
        %v3351 = vld [vmem:[%s3350] sm:$0xf]
        %3352 = vrot.lane.b32.xlu0 %v293, 34
        %v3353 = vpop.permute.xlu0 %3352
        %3354 = vrot.lane.b32.xlu0 %v292, 34
        %v3355 = vpop.permute.xlu0 %3354
        %3356 = vrot.lane.b32.xlu0 %v294, 34
        %v3357 = vpop.permute.xlu0 %3356
        %3358 = vrot.lane.b32.xlu0 %v302, 34
        %v3359 = vpop.permute.xlu0 %3358
        %3360 = vrot.lane.b32.xlu0 %v303, 34
        %v3361 = vpop.permute.xlu0 %3360
        %vm3362 = vcmask 277504
        %v3363 = vsel %vm3362, %v3353, %v3355
        %v3364 = vsel %vm3362, %v3355, %v3357
        %v3365 = vsel %vm3362, %v3357, %v3359
        %v3366 = vsel %vm3362, %v3359, %v3361
        %v3368 = vsel %vm322, %v3351, 0
        %v3371 = vsel %vm326, %v3363, 0
        %v3374 = vsel %vm326, %v3364, 0
        %v3377 = vsel %vm326, %v3365, 0
        %v3380 = vsel %vm326, %v3366, 0
        %3382 = vmatprep.subr.bf16.mxu0 0
        %3383 = vmatpush1.bf16.msra.mxu0 0
        %3384 = vmatprep.subr.bf16.mxu0 0
        %3385 = vmatpush1.bf16.msra.mxu0 0
        %3386 = vmatprep.subr.bf16.mxu0 0
        %3387 = vmatpush1.bf16.msra.mxu0 0
        %3388 = vmatprep.subr.bf16.mxu0 0
        %3389 = vmatpush1.bf16.msra.mxu0 0
        %3390 = vmatprep.subr.bf16.mxu0 0
        %3391 = vmatpush1.bf16.msra.mxu0 0
        %3392 = vmatprep.subr.bf16.mxu0 0
        %3393 = vmatpush1.bf16.msra.mxu0 0
        %3394 = vmatprep.subr.bf16.mxu0 0
        %3395 = vmatpush1.bf16.msra.mxu0 0
        %3396 = vmatprep.subr.bf16.mxu0 %v3374
        %3397 = vmatpush1.bf16.msra.mxu0 %v3371
        %3398 = vmatprep.subr.bf16.mxu0 0
        %3399 = vmatpush2.bf16.msra.mxu0 0
        %3400 = vmatprep.subr.bf16.mxu0 0
        %3401 = vmatpush2.bf16.msra.mxu0 0
        %3402 = vmatprep.subr.bf16.mxu0 0
        %3403 = vmatpush2.bf16.msra.mxu0 0
        %3404 = vmatprep.subr.bf16.mxu0 0
        %3405 = vmatpush2.bf16.msra.mxu0 0
        %3406 = vmatprep.subr.bf16.mxu0 0
        %3407 = vmatpush2.bf16.msra.mxu0 0
        %3408 = vmatprep.subr.bf16.mxu0 0
        %3409 = vmatpush2.bf16.msra.mxu0 0
        %3410 = vmatprep.subr.bf16.mxu0 0
        %3411 = vmatpush2.bf16.msra.mxu0 0
        %3412 = vmatprep.subr.bf16.mxu0 0
        %3413 = vmatpush2.bf16.msra.mxu0 0
        %3414 = vmatprep.mubr.bf16.mxu0 0
        %3415 = vmatmul.mubr.bf16.gmra.mxu0 %v3368
        %v3416 = vpop.f32.mrf.mxu0
        %v3417 = vadd.f32 0.0, %v3416
        %v3418 = vpop.f32.mrf.mxu0
        %v3419 = vadd.f32 0.0, %v3418
        %v3420 = vpop.f32.mrf.mxu0
        %v3421 = vpop.f32.mrf.mxu0
        %3422 = vdwg.mxu0
        %3423 = vmatprep.subr.bf16.mxu0 0
        %3424 = vmatpush1.bf16.msra.mxu0 0
        %3425 = vmatprep.subr.bf16.mxu0 0
        %3426 = vmatpush1.bf16.msra.mxu0 0
        %3427 = vmatprep.subr.bf16.mxu0 0
        %3428 = vmatpush1.bf16.msra.mxu0 0
        %3429 = vmatprep.subr.bf16.mxu0 0
        %3430 = vmatpush1.bf16.msra.mxu0 0
        %3431 = vmatprep.subr.bf16.mxu0 0
        %3432 = vmatpush1.bf16.msra.mxu0 0
        %3433 = vmatprep.subr.bf16.mxu0 0
        %3434 = vmatpush1.bf16.msra.mxu0 0
        %3435 = vmatprep.subr.bf16.mxu0 0
        %3436 = vmatpush1.bf16.msra.mxu0 0
        %3437 = vmatprep.subr.bf16.mxu0 %v3380
        %3438 = vmatpush1.bf16.msra.mxu0 %v3377
        %3439 = vmatprep.subr.bf16.mxu0 0
        %3440 = vmatpush2.bf16.msra.mxu0 0
        %3441 = vmatprep.subr.bf16.mxu0 0
        %3442 = vmatpush2.bf16.msra.mxu0 0
        %3443 = vmatprep.subr.bf16.mxu0 0
        %3444 = vmatpush2.bf16.msra.mxu0 0
        %3445 = vmatprep.subr.bf16.mxu0 0
        %3446 = vmatpush2.bf16.msra.mxu0 0
        %3447 = vmatprep.subr.bf16.mxu0 0
        %3448 = vmatpush2.bf16.msra.mxu0 0
        %3449 = vmatprep.subr.bf16.mxu0 0
        %3450 = vmatpush2.bf16.msra.mxu0 0
        %3451 = vmatprep.subr.bf16.mxu0 0
        %3452 = vmatpush2.bf16.msra.mxu0 0
        %3453 = vmatprep.subr.bf16.mxu0 0
        %3454 = vmatpush2.bf16.msra.mxu0 0
        %3455 = vmatprep.mubr.bf16.mxu0 0
        %3456 = vmatmul.mubr.bf16.gmra.mxu0 %v3368
        %v3457 = vpop.f32.mrf.mxu0
        %v3458 = vadd.f32 0.0, %v3457
        %v3459 = vpop.f32.mrf.mxu0
        %v3460 = vadd.f32 0.0, %v3459
        %v3461 = vpop.f32.mrf.mxu0
        %v3462 = vpop.f32.mrf.mxu0
        %3463 = vdwg.mxu0
        %v3464 = vadd.f32 %v3346, %v3417
        %v3465 = vadd.f32 %v3347, %v3419
        %v3466 = vadd.f32 %v3348, %v3458
        %v3467 = vadd.f32 %v3349, %v3460
        %v3468 = vld [vmem:[%s3] sm:$0xff]
        %3470 = vset.pattern.permute.xlu0 0
        %3471 = vperm.xlu0 %3470, %v3468
        %v3472 = vpop.permute.xlu0 %3471
        %v3474 = vadd.f32 %v3464, %v3472
        %v3475 = vadd.f32 %v3465, %v3472
        %v3476 = vadd.f32 %v3466, %v3472
        %v3477 = vadd.f32 %v3467, %v3472
        %v3478 = vmax.f32 %v3474, 0.0
        %v3479 = vmax.f32 %v3475, 0.0
        %v3480 = vmax.f32 %v3476, 0.0
        %v3481 = vmax.f32 %v3477, 0.0
        %v3482 = vld [vmem:[%s271] sm:$0xf]
        %v3484 = vlaneseq
        %v3485 = vshrl.u32 %v3484, 7
        %v3486 = vsub.s32 0, %v3485
        %v3487 = vrot.slane %v3482, %v3486
        %v3488 = vlaneseq
        %v3489 = vshrl.u32 %v3488, 7
        %v3490 = vsub.s32 1, %v3489
        %v3491 = vrot.slane %v3482, %v3490
        %v3492 = vlaneseq
        %v3493 = vshrl.u32 %v3492, 7
        %v3494 = vsub.s32 2, %v3493
        %v3495 = vrot.slane %v3482, %v3494
        %v3496 = vlaneseq
        %v3497 = vshrl.u32 %v3496, 7
        %v3498 = vsub.s32 3, %v3497
        %v3499 = vrot.slane %v3482, %v3498
        %v3504 = vmul.f32 %v3478, %v3487
        %v3505 = vmul.f32 %v3479, %v3491
        %v3506 = vmul.f32 %v3480, %v3495
        %v3507 = vmul.f32 %v3481, %v3499
        %v3508 = vpack.c.bf16 %v3504, %v3504
        %v3509 = vpack.c.bf16 %v3505, %v3505
        %v3510 = vpack.c.bf16 %v3506, %v3506
        %v3511 = vpack.c.bf16 %v3507, %v3507
        %v3516 = vunpack.c.l.b16 %v3508
        %v3517 = vunpack.c.l.b16 %v3509
        %v3518 = vunpack.c.l.b16 %v3510
        %v3519 = vunpack.c.l.b16 %v3511
        %v3520 = vpack.c.b16 %v3517, %v3516
        %v3521 = vpack.c.b16 %v3519, %v3518
        %3524 = vst [vmem:[%s253] sm:$0xff] %v3520
        %3525 = vst [vmem:[%s253 + $0x8] sm:$0xff] %v3521
        %s3526 = sand.u32 %s149, 1
        %s3527 = scalar_lea.sflag [#allocation3], %s3526
        %s3528 = sand.u32 %s149, 1
        %s3529 = smul.addr %s3528, 16
        %s3530 = scalar_lea.vmem [#allocation2], %s3529
        // Predicated region
        $region41: #{tpu_custom_call.1} parent=39 // pred_check
          %p3531 = pneg %p159
        $region42: #{tpu_custom_call.1} parent=39 // pred_check_branch
          %3533 = sbr.rel (%p3531) target = $region44
        $region43: #{tpu_custom_call.1} parent=39 // pred_region
          %s3534 = smul.u32 4, %s19
          %s3536 = ssub.s32 256, 256
          %3537 = vsyncadd %s3527, %s3536
          %s3538 = smul.addr %s3534, 64
          %s3539 = scalar_lea.hbm %s5, %s3538
          %s3541 = sshll.u32 %s3530, 4
          %s3542 = int_to_ptr.vmem [resolvable:$true] %s3541
          %3544 = dma.vmem_to_hbm [thread:$0]  %s3542, 256, %s3539, %s3527
        $region44: #{tpu_custom_call.1} parent=39 // pred_fallthru
          _
      $region40: #{tpu_custom_call.1} parent=5 // pred_fallthru
        _
      %p3545 = scmp.le.s32.totalorder 2, %s14
      // Predicated region
      $region45: #{tpu_custom_call.1} parent=5 // pred_check
        %p3546 = pneg %p3545
      $region46: #{tpu_custom_call.1} parent=5 // pred_check_branch
        %3548 = sbr.rel (%p3546) target = $region48
      $region47: #{tpu_custom_call.1} parent=5 // pred_region
        %s3549 = ssub.s32 %s14, 2
        // Predicated region
        $region49: #{tpu_custom_call.1} parent=47 // pred_check
          %p3550 = pneg %p165
        $region50: #{tpu_custom_call.1} parent=47 // pred_check_branch
          %3552 = sbr.rel (%p3550) target = $region52
        $region51: #{tpu_custom_call.1} parent=47 // pred_region
          %s3553 = sand.u32 %s150, 1
          %s3554 = scalar_lea.sflag [#allocation3], %s3553
          %s3555 = sand.u32 %s150, 1
          %s3556 = smul.addr %s3555, 16
          %s3557 = scalar_lea.vmem [#allocation2], %s3556
          %3558 = dma.done %s3554, 256
        $region52: #{tpu_custom_call.1} parent=47 // pred_fallthru
          _
      $region48: #{tpu_custom_call.1} parent=5 // pred_fallthru
        _
    $region6: #{tpu_custom_call.1} parent=1 // loop_footer
      %s18 = sadd.s32 1, %s14
    $region7: #{tpu_custom_call.1} parent=1 // loop_footer_branch
      %13 = sbr.rel target = $region3
    $region8: #{tpu_custom_call.1} parent=1 // loop_exit
      _
    %3559 = vsyncpa [#allocation3], 1
    %s3560 = scalar_lea.sflag [#allocation3], 1
    %3561 = vsyncpa %s3560, 1

</llo_original>
